<compile_context>
chip_gen: v7x
topology: tpu7x:2x2x1
jax: 0.10.0
libtpu: 0.0.40
codegen_flags: <defaults>
</compile_context>

<pallas_src>
import math

import jax
import jax.numpy as jnp
from jax.experimental import pallas as pl
from jax.experimental.pallas import tpu as pltpu

# ---------------- config (matches the PyTorch module instantiation) ----------------
DIM = 32                    # dim
NUM_HEADS = 4
HEAD_DIM = DIM // NUM_HEADS  # 8
WIN = 4                     # win_size
H = W = 8                   # input_resolution (sqrt(L))
B = 2
L = H * W                   # 64 tokens per image
BL = B * L                  # 128 rows after batch folding
N_TOK = WIN * WIN           # 16 tokens per window
NW_H, NW_W = H // WIN, W // WIN
NW = NW_H * NW_W            # 4 windows per image
MLP_RATIO = 4.0
HIDDEN = int(DIM * MLP_RATIO)   # LeFF hidden dim = 128
SCALE = HEAD_DIM ** -0.5
EPS = 1e-5
NEG_MASK = -1e9             # additive mask for cross-window / cross-image pairs

# flat, sublane-aligned zero pad for the depthwise conv (reads at offsets 16 +- 9)
PAD_TOP = 16
PAD_ROWS = PAD_TOP + BL + 16   # 160


def _gelu(x):
    # exact (erf-based) GELU, matching torch.nn.GELU()
    return 0.5 * x * (1.0 + jax.lax.erf(x * (1.0 / math.sqrt(2.0))))


def _layernorm(x, g, b):
    mu = jnp.mean(x, axis=-1, keepdims=True)
    var = jnp.mean(jnp.square(x - mu), axis=-1, keepdims=True)
    return (x - mu) * jax.lax.rsqrt(var + EPS) * g + b


# ---------------- fully fused Pallas kernel (whole batch in one step) ----------------
def _lewin_block_kernel(
    x_ref, ln1g_ref, ln1b_ref, wqkv_ref, bqkv_ref, bias_ref, wp_ref, bp_ref,
    ln2g_ref, ln2b_ref, w1_ref, b1_ref, dww_ref, dwb_ref, w2_ref, b2_ref,
    o_ref,
    pad_ref,
):
    x = x_ref[...]                                                 # (BL, DIM) f32

    # ---- LN1 + fused (scaled-Q | K | V) projection over all 128 rows ----
    xn = _layernorm(x, ln1g_ref[...], ln1b_ref[...])
    qkv = jnp.dot(xn.astype(jnp.bfloat16), wqkv_ref[...],
                  preferred_element_type=jnp.float32) + bqkv_ref[...]   # (BL, 3*DIM)

    q = qkv[:, 0 * DIM:1 * DIM]
    k = qkv[:, 1 * DIM:2 * DIM]
    v = qkv[:, 2 * DIM:3 * DIM]

    # ---- window attention as masked full attention (bias = rpb + window/batch mask) ----
    heads = []
    for h in range(NUM_HEADS):
        lo, hi = h * HEAD_DIM, (h + 1) * HEAD_DIM
        qh = q[:, lo:hi].astype(jnp.bfloat16)                      # (BL, 8), scale folded
        kh = k[:, lo:hi].astype(jnp.bfloat16)
        vh = v[:, lo:hi].astype(jnp.bfloat16)
        s = jax.lax.dot_general(qh, kh, (((1,), (1,)), ((), ())),
                                preferred_element_type=jnp.float32)     # (BL, BL)
        s = s + bias_ref[h]
        s = s - jnp.max(s, axis=-1, keepdims=True)
        p = jnp.exp(s)
        p = p * pl.reciprocal(jnp.sum(p, axis=-1, keepdims=True), approx=True)
        heads.append(jnp.dot(p.astype(jnp.bfloat16), vh,
                             preferred_element_type=jnp.float32))       # (BL, 8)
    attn = jnp.concatenate(heads, axis=-1)                              # (BL, DIM)

    y = jnp.dot(attn.astype(jnp.bfloat16), wp_ref[...],
                preferred_element_type=jnp.float32) + bp_ref[...]
    x1 = x + y                                                          # residual 1

    # ---- LeFF: LN2 -> linear1+GELU -> depthwise 3x3 conv+GELU -> linear2 + residual ----
    xn2 = _layernorm(x1, ln2g_ref[...], ln2b_ref[...])
    h1 = _gelu(jnp.dot(xn2.astype(jnp.bfloat16), w1_ref[...],
                       preferred_element_type=jnp.float32) + b1_ref[...])   # (BL, HIDDEN)

    # depthwise conv on the flattened (B*H*W, HIDDEN) map:
    # token t+di*W+dj is spatial neighbor (i+di, j+dj) whenever it is in-bounds; the
    # iota masks zero out everything else (image edges and cross-image rows).
    pad_ref[0:PAD_TOP, :] = jnp.zeros((PAD_TOP, HIDDEN), jnp.float32)
    pad_ref[PAD_TOP + BL:PAD_ROWS, :] = jnp.zeros((PAD_ROWS - PAD_TOP - BL, HIDDEN),
                                                  jnp.float32)
    pad_ref[PAD_TOP:PAD_TOP + BL, :] = h1

    tok = jax.lax.broadcasted_iota(jnp.int32, (BL, 1), 0)
    col = jnp.bitwise_and(tok, W - 1)                        # j  (W is a power of two)
    row = jnp.bitwise_and(jnp.right_shift(tok, int(math.log2(W))), H - 1)   # i

    acc = jnp.zeros((BL, HIDDEN), jnp.float32)
    for di in (-1, 0, 1):
        rn = row + di
        rvalid = jnp.logical_and(rn >= 0, rn < H)
        for dj in (-1, 0, 1):
            cn = col + dj
            valid = jnp.logical_and(rvalid, jnp.logical_and(cn >= 0, cn < W))
            off = PAD_TOP + di * W + dj                      # static offset
            sh = pad_ref[off:off + BL, :]                    # shifted feature map
            w_tap = dww_ref[di + 1, dj + 1, :]               # (HIDDEN,), loaded once per tap
            acc = acc + jnp.where(valid, sh, 0.0) * w_tap
    h2 = _gelu(acc + dwb_ref[...])                                        # (BL, HIDDEN)

    out = (jnp.dot(h2.astype(jnp.bfloat16), w2_ref[...],
                   preferred_element_type=jnp.float32) + b2_ref[...] + x1)
    o_ref[...] = out.astype(o_ref.dtype)


def lewin_block_forward(x, kparams):
    xf = x.reshape(BL, DIM)
    c2 = lambda i: (0, 0)
    c3 = lambda i: (0, 0, 0)
    out = pl.pallas_call(
        _lewin_block_kernel,
        out_shape=jax.ShapeDtypeStruct((BL, DIM), x.dtype),
        grid=(1,),
        in_specs=[
            pl.BlockSpec((BL, DIM), c2),                       # x (batch folded into rows)
            pl.BlockSpec((1, DIM), c2),                        # norm1 gamma
            pl.BlockSpec((1, DIM), c2),                        # norm1 beta
            pl.BlockSpec((DIM, 3 * DIM), c2),                  # fused Wqkv (bf16, Q pre-scaled)
            pl.BlockSpec((1, 3 * DIM), c2),                    # fused bqkv
            pl.BlockSpec((NUM_HEADS, BL, BL), c3),             # rel-pos bias + window/batch mask
            pl.BlockSpec((DIM, DIM), c2),                      # proj W (bf16)
            pl.BlockSpec((1, DIM), c2),                        # proj b
            pl.BlockSpec((1, DIM), c2),                        # norm2 gamma
            pl.BlockSpec((1, DIM), c2),                        # norm2 beta
            pl.BlockSpec((DIM, HIDDEN), c2),                   # LeFF linear1 W (bf16)
            pl.BlockSpec((1, HIDDEN), c2),                     # LeFF linear1 b
            pl.BlockSpec((3, 3, HIDDEN), c3),                  # dwconv W
            pl.BlockSpec((1, HIDDEN), c2),                     # dwconv b
            pl.BlockSpec((HIDDEN, DIM), c2),                   # LeFF linear2 W (bf16)
            pl.BlockSpec((1, DIM), c2),                        # LeFF linear2 b
        ],
        out_specs=pl.BlockSpec((BL, DIM), c2),
        scratch_shapes=[pltpu.VMEM((PAD_ROWS, HIDDEN), jnp.float32)],   # conv pad buffer
        compiler_params=pltpu.CompilerParams(dimension_semantics=("arbitrary",)),
    )(xf, *kparams)
    return out.reshape(B, L, DIM)


# ---------------- parameter setup / one-time kernel-ready preprocessing ----------------
def relative_position_index(ws):
    coords = jnp.stack(jnp.meshgrid(jnp.arange(ws), jnp.arange(ws), indexing="ij"))
    coords_flatten = coords.reshape(2, -1)
    rel = coords_flatten[:, :, None] - coords_flatten[:, None, :]
    rel = rel.transpose(1, 2, 0)
    rel = rel.at[:, :, 0].add(ws - 1)
    rel = rel.at[:, :, 1].add(ws - 1)
    rel = rel.at[:, :, 0].multiply(2 * ws - 1)
    return rel.sum(-1)                                  # (N_TOK, N_TOK)


def init_params(key):
    ks = jax.random.split(key, 13)

    def n(k, shape, s=0.05):
        return jax.random.normal(k, shape, jnp.float32) * s

    return dict(
        norm1_g=jnp.ones((DIM,), jnp.float32), norm1_b=jnp.zeros((DIM,), jnp.float32),
        wq=n(ks[0], (DIM, DIM)), bq=n(ks[1], (DIM,)),              # to_q
        wkv=n(ks[2], (DIM, 2 * DIM)), bkv=n(ks[3], (2 * DIM,)),    # to_kv (k cols | v cols)
        rpb_table=n(ks[4], ((2 * WIN - 1) ** 2, NUM_HEADS), 0.02),
        wp=n(ks[5], (DIM, DIM)), bp=n(ks[6], (DIM,)),
        norm2_g=jnp.ones((DIM,), jnp.float32), norm2_b=jnp.zeros((DIM,), jnp.float32),
        lin1_w=n(ks[7], (DIM, HIDDEN)), lin1_b=n(ks[8], (HIDDEN,)),
        # TODO(synk): torch depthwise Conv2d stores weight as (HIDDEN, 1, 3, 3); real
        # checkpoints must be permuted to (3, 3, HIDDEN) before prepare_kernel_params.
        dw_w=n(ks[9], (3, 3, HIDDEN)), dw_b=n(ks[10], (HIDDEN,)),
        lin2_w=n(ks[11], (HIDDEN, DIM)), lin2_b=n(ks[12], (DIM,)),
    )


def prepare_kernel_params(p):
    """One-time fold of module parameters into kernel-ready arrays."""
    # per-window relative position bias, (heads, 16, 16)
    idx = relative_position_index(WIN).reshape(-1)
    rpb = p["rpb_table"][idx].reshape(N_TOK, N_TOK, NUM_HEADS).transpose(2, 0, 1)

    # additive bias for full (B*L x B*L) attention: rel-pos bias on same-window /
    # same-image pairs, -1e9 everywhere else (makes full softmax == per-window softmax).
    r = jnp.arange(L) // W
    c = jnp.arange(L) % W
    win_id = (r // WIN) * NW_W + (c // WIN)
    pos_in_win = (r % WIN) * WIN + (c % WIN)
    wid = jnp.tile(win_id, B) + jnp.repeat(jnp.arange(B), L) * NW   # unique across batch
    pos = jnp.tile(pos_in_win, B)
    same = wid[:, None] == wid[None, :]
    bias = rpb[:, pos[:, None], pos[None, :]]                       # (heads, BL, BL)
    attn_bias = jnp.where(same[None, :, :], bias, NEG_MASK).astype(jnp.float32)

    # fused [scaled-Q | K | V] projection (attention scale folded into the Q columns)
    wqkv = jnp.concatenate([p["wq"] * SCALE, p["wkv"]], axis=1)
    bqkv = jnp.concatenate([p["bq"] * SCALE, p["bkv"]], axis=0)

    bf16 = jnp.bfloat16
    return (
        p["norm1_g"].reshape(1, DIM), p["norm1_b"].reshape(1, DIM),
        wqkv.astype(bf16), bqkv.reshape(1, 3 * DIM),
        attn_bias,
        p["wp"].astype(bf16), p["bp"].reshape(1, DIM),
        p["norm2_g"].reshape(1, DIM), p["norm2_b"].reshape(1, DIM),
        p["lin1_w"].astype(bf16), p["lin1_b"].reshape(1, HIDDEN),
        p["dw_w"], p["dw_b"].reshape(1, HIDDEN),
        p["lin2_w"].astype(bf16), p["lin2_b"].reshape(1, DIM),
    )


if __name__ == "__main__":
    key = jax.random.PRNGKey(0)
    kx, kp = jax.random.split(key)
    x = jax.random.normal(kx, (B, L, DIM), jnp.float32)
    params = init_params(kp)
    kparams = prepare_kernel_params(params)

    out = jax.jit(lewin_block_forward)(x, kparams)
    jax.block_until_ready(out)
    assert out.shape == (B, L, DIM)
    assert bool(jnp.all(jnp.isfinite(out)))
    print("KERNEL_OK")
</pallas_src>

<mosaic_0001>
module attributes {stable_mosaic.version = 11 : i64} {
  func.func @_lewin_block_kernel(%arg0: i32, %arg1: memref<128x32xf32, #tpu.memory_space<vmem>>, %arg2: memref<1x32xf32, #tpu.memory_space<vmem>>, %arg3: memref<1x32xf32, #tpu.memory_space<vmem>>, %arg4: memref<32x96xbf16, #tpu.memory_space<vmem>>, %arg5: memref<1x96xf32, #tpu.memory_space<vmem>>, %arg6: memref<4x128x128xf32, #tpu.memory_space<vmem>>, %arg7: memref<32x32xbf16, #tpu.memory_space<vmem>>, %arg8: memref<1x32xf32, #tpu.memory_space<vmem>>, %arg9: memref<1x32xf32, #tpu.memory_space<vmem>>, %arg10: memref<1x32xf32, #tpu.memory_space<vmem>>, %arg11: memref<32x128xbf16, #tpu.memory_space<vmem>>, %arg12: memref<1x128xf32, #tpu.memory_space<vmem>>, %arg13: memref<3x3x128xf32, #tpu.memory_space<vmem>>, %arg14: memref<1x128xf32, #tpu.memory_space<vmem>>, %arg15: memref<128x32xbf16, #tpu.memory_space<vmem>>, %arg16: memref<1x32xf32, #tpu.memory_space<vmem>>, %arg17: memref<128x32xf32, #tpu.memory_space<vmem>>, %arg18: memref<160x128xf32, #tpu.memory_space<vmem>>) attributes {dimension_semantics = [#tpu.dimension_semantics<arbitrary>], iteration_bounds = array<i64: 1>, scalar_prefetch = 0 : i64, scratch_operands = 1 : i64, tpu.core_type = #tpu.core_type<tc>, window_params = [{pipeline_mode = #tpu.pipeline_mode<synchronous>, transform_indices = @transform_0, window_bounds = array<i64: 128, 32>}, {pipeline_mode = #tpu.pipeline_mode<synchronous>, transform_indices = @transform_1, window_bounds = array<i64: 1, 32>}, {pipeline_mode = #tpu.pipeline_mode<synchronous>, transform_indices = @transform_2, window_bounds = array<i64: 1, 32>}, {pipeline_mode = #tpu.pipeline_mode<synchronous>, transform_indices = @transform_3, window_bounds = array<i64: 32, 96>}, {pipeline_mode = #tpu.pipeline_mode<synchronous>, transform_indices = @transform_4, window_bounds = array<i64: 1, 96>}, {pipeline_mode = #tpu.pipeline_mode<synchronous>, transform_indices = @transform_5, window_bounds = array<i64: 4, 128, 128>}, {pipeline_mode = #tpu.pipeline_mode<synchronous>, transform_indices = @transform_6, window_bounds = array<i64: 32, 32>}, {pipeline_mode = #tpu.pipeline_mode<synchronous>, transform_indices = @transform_7, window_bounds = array<i64: 1, 32>}, {pipeline_mode = #tpu.pipeline_mode<synchronous>, transform_indices = @transform_8, window_bounds = array<i64: 1, 32>}, {pipeline_mode = #tpu.pipeline_mode<synchronous>, transform_indices = @transform_9, window_bounds = array<i64: 1, 32>}, {pipeline_mode = #tpu.pipeline_mode<synchronous>, transform_indices = @transform_10, window_bounds = array<i64: 32, 128>}, {pipeline_mode = #tpu.pipeline_mode<synchronous>, transform_indices = @transform_11, window_bounds = array<i64: 1, 128>}, {pipeline_mode = #tpu.pipeline_mode<synchronous>, transform_indices = @transform_12, window_bounds = array<i64: 3, 3, 128>}, {pipeline_mode = #tpu.pipeline_mode<synchronous>, transform_indices = @transform_13, window_bounds = array<i64: 1, 128>}, {pipeline_mode = #tpu.pipeline_mode<synchronous>, transform_indices = @transform_14, window_bounds = array<i64: 128, 32>}, {pipeline_mode = #tpu.pipeline_mode<synchronous>, transform_indices = @transform_15, window_bounds = array<i64: 1, 32>}, {pipeline_mode = #tpu.pipeline_mode<synchronous>, transform_indices = @transform_16, window_bounds = array<i64: 128, 32>}]} {
    %c0 = arith.constant 0 : index
    %c0_0 = arith.constant 0 : index
    %0 = vector.load %arg1[%c0, %c0_0] : memref<128x32xf32, #tpu.memory_space<vmem>>, vector<128x32xf32>
    %c0_1 = arith.constant 0 : index
    %c0_2 = arith.constant 0 : index
    %1 = vector.load %arg2[%c0_1, %c0_2] : memref<1x32xf32, #tpu.memory_space<vmem>>, vector<1x32xf32>
    %c0_3 = arith.constant 0 : index
    %c0_4 = arith.constant 0 : index
    %2 = vector.load %arg3[%c0_3, %c0_4] : memref<1x32xf32, #tpu.memory_space<vmem>>, vector<1x32xf32>
    %cst = arith.constant dense<0.000000e+00> : vector<128xf32>
    %3 = vector.multi_reduction <add>, %0, %cst [1] : vector<128x32xf32> to vector<128xf32>
    %4 = vector.shape_cast %3 : vector<128xf32> to vector<128x1xf32>
    %cst_5 = arith.constant 3.200000e+01 : f32
    %5 = vector.broadcast %cst_5 : f32 to vector<128x1xf32>
    %6 = arith.divf %4, %5 : vector<128x1xf32>
    %7 = vector.broadcast %6 : vector<128x1xf32> to vector<128x32xf32>
    %8 = arith.subf %0, %7 : vector<128x32xf32>
    %9 = arith.mulf %8, %8 : vector<128x32xf32>
    %cst_6 = arith.constant dense<0.000000e+00> : vector<128xf32>
    %10 = vector.multi_reduction <add>, %9, %cst_6 [1] : vector<128x32xf32> to vector<128xf32>
    %11 = vector.shape_cast %10 : vector<128xf32> to vector<128x1xf32>
    %cst_7 = arith.constant 3.200000e+01 : f32
    %12 = vector.broadcast %cst_7 : f32 to vector<128x1xf32>
    %13 = arith.divf %11, %12 : vector<128x1xf32>
    %14 = vector.broadcast %6 : vector<128x1xf32> to vector<128x32xf32>
    %15 = arith.subf %0, %14 : vector<128x32xf32>
    %cst_8 = arith.constant 9.99999974E-6 : f32
    %16 = vector.broadcast %cst_8 : f32 to vector<128x1xf32>
    %17 = arith.addf %13, %16 : vector<128x1xf32>
    %18 = math.rsqrt %17 : vector<128x1xf32>
    %19 = vector.broadcast %18 : vector<128x1xf32> to vector<128x32xf32>
    %20 = arith.mulf %15, %19 : vector<128x32xf32>
    %21 = vector.broadcast %1 : vector<1x32xf32> to vector<128x32xf32>
    %22 = arith.mulf %20, %21 : vector<128x32xf32>
    %23 = vector.broadcast %2 : vector<1x32xf32> to vector<128x32xf32>
    %24 = arith.addf %22, %23 : vector<128x32xf32>
    %25 = arith.truncf %24 : vector<128x32xf32> to vector<128x32xbf16>
    %c0_9 = arith.constant 0 : index
    %c0_10 = arith.constant 0 : index
    %26 = vector.load %arg4[%c0_9, %c0_10] : memref<32x96xbf16, #tpu.memory_space<vmem>>, vector<32x96xbf16>
    %cst_11 = arith.constant dense<0.000000e+00> : vector<128x96xf32>
    %27 = tpu.matmul %25, %26, %cst_11 {dimension_numbers = #tpu.dot_dimension_numbers<[1], [0], [0], [1], [0, 0, 1, 1], [], []>} : vector<128x32xbf16>, vector<32x96xbf16>, vector<128x96xf32> -> vector<128x96xf32>
    %c0_12 = arith.constant 0 : index
    %c0_13 = arith.constant 0 : index
    %28 = vector.load %arg5[%c0_12, %c0_13] : memref<1x96xf32, #tpu.memory_space<vmem>>, vector<1x96xf32>
    %29 = vector.broadcast %28 : vector<1x96xf32> to vector<128x96xf32>
    %30 = arith.addf %27, %29 : vector<128x96xf32>
    %31 = vector.extract_strided_slice %30 {offsets = [0, 0], sizes = [128, 32], strides = [1, 1]} : vector<128x96xf32> to vector<128x32xf32>
    %32 = vector.extract_strided_slice %30 {offsets = [0, 32], sizes = [128, 32], strides = [1, 1]} : vector<128x96xf32> to vector<128x32xf32>
    %33 = vector.extract_strided_slice %30 {offsets = [0, 64], sizes = [128, 32], strides = [1, 1]} : vector<128x96xf32> to vector<128x32xf32>
    %34 = vector.extract_strided_slice %31 {offsets = [0, 0], sizes = [128, 8], strides = [1, 1]} : vector<128x32xf32> to vector<128x8xf32>
    %35 = arith.truncf %34 : vector<128x8xf32> to vector<128x8xbf16>
    %36 = vector.extract_strided_slice %32 {offsets = [0, 0], sizes = [128, 8], strides = [1, 1]} : vector<128x32xf32> to vector<128x8xf32>
    %37 = arith.truncf %36 : vector<128x8xf32> to vector<128x8xbf16>
    %38 = vector.extract_strided_slice %33 {offsets = [0, 0], sizes = [128, 8], strides = [1, 1]} : vector<128x32xf32> to vector<128x8xf32>
    %39 = arith.truncf %38 : vector<128x8xf32> to vector<128x8xbf16>
    %cst_14 = arith.constant dense<0.000000e+00> : vector<128x128xf32>
    %40 = tpu.matmul %35, %37, %cst_14 {dimension_numbers = #tpu.dot_dimension_numbers<[1], [1], [0], [0], [0, 0, 1, 0], [], []>} : vector<128x8xbf16>, vector<128x8xbf16>, vector<128x128xf32> -> vector<128x128xf32>
    %c0_15 = arith.constant 0 : index
    %c0_16 = arith.constant 0 : index
    %c0_17 = arith.constant 0 : index
    %41 = vector.load %arg6[%c0_15, %c0_16, %c0_17] : memref<4x128x128xf32, #tpu.memory_space<vmem>>, vector<1x128x128xf32>
    %42 = vector.shape_cast %41 : vector<1x128x128xf32> to vector<128x128xf32>
    %43 = arith.addf %40, %42 : vector<128x128xf32>
    %cst_18 = arith.constant dense<0xFF800000> : vector<128xf32>
    %44 = vector.multi_reduction <maximumf>, %43, %cst_18 [1] : vector<128x128xf32> to vector<128xf32>
    %45 = vector.shape_cast %44 : vector<128xf32> to vector<128x1xf32>
    %46 = vector.broadcast %45 : vector<128x1xf32> to vector<128x128xf32>
    %47 = arith.subf %43, %46 : vector<128x128xf32>
    %48 = math.exp %47 : vector<128x128xf32>
    %cst_19 = arith.constant dense<0.000000e+00> : vector<128xf32>
    %49 = vector.multi_reduction <add>, %48, %cst_19 [1] : vector<128x128xf32> to vector<128xf32>
    %50 = vector.shape_cast %49 : vector<128xf32> to vector<128x1xf32>
    %51 = tpu.reciprocal %50 {approx = true} : vector<128x1xf32> -> vector<128x1xf32>
    %52 = vector.broadcast %51 : vector<128x1xf32> to vector<128x128xf32>
    %53 = arith.mulf %48, %52 : vector<128x128xf32>
    %54 = arith.truncf %53 : vector<128x128xf32> to vector<128x128xbf16>
    %cst_20 = arith.constant dense<0.000000e+00> : vector<128x8xf32>
    %55 = tpu.matmul %54, %39, %cst_20 {dimension_numbers = #tpu.dot_dimension_numbers<[1], [0], [0], [1], [0, 0, 1, 1], [], []>} : vector<128x128xbf16>, vector<128x8xbf16>, vector<128x8xf32> -> vector<128x8xf32>
    %56 = vector.extract_strided_slice %31 {offsets = [0, 8], sizes = [128, 8], strides = [1, 1]} : vector<128x32xf32> to vector<128x8xf32>
    %57 = arith.truncf %56 : vector<128x8xf32> to vector<128x8xbf16>
    %58 = vector.extract_strided_slice %32 {offsets = [0, 8], sizes = [128, 8], strides = [1, 1]} : vector<128x32xf32> to vector<128x8xf32>
    %59 = arith.truncf %58 : vector<128x8xf32> to vector<128x8xbf16>
    %60 = vector.extract_strided_slice %33 {offsets = [0, 8], sizes = [128, 8], strides = [1, 1]} : vector<128x32xf32> to vector<128x8xf32>
    %61 = arith.truncf %60 : vector<128x8xf32> to vector<128x8xbf16>
    %cst_21 = arith.constant dense<0.000000e+00> : vector<128x128xf32>
    %62 = tpu.matmul %57, %59, %cst_21 {dimension_numbers = #tpu.dot_dimension_numbers<[1], [1], [0], [0], [0, 0, 1, 0], [], []>} : vector<128x8xbf16>, vector<128x8xbf16>, vector<128x128xf32> -> vector<128x128xf32>
    %c1 = arith.constant 1 : index
    %c0_22 = arith.constant 0 : index
    %c0_23 = arith.constant 0 : index
    %63 = vector.load %arg6[%c1, %c0_22, %c0_23] : memref<4x128x128xf32, #tpu.memory_space<vmem>>, vector<1x128x128xf32>
    %64 = vector.shape_cast %63 : vector<1x128x128xf32> to vector<128x128xf32>
    %65 = arith.addf %62, %64 : vector<128x128xf32>
    %cst_24 = arith.constant dense<0xFF800000> : vector<128xf32>
    %66 = vector.multi_reduction <maximumf>, %65, %cst_24 [1] : vector<128x128xf32> to vector<128xf32>
    %67 = vector.shape_cast %66 : vector<128xf32> to vector<128x1xf32>
    %68 = vector.broadcast %67 : vector<128x1xf32> to vector<128x128xf32>
    %69 = arith.subf %65, %68 : vector<128x128xf32>
    %70 = math.exp %69 : vector<128x128xf32>
    %cst_25 = arith.constant dense<0.000000e+00> : vector<128xf32>
    %71 = vector.multi_reduction <add>, %70, %cst_25 [1] : vector<128x128xf32> to vector<128xf32>
    %72 = vector.shape_cast %71 : vector<128xf32> to vector<128x1xf32>
    %73 = tpu.reciprocal %72 {approx = true} : vector<128x1xf32> -> vector<128x1xf32>
    %74 = vector.broadcast %73 : vector<128x1xf32> to vector<128x128xf32>
    %75 = arith.mulf %70, %74 : vector<128x128xf32>
    %76 = arith.truncf %75 : vector<128x128xf32> to vector<128x128xbf16>
    %cst_26 = arith.constant dense<0.000000e+00> : vector<128x8xf32>
    %77 = tpu.matmul %76, %61, %cst_26 {dimension_numbers = #tpu.dot_dimension_numbers<[1], [0], [0], [1], [0, 0, 1, 1], [], []>} : vector<128x128xbf16>, vector<128x8xbf16>, vector<128x8xf32> -> vector<128x8xf32>
    %78 = vector.extract_strided_slice %31 {offsets = [0, 16], sizes = [128, 8], strides = [1, 1]} : vector<128x32xf32> to vector<128x8xf32>
    %79 = arith.truncf %78 : vector<128x8xf32> to vector<128x8xbf16>
    %80 = vector.extract_strided_slice %32 {offsets = [0, 16], sizes = [128, 8], strides = [1, 1]} : vector<128x32xf32> to vector<128x8xf32>
    %81 = arith.truncf %80 : vector<128x8xf32> to vector<128x8xbf16>
    %82 = vector.extract_strided_slice %33 {offsets = [0, 16], sizes = [128, 8], strides = [1, 1]} : vector<128x32xf32> to vector<128x8xf32>
    %83 = arith.truncf %82 : vector<128x8xf32> to vector<128x8xbf16>
    %cst_27 = arith.constant dense<0.000000e+00> : vector<128x128xf32>
    %84 = tpu.matmul %79, %81, %cst_27 {dimension_numbers = #tpu.dot_dimension_numbers<[1], [1], [0], [0], [0, 0, 1, 0], [], []>} : vector<128x8xbf16>, vector<128x8xbf16>, vector<128x128xf32> -> vector<128x128xf32>
    %c2 = arith.constant 2 : index
    %c0_28 = arith.constant 0 : index
    %c0_29 = arith.constant 0 : index
    %85 = vector.load %arg6[%c2, %c0_28, %c0_29] : memref<4x128x128xf32, #tpu.memory_space<vmem>>, vector<1x128x128xf32>
    %86 = vector.shape_cast %85 : vector<1x128x128xf32> to vector<128x128xf32>
    %87 = arith.addf %84, %86 : vector<128x128xf32>
    %cst_30 = arith.constant dense<0xFF800000> : vector<128xf32>
    %88 = vector.multi_reduction <maximumf>, %87, %cst_30 [1] : vector<128x128xf32> to vector<128xf32>
    %89 = vector.shape_cast %88 : vector<128xf32> to vector<128x1xf32>
    %90 = vector.broadcast %89 : vector<128x1xf32> to vector<128x128xf32>
    %91 = arith.subf %87, %90 : vector<128x128xf32>
    %92 = math.exp %91 : vector<128x128xf32>
    %cst_31 = arith.constant dense<0.000000e+00> : vector<128xf32>
    %93 = vector.multi_reduction <add>, %92, %cst_31 [1] : vector<128x128xf32> to vector<128xf32>
    %94 = vector.shape_cast %93 : vector<128xf32> to vector<128x1xf32>
    %95 = tpu.reciprocal %94 {approx = true} : vector<128x1xf32> -> vector<128x1xf32>
    %96 = vector.broadcast %95 : vector<128x1xf32> to vector<128x128xf32>
    %97 = arith.mulf %92, %96 : vector<128x128xf32>
    %98 = arith.truncf %97 : vector<128x128xf32> to vector<128x128xbf16>
    %cst_32 = arith.constant dense<0.000000e+00> : vector<128x8xf32>
    %99 = tpu.matmul %98, %83, %cst_32 {dimension_numbers = #tpu.dot_dimension_numbers<[1], [0], [0], [1], [0, 0, 1, 1], [], []>} : vector<128x128xbf16>, vector<128x8xbf16>, vector<128x8xf32> -> vector<128x8xf32>
    %100 = vector.extract_strided_slice %31 {offsets = [0, 24], sizes = [128, 8], strides = [1, 1]} : vector<128x32xf32> to vector<128x8xf32>
    %101 = arith.truncf %100 : vector<128x8xf32> to vector<128x8xbf16>
    %102 = vector.extract_strided_slice %32 {offsets = [0, 24], sizes = [128, 8], strides = [1, 1]} : vector<128x32xf32> to vector<128x8xf32>
    %103 = arith.truncf %102 : vector<128x8xf32> to vector<128x8xbf16>
    %104 = vector.extract_strided_slice %33 {offsets = [0, 24], sizes = [128, 8], strides = [1, 1]} : vector<128x32xf32> to vector<128x8xf32>
    %105 = arith.truncf %104 : vector<128x8xf32> to vector<128x8xbf16>
    %cst_33 = arith.constant dense<0.000000e+00> : vector<128x128xf32>
    %106 = tpu.matmul %101, %103, %cst_33 {dimension_numbers = #tpu.dot_dimension_numbers<[1], [1], [0], [0], [0, 0, 1, 0], [], []>} : vector<128x8xbf16>, vector<128x8xbf16>, vector<128x128xf32> -> vector<128x128xf32>
    %c3 = arith.constant 3 : index
    %c0_34 = arith.constant 0 : index
    %c0_35 = arith.constant 0 : index
    %107 = vector.load %arg6[%c3, %c0_34, %c0_35] : memref<4x128x128xf32, #tpu.memory_space<vmem>>, vector<1x128x128xf32>
    %108 = vector.shape_cast %107 : vector<1x128x128xf32> to vector<128x128xf32>
    %109 = arith.addf %106, %108 : vector<128x128xf32>
    %cst_36 = arith.constant dense<0xFF800000> : vector<128xf32>
    %110 = vector.multi_reduction <maximumf>, %109, %cst_36 [1] : vector<128x128xf32> to vector<128xf32>
    %111 = vector.shape_cast %110 : vector<128xf32> to vector<128x1xf32>
    %112 = vector.broadcast %111 : vector<128x1xf32> to vector<128x128xf32>
    %113 = arith.subf %109, %112 : vector<128x128xf32>
    %114 = math.exp %113 : vector<128x128xf32>
    %cst_37 = arith.constant dense<0.000000e+00> : vector<128xf32>
    %115 = vector.multi_reduction <add>, %114, %cst_37 [1] : vector<128x128xf32> to vector<128xf32>
    %116 = vector.shape_cast %115 : vector<128xf32> to vector<128x1xf32>
    %117 = tpu.reciprocal %116 {approx = true} : vector<128x1xf32> -> vector<128x1xf32>
    %118 = vector.broadcast %117 : vector<128x1xf32> to vector<128x128xf32>
    %119 = arith.mulf %114, %118 : vector<128x128xf32>
    %120 = arith.truncf %119 : vector<128x128xf32> to vector<128x128xbf16>
    %cst_38 = arith.constant dense<0.000000e+00> : vector<128x8xf32>
    %121 = tpu.matmul %120, %105, %cst_38 {dimension_numbers = #tpu.dot_dimension_numbers<[1], [0], [0], [1], [0, 0, 1, 1], [], []>} : vector<128x128xbf16>, vector<128x8xbf16>, vector<128x8xf32> -> vector<128x8xf32>
    %122 = tpu.concatenate %55, %77, %99, %121 in 1 : vector<128x8xf32>, vector<128x8xf32>, vector<128x8xf32>, vector<128x8xf32> -> vector<128x32xf32>
    %123 = arith.truncf %122 : vector<128x32xf32> to vector<128x32xbf16>
    %c0_39 = arith.constant 0 : index
    %c0_40 = arith.constant 0 : index
    %124 = vector.load %arg7[%c0_39, %c0_40] : memref<32x32xbf16, #tpu.memory_space<vmem>>, vector<32x32xbf16>
    %cst_41 = arith.constant dense<0.000000e+00> : vector<128x32xf32>
    %125 = tpu.matmul %123, %124, %cst_41 {dimension_numbers = #tpu.dot_dimension_numbers<[1], [0], [0], [1], [0, 0, 1, 1], [], []>} : vector<128x32xbf16>, vector<32x32xbf16>, vector<128x32xf32> -> vector<128x32xf32>
    %c0_42 = arith.constant 0 : index
    %c0_43 = arith.constant 0 : index
    %126 = vector.load %arg8[%c0_42, %c0_43] : memref<1x32xf32, #tpu.memory_space<vmem>>, vector<1x32xf32>
    %127 = vector.broadcast %126 : vector<1x32xf32> to vector<128x32xf32>
    %128 = arith.addf %125, %127 : vector<128x32xf32>
    %129 = arith.addf %0, %128 : vector<128x32xf32>
    %c0_44 = arith.constant 0 : index
    %c0_45 = arith.constant 0 : index
    %130 = vector.load %arg9[%c0_44, %c0_45] : memref<1x32xf32, #tpu.memory_space<vmem>>, vector<1x32xf32>
    %c0_46 = arith.constant 0 : index
    %c0_47 = arith.constant 0 : index
    %131 = vector.load %arg10[%c0_46, %c0_47] : memref<1x32xf32, #tpu.memory_space<vmem>>, vector<1x32xf32>
    %cst_48 = arith.constant dense<0.000000e+00> : vector<128xf32>
    %132 = vector.multi_reduction <add>, %129, %cst_48 [1] : vector<128x32xf32> to vector<128xf32>
    %133 = vector.shape_cast %132 : vector<128xf32> to vector<128x1xf32>
    %cst_49 = arith.constant 3.200000e+01 : f32
    %134 = vector.broadcast %cst_49 : f32 to vector<128x1xf32>
    %135 = arith.divf %133, %134 : vector<128x1xf32>
    %136 = vector.broadcast %135 : vector<128x1xf32> to vector<128x32xf32>
    %137 = arith.subf %129, %136 : vector<128x32xf32>
    %138 = arith.mulf %137, %137 : vector<128x32xf32>
    %cst_50 = arith.constant dense<0.000000e+00> : vector<128xf32>
    %139 = vector.multi_reduction <add>, %138, %cst_50 [1] : vector<128x32xf32> to vector<128xf32>
    %140 = vector.shape_cast %139 : vector<128xf32> to vector<128x1xf32>
    %cst_51 = arith.constant 3.200000e+01 : f32
    %141 = vector.broadcast %cst_51 : f32 to vector<128x1xf32>
    %142 = arith.divf %140, %141 : vector<128x1xf32>
    %143 = vector.broadcast %135 : vector<128x1xf32> to vector<128x32xf32>
    %144 = arith.subf %129, %143 : vector<128x32xf32>
    %cst_52 = arith.constant 9.99999974E-6 : f32
    %145 = vector.broadcast %cst_52 : f32 to vector<128x1xf32>
    %146 = arith.addf %142, %145 : vector<128x1xf32>
    %147 = math.rsqrt %146 : vector<128x1xf32>
    %148 = vector.broadcast %147 : vector<128x1xf32> to vector<128x32xf32>
    %149 = arith.mulf %144, %148 : vector<128x32xf32>
    %150 = vector.broadcast %130 : vector<1x32xf32> to vector<128x32xf32>
    %151 = arith.mulf %149, %150 : vector<128x32xf32>
    %152 = vector.broadcast %131 : vector<1x32xf32> to vector<128x32xf32>
    %153 = arith.addf %151, %152 : vector<128x32xf32>
    %154 = arith.truncf %153 : vector<128x32xf32> to vector<128x32xbf16>
    %c0_53 = arith.constant 0 : index
    %c0_54 = arith.constant 0 : index
    %155 = vector.load %arg11[%c0_53, %c0_54] : memref<32x128xbf16, #tpu.memory_space<vmem>>, vector<32x128xbf16>
    %cst_55 = arith.constant dense<0.000000e+00> : vector<128x128xf32>
    %156 = tpu.matmul %154, %155, %cst_55 {dimension_numbers = #tpu.dot_dimension_numbers<[1], [0], [0], [1], [0, 0, 1, 1], [], []>} : vector<128x32xbf16>, vector<32x128xbf16>, vector<128x128xf32> -> vector<128x128xf32>
    %c0_56 = arith.constant 0 : index
    %c0_57 = arith.constant 0 : index
    %157 = vector.load %arg12[%c0_56, %c0_57] : memref<1x128xf32, #tpu.memory_space<vmem>>, vector<1x128xf32>
    %158 = vector.broadcast %157 : vector<1x128xf32> to vector<128x128xf32>
    %159 = arith.addf %156, %158 : vector<128x128xf32>
    %cst_58 = arith.constant 5.000000e-01 : f32
    %160 = vector.broadcast %cst_58 : f32 to vector<128x128xf32>
    %161 = arith.mulf %160, %159 : vector<128x128xf32>
    %cst_59 = arith.constant 0.707106769 : f32
    %162 = vector.broadcast %cst_59 : f32 to vector<128x128xf32>
    %163 = arith.mulf %159, %162 : vector<128x128xf32>
    %164 = math.erf %163 : vector<128x128xf32>
    %cst_60 = arith.constant 1.000000e+00 : f32
    %165 = vector.broadcast %cst_60 : f32 to vector<128x128xf32>
    %166 = arith.addf %165, %164 : vector<128x128xf32>
    %167 = arith.mulf %161, %166 : vector<128x128xf32>
    %cst_61 = arith.constant 0.000000e+00 : f32
    %168 = vector.broadcast %cst_61 : f32 to vector<16x128xf32>
    %c0_62 = arith.constant 0 : index
    %c0_63 = arith.constant 0 : index
    %169 = vector.load %arg18[%c0_62, %c0_63] : memref<160x128xf32, #tpu.memory_space<vmem>>, vector<16x128xf32>
    tpu.vector_store %arg18[%c0_62, %c0_63], %168 {strides = array<i32>} : memref<160x128xf32, #tpu.memory_space<vmem>>, vector<16x128xf32>,
    %cst_64 = arith.constant 0.000000e+00 : f32
    %170 = vector.broadcast %cst_64 : f32 to vector<16x128xf32>
    %c144 = arith.constant 144 : index
    %c0_65 = arith.constant 0 : index
    %171 = vector.load %arg18[%c144, %c0_65] : memref<160x128xf32, #tpu.memory_space<vmem>>, vector<16x128xf32>
    tpu.vector_store %arg18[%c144, %c0_65], %170 {strides = array<i32>} : memref<160x128xf32, #tpu.memory_space<vmem>>, vector<16x128xf32>,
    %c16 = arith.constant 16 : index
    %c0_66 = arith.constant 0 : index
    %172 = vector.load %arg18[%c16, %c0_66] : memref<160x128xf32, #tpu.memory_space<vmem>>, vector<128x128xf32>
    tpu.vector_store %arg18[%c16, %c0_66], %167 {strides = array<i32>} : memref<160x128xf32, #tpu.memory_space<vmem>>, vector<128x128xf32>,
    %173 = tpu.iota {dimensions = array<i32: 0>} : vector<128x1xi32>
    %c7_i32 = arith.constant 7 : i32
    %174 = vector.broadcast %c7_i32 : i32 to vector<128x1xi32>
    %175 = arith.andi %173, %174 : vector<128x1xi32>
    %c3_i32 = arith.constant 3 : i32
    %176 = vector.broadcast %c3_i32 : i32 to vector<128x1xi32>
    %177 = arith.shrsi %173, %176 : vector<128x1xi32>
    %c7_i32_67 = arith.constant 7 : i32
    %178 = vector.broadcast %c7_i32_67 : i32 to vector<128x1xi32>
    %179 = arith.andi %177, %178 : vector<128x1xi32>
    %cst_68 = arith.constant 0.000000e+00 : f32
    %180 = vector.broadcast %cst_68 : f32 to vector<128x128xf32>
    %c-1_i32 = arith.constant -1 : i32
    %181 = vector.broadcast %c-1_i32 : i32 to vector<128x1xi32>
    %182 = arith.addi %179, %181 : vector<128x1xi32>
    %c0_i32 = arith.constant 0 : i32
    %183 = vector.broadcast %c0_i32 : i32 to vector<128x1xi32>
    %184 = arith.cmpi sge, %182, %183 : vector<128x1xi32>
    %c8_i32 = arith.constant 8 : i32
    %185 = vector.broadcast %c8_i32 : i32 to vector<128x1xi32>
    %186 = arith.cmpi slt, %182, %185 : vector<128x1xi32>
    %187 = arith.andi %184, %186 : vector<128x1xi1>
    %c-1_i32_69 = arith.constant -1 : i32
    %188 = vector.broadcast %c-1_i32_69 : i32 to vector<128x1xi32>
    %189 = arith.addi %175, %188 : vector<128x1xi32>
    %c0_i32_70 = arith.constant 0 : i32
    %190 = vector.broadcast %c0_i32_70 : i32 to vector<128x1xi32>
    %191 = arith.cmpi sge, %189, %190 : vector<128x1xi32>
    %c8_i32_71 = arith.constant 8 : i32
    %192 = vector.broadcast %c8_i32_71 : i32 to vector<128x1xi32>
    %193 = arith.cmpi slt, %189, %192 : vector<128x1xi32>
    %194 = arith.andi %191, %193 : vector<128x1xi1>
    %195 = arith.andi %187, %194 : vector<128x1xi1>
    %c7 = arith.constant 7 : index
    %c0_72 = arith.constant 0 : index
    %196 = vector.load %arg18[%c7, %c0_72] : memref<160x128xf32, #tpu.memory_space<vmem>>, vector<128x128xf32>
    %c0_73 = arith.constant 0 : index
    %c0_74 = arith.constant 0 : index
    %c0_75 = arith.constant 0 : index
    %197 = vector.load %arg13[%c0_73, %c0_74, %c0_75] : memref<3x3x128xf32, #tpu.memory_space<vmem>>, vector<1x1x128xf32>
    %198 = vector.shape_cast %197 : vector<1x1x128xf32> to vector<128xf32>
    %cst_76 = arith.constant 0.000000e+00 : f32
    %199 = vector.shape_cast %195 : vector<128x1xi1> to vector<128x1xi1>
    %200 = vector.broadcast %199 : vector<128x1xi1> to vector<128x128xi1>
    %201 = vector.broadcast %cst_76 : f32 to vector<128x128xf32>
    %202 = arith.select %200, %196, %201 : vector<128x128xi1>, vector<128x128xf32>
    %203 = vector.shape_cast %198 : vector<128xf32> to vector<1x128xf32>
    %204 = vector.broadcast %203 : vector<1x128xf32> to vector<128x128xf32>
    %205 = arith.mulf %202, %204 : vector<128x128xf32>
    %206 = arith.addf %180, %205 : vector<128x128xf32>
    %c0_i32_77 = arith.constant 0 : i32
    %207 = vector.broadcast %c0_i32_77 : i32 to vector<128x1xi32>
    %208 = arith.addi %175, %207 : vector<128x1xi32>
    %c0_i32_78 = arith.constant 0 : i32
    %209 = vector.broadcast %c0_i32_78 : i32 to vector<128x1xi32>
    %210 = arith.cmpi sge, %208, %209 : vector<128x1xi32>
    %c8_i32_79 = arith.constant 8 : i32
    %211 = vector.broadcast %c8_i32_79 : i32 to vector<128x1xi32>
    %212 = arith.cmpi slt, %208, %211 : vector<128x1xi32>
    %213 = arith.andi %210, %212 : vector<128x1xi1>
    %214 = arith.andi %187, %213 : vector<128x1xi1>
    %c8 = arith.constant 8 : index
    %c0_80 = arith.constant 0 : index
    %215 = vector.load %arg18[%c8, %c0_80] : memref<160x128xf32, #tpu.memory_space<vmem>>, vector<128x128xf32>
    %c0_81 = arith.constant 0 : index
    %c1_82 = arith.constant 1 : index
    %c0_83 = arith.constant 0 : index
    %216 = vector.load %arg13[%c0_81, %c1_82, %c0_83] : memref<3x3x128xf32, #tpu.memory_space<vmem>>, vector<1x1x128xf32>
    %217 = vector.shape_cast %216 : vector<1x1x128xf32> to vector<128xf32>
    %cst_84 = arith.constant 0.000000e+00 : f32
    %218 = vector.shape_cast %214 : vector<128x1xi1> to vector<128x1xi1>
    %219 = vector.broadcast %218 : vector<128x1xi1> to vector<128x128xi1>
    %220 = vector.broadcast %cst_84 : f32 to vector<128x128xf32>
    %221 = arith.select %219, %215, %220 : vector<128x128xi1>, vector<128x128xf32>
    %222 = vector.shape_cast %217 : vector<128xf32> to vector<1x128xf32>
    %223 = vector.broadcast %222 : vector<1x128xf32> to vector<128x128xf32>
    %224 = arith.mulf %221, %223 : vector<128x128xf32>
    %225 = arith.addf %206, %224 : vector<128x128xf32>
    %c1_i32 = arith.constant 1 : i32
    %226 = vector.broadcast %c1_i32 : i32 to vector<128x1xi32>
    %227 = arith.addi %175, %226 : vector<128x1xi32>
    %c0_i32_85 = arith.constant 0 : i32
    %228 = vector.broadcast %c0_i32_85 : i32 to vector<128x1xi32>
    %229 = arith.cmpi sge, %227, %228 : vector<128x1xi32>
    %c8_i32_86 = arith.constant 8 : i32
    %230 = vector.broadcast %c8_i32_86 : i32 to vector<128x1xi32>
    %231 = arith.cmpi slt, %227, %230 : vector<128x1xi32>
    %232 = arith.andi %229, %231 : vector<128x1xi1>
    %233 = arith.andi %187, %232 : vector<128x1xi1>
    %c9 = arith.constant 9 : index
    %c0_87 = arith.constant 0 : index
    %234 = vector.load %arg18[%c9, %c0_87] : memref<160x128xf32, #tpu.memory_space<vmem>>, vector<128x128xf32>
    %c0_88 = arith.constant 0 : index
    %c2_89 = arith.constant 2 : index
    %c0_90 = arith.constant 0 : index
    %235 = vector.load %arg13[%c0_88, %c2_89, %c0_90] : memref<3x3x128xf32, #tpu.memory_space<vmem>>, vector<1x1x128xf32>
    %236 = vector.shape_cast %235 : vector<1x1x128xf32> to vector<128xf32>
    %cst_91 = arith.constant 0.000000e+00 : f32
    %237 = vector.shape_cast %233 : vector<128x1xi1> to vector<128x1xi1>
    %238 = vector.broadcast %237 : vector<128x1xi1> to vector<128x128xi1>
    %239 = vector.broadcast %cst_91 : f32 to vector<128x128xf32>
    %240 = arith.select %238, %234, %239 : vector<128x128xi1>, vector<128x128xf32>
    %241 = vector.shape_cast %236 : vector<128xf32> to vector<1x128xf32>
    %242 = vector.broadcast %241 : vector<1x128xf32> to vector<128x128xf32>
    %243 = arith.mulf %240, %242 : vector<128x128xf32>
    %244 = arith.addf %225, %243 : vector<128x128xf32>
    %c0_i32_92 = arith.constant 0 : i32
    %245 = vector.broadcast %c0_i32_92 : i32 to vector<128x1xi32>
    %246 = arith.addi %179, %245 : vector<128x1xi32>
    %c0_i32_93 = arith.constant 0 : i32
    %247 = vector.broadcast %c0_i32_93 : i32 to vector<128x1xi32>
    %248 = arith.cmpi sge, %246, %247 : vector<128x1xi32>
    %c8_i32_94 = arith.constant 8 : i32
    %249 = vector.broadcast %c8_i32_94 : i32 to vector<128x1xi32>
    %250 = arith.cmpi slt, %246, %249 : vector<128x1xi32>
    %251 = arith.andi %248, %250 : vector<128x1xi1>
    %c-1_i32_95 = arith.constant -1 : i32
    %252 = vector.broadcast %c-1_i32_95 : i32 to vector<128x1xi32>
    %253 = arith.addi %175, %252 : vector<128x1xi32>
    %c0_i32_96 = arith.constant 0 : i32
    %254 = vector.broadcast %c0_i32_96 : i32 to vector<128x1xi32>
    %255 = arith.cmpi sge, %253, %254 : vector<128x1xi32>
    %c8_i32_97 = arith.constant 8 : i32
    %256 = vector.broadcast %c8_i32_97 : i32 to vector<128x1xi32>
    %257 = arith.cmpi slt, %253, %256 : vector<128x1xi32>
    %258 = arith.andi %255, %257 : vector<128x1xi1>
    %259 = arith.andi %251, %258 : vector<128x1xi1>
    %c15 = arith.constant 15 : index
    %c0_98 = arith.constant 0 : index
    %260 = vector.load %arg18[%c15, %c0_98] : memref<160x128xf32, #tpu.memory_space<vmem>>, vector<128x128xf32>
    %c1_99 = arith.constant 1 : index
    %c0_100 = arith.constant 0 : index
    %c0_101 = arith.constant 0 : index
    %261 = vector.load %arg13[%c1_99, %c0_100, %c0_101] : memref<3x3x128xf32, #tpu.memory_space<vmem>>, vector<1x1x128xf32>
    %262 = vector.shape_cast %261 : vector<1x1x128xf32> to vector<128xf32>
    %cst_102 = arith.constant 0.000000e+00 : f32
    %263 = vector.shape_cast %259 : vector<128x1xi1> to vector<128x1xi1>
    %264 = vector.broadcast %263 : vector<128x1xi1> to vector<128x128xi1>
    %265 = vector.broadcast %cst_102 : f32 to vector<128x128xf32>
    %266 = arith.select %264, %260, %265 : vector<128x128xi1>, vector<128x128xf32>
    %267 = vector.shape_cast %262 : vector<128xf32> to vector<1x128xf32>
    %268 = vector.broadcast %267 : vector<1x128xf32> to vector<128x128xf32>
    %269 = arith.mulf %266, %268 : vector<128x128xf32>
    %270 = arith.addf %244, %269 : vector<128x128xf32>
    %c0_i32_103 = arith.constant 0 : i32
    %271 = vector.broadcast %c0_i32_103 : i32 to vector<128x1xi32>
    %272 = arith.addi %175, %271 : vector<128x1xi32>
    %c0_i32_104 = arith.constant 0 : i32
    %273 = vector.broadcast %c0_i32_104 : i32 to vector<128x1xi32>
    %274 = arith.cmpi sge, %272, %273 : vector<128x1xi32>
    %c8_i32_105 = arith.constant 8 : i32
    %275 = vector.broadcast %c8_i32_105 : i32 to vector<128x1xi32>
    %276 = arith.cmpi slt, %272, %275 : vector<128x1xi32>
    %277 = arith.andi %274, %276 : vector<128x1xi1>
    %278 = arith.andi %251, %277 : vector<128x1xi1>
    %c16_106 = arith.constant 16 : index
    %c0_107 = arith.constant 0 : index
    %279 = vector.load %arg18[%c16_106, %c0_107] : memref<160x128xf32, #tpu.memory_space<vmem>>, vector<128x128xf32>
    %c1_108 = arith.constant 1 : index
    %c1_109 = arith.constant 1 : index
    %c0_110 = arith.constant 0 : index
    %280 = vector.load %arg13[%c1_108, %c1_109, %c0_110] : memref<3x3x128xf32, #tpu.memory_space<vmem>>, vector<1x1x128xf32>
    %281 = vector.shape_cast %280 : vector<1x1x128xf32> to vector<128xf32>
    %cst_111 = arith.constant 0.000000e+00 : f32
    %282 = vector.shape_cast %278 : vector<128x1xi1> to vector<128x1xi1>
    %283 = vector.broadcast %282 : vector<128x1xi1> to vector<128x128xi1>
    %284 = vector.broadcast %cst_111 : f32 to vector<128x128xf32>
    %285 = arith.select %283, %279, %284 : vector<128x128xi1>, vector<128x128xf32>
    %286 = vector.shape_cast %281 : vector<128xf32> to vector<1x128xf32>
    %287 = vector.broadcast %286 : vector<1x128xf32> to vector<128x128xf32>
    %288 = arith.mulf %285, %287 : vector<128x128xf32>
    %289 = arith.addf %270, %288 : vector<128x128xf32>
    %c1_i32_112 = arith.constant 1 : i32
    %290 = vector.broadcast %c1_i32_112 : i32 to vector<128x1xi32>
    %291 = arith.addi %175, %290 : vector<128x1xi32>
    %c0_i32_113 = arith.constant 0 : i32
    %292 = vector.broadcast %c0_i32_113 : i32 to vector<128x1xi32>
    %293 = arith.cmpi sge, %291, %292 : vector<128x1xi32>
    %c8_i32_114 = arith.constant 8 : i32
    %294 = vector.broadcast %c8_i32_114 : i32 to vector<128x1xi32>
    %295 = arith.cmpi slt, %291, %294 : vector<128x1xi32>
    %296 = arith.andi %293, %295 : vector<128x1xi1>
    %297 = arith.andi %251, %296 : vector<128x1xi1>
    %c17 = arith.constant 17 : index
    %c0_115 = arith.constant 0 : index
    %298 = vector.load %arg18[%c17, %c0_115] : memref<160x128xf32, #tpu.memory_space<vmem>>, vector<128x128xf32>
    %c1_116 = arith.constant 1 : index
    %c2_117 = arith.constant 2 : index
    %c0_118 = arith.constant 0 : index
    %299 = vector.load %arg13[%c1_116, %c2_117, %c0_118] : memref<3x3x128xf32, #tpu.memory_space<vmem>>, vector<1x1x128xf32>
    %300 = vector.shape_cast %299 : vector<1x1x128xf32> to vector<128xf32>
    %cst_119 = arith.constant 0.000000e+00 : f32
    %301 = vector.shape_cast %297 : vector<128x1xi1> to vector<128x1xi1>
    %302 = vector.broadcast %301 : vector<128x1xi1> to vector<128x128xi1>
    %303 = vector.broadcast %cst_119 : f32 to vector<128x128xf32>
    %304 = arith.select %302, %298, %303 : vector<128x128xi1>, vector<128x128xf32>
    %305 = vector.shape_cast %300 : vector<128xf32> to vector<1x128xf32>
    %306 = vector.broadcast %305 : vector<1x128xf32> to vector<128x128xf32>
    %307 = arith.mulf %304, %306 : vector<128x128xf32>
    %308 = arith.addf %289, %307 : vector<128x128xf32>
    %c1_i32_120 = arith.constant 1 : i32
    %309 = vector.broadcast %c1_i32_120 : i32 to vector<128x1xi32>
    %310 = arith.addi %179, %309 : vector<128x1xi32>
    %c0_i32_121 = arith.constant 0 : i32
    %311 = vector.broadcast %c0_i32_121 : i32 to vector<128x1xi32>
    %312 = arith.cmpi sge, %310, %311 : vector<128x1xi32>
    %c8_i32_122 = arith.constant 8 : i32
    %313 = vector.broadcast %c8_i32_122 : i32 to vector<128x1xi32>
    %314 = arith.cmpi slt, %310, %313 : vector<128x1xi32>
    %315 = arith.andi %312, %314 : vector<128x1xi1>
    %c-1_i32_123 = arith.constant -1 : i32
    %316 = vector.broadcast %c-1_i32_123 : i32 to vector<128x1xi32>
    %317 = arith.addi %175, %316 : vector<128x1xi32>
    %c0_i32_124 = arith.constant 0 : i32
    %318 = vector.broadcast %c0_i32_124 : i32 to vector<128x1xi32>
    %319 = arith.cmpi sge, %317, %318 : vector<128x1xi32>
    %c8_i32_125 = arith.constant 8 : i32
    %320 = vector.broadcast %c8_i32_125 : i32 to vector<128x1xi32>
    %321 = arith.cmpi slt, %317, %320 : vector<128x1xi32>
    %322 = arith.andi %319, %321 : vector<128x1xi1>
    %323 = arith.andi %315, %322 : vector<128x1xi1>
    %c23 = arith.constant 23 : index
    %c0_126 = arith.constant 0 : index
    %324 = vector.load %arg18[%c23, %c0_126] : memref<160x128xf32, #tpu.memory_space<vmem>>, vector<128x128xf32>
    %c2_127 = arith.constant 2 : index
    %c0_128 = arith.constant 0 : index
    %c0_129 = arith.constant 0 : index
    %325 = vector.load %arg13[%c2_127, %c0_128, %c0_129] : memref<3x3x128xf32, #tpu.memory_space<vmem>>, vector<1x1x128xf32>
    %326 = vector.shape_cast %325 : vector<1x1x128xf32> to vector<128xf32>
    %cst_130 = arith.constant 0.000000e+00 : f32
    %327 = vector.shape_cast %323 : vector<128x1xi1> to vector<128x1xi1>
    %328 = vector.broadcast %327 : vector<128x1xi1> to vector<128x128xi1>
    %329 = vector.broadcast %cst_130 : f32 to vector<128x128xf32>
    %330 = arith.select %328, %324, %329 : vector<128x128xi1>, vector<128x128xf32>
    %331 = vector.shape_cast %326 : vector<128xf32> to vector<1x128xf32>
    %332 = vector.broadcast %331 : vector<1x128xf32> to vector<128x128xf32>
    %333 = arith.mulf %330, %332 : vector<128x128xf32>
    %334 = arith.addf %308, %333 : vector<128x128xf32>
    %c0_i32_131 = arith.constant 0 : i32
    %335 = vector.broadcast %c0_i32_131 : i32 to vector<128x1xi32>
    %336 = arith.addi %175, %335 : vector<128x1xi32>
    %c0_i32_132 = arith.constant 0 : i32
    %337 = vector.broadcast %c0_i32_132 : i32 to vector<128x1xi32>
    %338 = arith.cmpi sge, %336, %337 : vector<128x1xi32>
    %c8_i32_133 = arith.constant 8 : i32
    %339 = vector.broadcast %c8_i32_133 : i32 to vector<128x1xi32>
    %340 = arith.cmpi slt, %336, %339 : vector<128x1xi32>
    %341 = arith.andi %338, %340 : vector<128x1xi1>
    %342 = arith.andi %315, %341 : vector<128x1xi1>
    %c24 = arith.constant 24 : index
    %c0_134 = arith.constant 0 : index
    %343 = vector.load %arg18[%c24, %c0_134] : memref<160x128xf32, #tpu.memory_space<vmem>>, vector<128x128xf32>
    %c2_135 = arith.constant 2 : index
    %c1_136 = arith.constant 1 : index
    %c0_137 = arith.constant 0 : index
    %344 = vector.load %arg13[%c2_135, %c1_136, %c0_137] : memref<3x3x128xf32, #tpu.memory_space<vmem>>, vector<1x1x128xf32>
    %345 = vector.shape_cast %344 : vector<1x1x128xf32> to vector<128xf32>
    %cst_138 = arith.constant 0.000000e+00 : f32
    %346 = vector.shape_cast %342 : vector<128x1xi1> to vector<128x1xi1>
    %347 = vector.broadcast %346 : vector<128x1xi1> to vector<128x128xi1>
    %348 = vector.broadcast %cst_138 : f32 to vector<128x128xf32>
    %349 = arith.select %347, %343, %348 : vector<128x128xi1>, vector<128x128xf32>
    %350 = vector.shape_cast %345 : vector<128xf32> to vector<1x128xf32>
    %351 = vector.broadcast %350 : vector<1x128xf32> to vector<128x128xf32>
    %352 = arith.mulf %349, %351 : vector<128x128xf32>
    %353 = arith.addf %334, %352 : vector<128x128xf32>
    %c1_i32_139 = arith.constant 1 : i32
    %354 = vector.broadcast %c1_i32_139 : i32 to vector<128x1xi32>
    %355 = arith.addi %175, %354 : vector<128x1xi32>
    %c0_i32_140 = arith.constant 0 : i32
    %356 = vector.broadcast %c0_i32_140 : i32 to vector<128x1xi32>
    %357 = arith.cmpi sge, %355, %356 : vector<128x1xi32>
    %c8_i32_141 = arith.constant 8 : i32
    %358 = vector.broadcast %c8_i32_141 : i32 to vector<128x1xi32>
    %359 = arith.cmpi slt, %355, %358 : vector<128x1xi32>
    %360 = arith.andi %357, %359 : vector<128x1xi1>
    %361 = arith.andi %315, %360 : vector<128x1xi1>
    %c25 = arith.constant 25 : index
    %c0_142 = arith.constant 0 : index
    %362 = vector.load %arg18[%c25, %c0_142] : memref<160x128xf32, #tpu.memory_space<vmem>>, vector<128x128xf32>
    %c2_143 = arith.constant 2 : index
    %c2_144 = arith.constant 2 : index
    %c0_145 = arith.constant 0 : index
    %363 = vector.load %arg13[%c2_143, %c2_144, %c0_145] : memref<3x3x128xf32, #tpu.memory_space<vmem>>, vector<1x1x128xf32>
    %364 = vector.shape_cast %363 : vector<1x1x128xf32> to vector<128xf32>
    %cst_146 = arith.constant 0.000000e+00 : f32
    %365 = vector.shape_cast %361 : vector<128x1xi1> to vector<128x1xi1>
    %366 = vector.broadcast %365 : vector<128x1xi1> to vector<128x128xi1>
    %367 = vector.broadcast %cst_146 : f32 to vector<128x128xf32>
    %368 = arith.select %366, %362, %367 : vector<128x128xi1>, vector<128x128xf32>
    %369 = vector.shape_cast %364 : vector<128xf32> to vector<1x128xf32>
    %370 = vector.broadcast %369 : vector<1x128xf32> to vector<128x128xf32>
    %371 = arith.mulf %368, %370 : vector<128x128xf32>
    %372 = arith.addf %353, %371 : vector<128x128xf32>
    %c0_147 = arith.constant 0 : index
    %c0_148 = arith.constant 0 : index
    %373 = vector.load %arg14[%c0_147, %c0_148] : memref<1x128xf32, #tpu.memory_space<vmem>>, vector<1x128xf32>
    %374 = vector.broadcast %373 : vector<1x128xf32> to vector<128x128xf32>
    %375 = arith.addf %372, %374 : vector<128x128xf32>
    %cst_149 = arith.constant 5.000000e-01 : f32
    %376 = vector.broadcast %cst_149 : f32 to vector<128x128xf32>
    %377 = arith.mulf %376, %375 : vector<128x128xf32>
    %cst_150 = arith.constant 0.707106769 : f32
    %378 = vector.broadcast %cst_150 : f32 to vector<128x128xf32>
    %379 = arith.mulf %375, %378 : vector<128x128xf32>
    %380 = math.erf %379 : vector<128x128xf32>
    %cst_151 = arith.constant 1.000000e+00 : f32
    %381 = vector.broadcast %cst_151 : f32 to vector<128x128xf32>
    %382 = arith.addf %381, %380 : vector<128x128xf32>
    %383 = arith.mulf %377, %382 : vector<128x128xf32>
    %384 = arith.truncf %383 : vector<128x128xf32> to vector<128x128xbf16>
    %c0_152 = arith.constant 0 : index
    %c0_153 = arith.constant 0 : index
    %385 = vector.load %arg15[%c0_152, %c0_153] : memref<128x32xbf16, #tpu.memory_space<vmem>>, vector<128x32xbf16>
    %cst_154 = arith.constant dense<0.000000e+00> : vector<128x32xf32>
    %386 = tpu.matmul %384, %385, %cst_154 {dimension_numbers = #tpu.dot_dimension_numbers<[1], [0], [0], [1], [0, 0, 1, 1], [], []>} : vector<128x128xbf16>, vector<128x32xbf16>, vector<128x32xf32> -> vector<128x32xf32>
    %c0_155 = arith.constant 0 : index
    %c0_156 = arith.constant 0 : index
    %387 = vector.load %arg16[%c0_155, %c0_156] : memref<1x32xf32, #tpu.memory_space<vmem>>, vector<1x32xf32>
    %388 = vector.broadcast %387 : vector<1x32xf32> to vector<128x32xf32>
    %389 = arith.addf %386, %388 : vector<128x32xf32>
    %390 = arith.addf %389, %129 : vector<128x32xf32>
    %c0_157 = arith.constant 0 : index
    %c0_158 = arith.constant 0 : index
    %391 = vector.load %arg17[%c0_157, %c0_158] : memref<128x32xf32, #tpu.memory_space<vmem>>, vector<128x32xf32>
    tpu.vector_store %arg17[%c0_157, %c0_158], %390 {strides = array<i32>} : memref<128x32xf32, #tpu.memory_space<vmem>>, vector<128x32xf32>,
    return
  }
  func.func @transform_0(%arg0: i32) -> (i32, i32) {
    %c0_i32 = arith.constant 0 : i32
    %c0_i32_0 = arith.constant 0 : i32
    %c0_i32_1 = arith.constant 0 : i32
    return %c0_i32, %c0_i32_0 : i32, i32
  }
  func.func @transform_1(%arg0: i32) -> (i32, i32) {
    %c0_i32 = arith.constant 0 : i32
    %c0_i32_0 = arith.constant 0 : i32
    %c0_i32_1 = arith.constant 0 : i32
    return %c0_i32, %c0_i32_0 : i32, i32
  }
  func.func @transform_2(%arg0: i32) -> (i32, i32) {
    %c0_i32 = arith.constant 0 : i32
    %c0_i32_0 = arith.constant 0 : i32
    %c0_i32_1 = arith.constant 0 : i32
    return %c0_i32, %c0_i32_0 : i32, i32
  }
  func.func @transform_3(%arg0: i32) -> (i32, i32) {
    %c0_i32 = arith.constant 0 : i32
    %c0_i32_0 = arith.constant 0 : i32
    %c0_i32_1 = arith.constant 0 : i32
    return %c0_i32, %c0_i32_0 : i32, i32
  }
  func.func @transform_4(%arg0: i32) -> (i32, i32) {
    %c0_i32 = arith.constant 0 : i32
    %c0_i32_0 = arith.constant 0 : i32
    %c0_i32_1 = arith.constant 0 : i32
    return %c0_i32, %c0_i32_0 : i32, i32
  }
  func.func @transform_5(%arg0: i32) -> (i32, i32, i32) {
    %c0_i32 = arith.constant 0 : i32
    %c0_i32_0 = arith.constant 0 : i32
    %c0_i32_1 = arith.constant 0 : i32
    %c0_i32_2 = arith.constant 0 : i32
    return %c0_i32, %c0_i32_0, %c0_i32_1 : i32, i32, i32
  }
  func.func @transform_6(%arg0: i32) -> (i32, i32) {
    %c0_i32 = arith.constant 0 : i32
    %c0_i32_0 = arith.constant 0 : i32
    %c0_i32_1 = arith.constant 0 : i32
    return %c0_i32, %c0_i32_0 : i32, i32
  }
  func.func @transform_7(%arg0: i32) -> (i32, i32) {
    %c0_i32 = arith.constant 0 : i32
    %c0_i32_0 = arith.constant 0 : i32
    %c0_i32_1 = arith.constant 0 : i32
    return %c0_i32, %c0_i32_0 : i32, i32
  }
  func.func @transform_8(%arg0: i32) -> (i32, i32) {
    %c0_i32 = arith.constant 0 : i32
    %c0_i32_0 = arith.constant 0 : i32
    %c0_i32_1 = arith.constant 0 : i32
    return %c0_i32, %c0_i32_0 : i32, i32
  }
  func.func @transform_9(%arg0: i32) -> (i32, i32) {
    %c0_i32 = arith.constant 0 : i32
    %c0_i32_0 = arith.constant 0 : i32
    %c0_i32_1 = arith.constant 0 : i32
    return %c0_i32, %c0_i32_0 : i32, i32
  }
  func.func @transform_10(%arg0: i32) -> (i32, i32) {
    %c0_i32 = arith.constant 0 : i32
    %c0_i32_0 = arith.constant 0 : i32
    %c0_i32_1 = arith.constant 0 : i32
    return %c0_i32, %c0_i32_0 : i32, i32
  }
  func.func @transform_11(%arg0: i32) -> (i32, i32) {
    %c0_i32 = arith.constant 0 : i32
    %c0_i32_0 = arith.constant 0 : i32
    %c0_i32_1 = arith.constant 0 : i32
    return %c0_i32, %c0_i32_0 : i32, i32
  }
  func.func @transform_12(%arg0: i32) -> (i32, i32, i32) {
    %c0_i32 = arith.constant 0 : i32
    %c0_i32_0 = arith.constant 0 : i32
    %c0_i32_1 = arith.constant 0 : i32
    %c0_i32_2 = arith.constant 0 : i32
    return %c0_i32, %c0_i32_0, %c0_i32_1 : i32, i32, i32
  }
  func.func @transform_13(%arg0: i32) -> (i32, i32) {
    %c0_i32 = arith.constant 0 : i32
    %c0_i32_0 = arith.constant 0 : i32
    %c0_i32_1 = arith.constant 0 : i32
    return %c0_i32, %c0_i32_0 : i32, i32
  }
  func.func @transform_14(%arg0: i32) -> (i32, i32) {
    %c0_i32 = arith.constant 0 : i32
    %c0_i32_0 = arith.constant 0 : i32
    %c0_i32_1 = arith.constant 0 : i32
    return %c0_i32, %c0_i32_0 : i32, i32
  }
  func.func @transform_15(%arg0: i32) -> (i32, i32) {
    %c0_i32 = arith.constant 0 : i32
    %c0_i32_0 = arith.constant 0 : i32
    %c0_i32_1 = arith.constant 0 : i32
    return %c0_i32, %c0_i32_0 : i32, i32
  }
  func.func @transform_16(%arg0: i32) -> (i32, i32) {
    %c0_i32 = arith.constant 0 : i32
    %c0_i32_0 = arith.constant 0 : i32
    %c0_i32_1 = arith.constant 0 : i32
    return %c0_i32, %c0_i32_0 : i32, i32
  }
}

</mosaic_0001>

<llo_original>
// kernel: lewin_block_forward.1
$region0: #{lewin_block_forward.1}
  #allocation0 [shape = 'u32[]', space=smem, size = 0x4, offset = 0x4, fixed_abs, tag = 'smem constant byte address 0x4 - core index']
  #allocation1 [shape = 'u32[144,128]{1,0:T(1,128)}', space=vmem, size = 0x12000, scoped, tag = 'internal scratch']
  #allocation2 [shape = 'f32[160,128]{1,0:T(8,128)}', space=vmem, size = 0x14000, scoped, tag = 'scratch operand']
  %s0 = inlined_call_operand.vmem [shape: f32[128,32], index: 0, kind: input, shape index: {}]
  %s1 = inlined_call_operand.vmem [shape: f32[1,32], index: 1, kind: input, shape index: {}]
  %s2 = inlined_call_operand.vmem [shape: f32[1,32], index: 2, kind: input, shape index: {}]
  %s3 = inlined_call_operand.vmem [shape: bf16[32,96], index: 3, kind: input, shape index: {}]
  %s4 = inlined_call_operand.vmem [shape: f32[1,96], index: 4, kind: input, shape index: {}]
  %s5 = inlined_call_operand.hbm [shape: f32[4,128,128], index: 5, kind: input, shape index: {}]
  %s6 = inlined_call_operand.vmem [shape: bf16[32,32], index: 6, kind: input, shape index: {}]
  %s7 = inlined_call_operand.vmem [shape: f32[1,32], index: 7, kind: input, shape index: {}]
  %s8 = inlined_call_operand.vmem [shape: f32[1,32], index: 8, kind: input, shape index: {}]
  %s9 = inlined_call_operand.vmem [shape: f32[1,32], index: 9, kind: input, shape index: {}]
  %s10 = inlined_call_operand.vmem [shape: bf16[32,128], index: 10, kind: input, shape index: {}]
  %s11 = inlined_call_operand.vmem [shape: f32[1,128], index: 11, kind: input, shape index: {}]
  %s12 = inlined_call_operand.vmem [shape: f32[3,3,128], index: 12, kind: input, shape index: {}]
  %s13 = inlined_call_operand.vmem [shape: f32[1,128], index: 13, kind: input, shape index: {}]
  %s14 = inlined_call_operand.vmem [shape: bf16[128,32], index: 14, kind: input, shape index: {}]
  %s15 = inlined_call_operand.vmem [shape: f32[1,32], index: 15, kind: input, shape index: {}]
  %s16 = inlined_call_operand.vmem [shape: f32[128,32], index: 16, kind: output, shape index: {}]
  %s17 = sld [smem:[#allocation0]]
  $region78: #{lewin_block_forward.1} parent=0
    _
  %s19 = ssub.s32 1, %s17
  %s20 = scalar_select 0, %s19, %s17
  $region1: #{lewin_block_forward.1} parent=0
    #allocation3 [shape = 'u8[262144]{0}', space=vmem, size = 0x40000, scoped, tag = 'input window, operand 5, single buffered']
    #allocation4 [shape = 's32[1]{0}', space=sflag, size = 0x4, scoped, tag = 'scoped memory for lewin_block_forward.1']
    %21 = vsyncpa [#allocation4], 0
    // Predicated region
    $region2: #{lewin_block_forward.1} parent=1 // pred_check
      _
    $region3: #{lewin_block_forward.1} parent=1 // pred_check_branch
      %23 = sbr.rel (0) target = $region5
    $region4: #{lewin_block_forward.1} parent=1 // pred_region
      _
    $region5: #{lewin_block_forward.1} parent=1 // pred_fallthru
      _
    // Predicated region
    $region6: #{lewin_block_forward.1} parent=1 // pred_check
      _
    $region7: #{lewin_block_forward.1} parent=1 // pred_check_branch
      %25 = sbr.rel (0) target = $region9
    $region8: #{lewin_block_forward.1} parent=1 // pred_region
      _
    $region9: #{lewin_block_forward.1} parent=1 // pred_fallthru
      _
    // Predicated region
    $region10: #{lewin_block_forward.1} parent=1 // pred_check
      _
    $region11: #{lewin_block_forward.1} parent=1 // pred_check_branch
      %27 = sbr.rel (0) target = $region13
    $region12: #{lewin_block_forward.1} parent=1 // pred_region
      _
    $region13: #{lewin_block_forward.1} parent=1 // pred_fallthru
      _
    // Predicated region
    $region14: #{lewin_block_forward.1} parent=1 // pred_check
      _
    $region15: #{lewin_block_forward.1} parent=1 // pred_check_branch
      %29 = sbr.rel (0) target = $region17
    $region16: #{lewin_block_forward.1} parent=1 // pred_region
      _
    $region17: #{lewin_block_forward.1} parent=1 // pred_fallthru
      _
    // Predicated region
    $region18: #{lewin_block_forward.1} parent=1 // pred_check
      _
    $region19: #{lewin_block_forward.1} parent=1 // pred_check_branch
      %31 = sbr.rel (0) target = $region21
    $region20: #{lewin_block_forward.1} parent=1 // pred_region
      _
    $region21: #{lewin_block_forward.1} parent=1 // pred_fallthru
      _
    // Predicated region
    $region22: #{lewin_block_forward.1} parent=1 // pred_check
      _
    $region23: #{lewin_block_forward.1} parent=1 // pred_check_branch
      %33 = sbr.rel (0) target = $region25
    $region24: #{lewin_block_forward.1} parent=1 // pred_region
      %s35 = ssub.s32 8192, 8192
      %36 = vsyncadd [#allocation4], %s35
      %s37 = sshll.u32 [#allocation3], 4
      %s38 = int_to_ptr.vmem [resolvable:$true] %s37
      %43 = dma.hbm_to_vmem [thread:$0]  %s5, 8192, %s38, [#allocation4], 128, 128, 8
    $region25: #{lewin_block_forward.1} parent=1 // pred_fallthru
      _
    // Predicated region
    $region26: #{lewin_block_forward.1} parent=1 // pred_check
      _
    $region27: #{lewin_block_forward.1} parent=1 // pred_check_branch
      %45 = sbr.rel (0) target = $region29
    $region28: #{lewin_block_forward.1} parent=1 // pred_region
      _
    $region29: #{lewin_block_forward.1} parent=1 // pred_fallthru
      _
    // Predicated region
    $region30: #{lewin_block_forward.1} parent=1 // pred_check
      _
    $region31: #{lewin_block_forward.1} parent=1 // pred_check_branch
      %47 = sbr.rel (0) target = $region33
    $region32: #{lewin_block_forward.1} parent=1 // pred_region
      _
    $region33: #{lewin_block_forward.1} parent=1 // pred_fallthru
      _
    // Predicated region
    $region34: #{lewin_block_forward.1} parent=1 // pred_check
      _
    $region35: #{lewin_block_forward.1} parent=1 // pred_check_branch
      %49 = sbr.rel (0) target = $region37
    $region36: #{lewin_block_forward.1} parent=1 // pred_region
      _
    $region37: #{lewin_block_forward.1} parent=1 // pred_fallthru
      _
    // Predicated region
    $region38: #{lewin_block_forward.1} parent=1 // pred_check
      _
    $region39: #{lewin_block_forward.1} parent=1 // pred_check_branch
      %51 = sbr.rel (0) target = $region41
    $region40: #{lewin_block_forward.1} parent=1 // pred_region
      _
    $region41: #{lewin_block_forward.1} parent=1 // pred_fallthru
      _
    // Predicated region
    $region42: #{lewin_block_forward.1} parent=1 // pred_check
      _
    $region43: #{lewin_block_forward.1} parent=1 // pred_check_branch
      %53 = sbr.rel (0) target = $region45
    $region44: #{lewin_block_forward.1} parent=1 // pred_region
      _
    $region45: #{lewin_block_forward.1} parent=1 // pred_fallthru
      _
    // Predicated region
    $region46: #{lewin_block_forward.1} parent=1 // pred_check
      _
    $region47: #{lewin_block_forward.1} parent=1 // pred_check_branch
      %55 = sbr.rel (0) target = $region49
    $region48: #{lewin_block_forward.1} parent=1 // pred_region
      _
    $region49: #{lewin_block_forward.1} parent=1 // pred_fallthru
      _
    // Predicated region
    $region50: #{lewin_block_forward.1} parent=1 // pred_check
      _
    $region51: #{lewin_block_forward.1} parent=1 // pred_check_branch
      %57 = sbr.rel (0) target = $region53
    $region52: #{lewin_block_forward.1} parent=1 // pred_region
      _
    $region53: #{lewin_block_forward.1} parent=1 // pred_fallthru
      _
    // Predicated region
    $region54: #{lewin_block_forward.1} parent=1 // pred_check
      _
    $region55: #{lewin_block_forward.1} parent=1 // pred_check_branch
      %59 = sbr.rel (0) target = $region57
    $region56: #{lewin_block_forward.1} parent=1 // pred_region
      _
    $region57: #{lewin_block_forward.1} parent=1 // pred_fallthru
      _
    // Predicated region
    $region58: #{lewin_block_forward.1} parent=1 // pred_check
      _
    $region59: #{lewin_block_forward.1} parent=1 // pred_check_branch
      %61 = sbr.rel (0) target = $region61
    $region60: #{lewin_block_forward.1} parent=1 // pred_region
      _
    $region61: #{lewin_block_forward.1} parent=1 // pred_fallthru
      _
    // Predicated region
    $region62: #{lewin_block_forward.1} parent=1 // pred_check
      _
    $region63: #{lewin_block_forward.1} parent=1 // pred_check_branch
      %63 = sbr.rel (0) target = $region65
    $region64: #{lewin_block_forward.1} parent=1 // pred_region
      _
    $region65: #{lewin_block_forward.1} parent=1 // pred_fallthru
      _
    // Predicated region
    $region66: #{lewin_block_forward.1} parent=1 // pred_check
      _
    $region67: #{lewin_block_forward.1} parent=1 // pred_check_branch
      %65 = sbr.rel (0) target = $region69
    $region68: #{lewin_block_forward.1} parent=1 // pred_region
      %66 = dma.done [#allocation4], 8192
    $region69: #{lewin_block_forward.1} parent=1 // pred_fallthru
      _
    %v68 = vld [vmem:[%s0] sm:$0xff]
    %v69 = vld [vmem:[%s0 + $0x8] sm:$0xff]
    %v70 = vld [vmem:[%s0 + $0x10] sm:$0xff]
    %v71 = vld [vmem:[%s0 + $0x18] sm:$0xff]
    %v72 = vld [vmem:[%s0 + $0x20] sm:$0xff]
    %v73 = vld [vmem:[%s0 + $0x28] sm:$0xff]
    %v74 = vld [vmem:[%s0 + $0x30] sm:$0xff]
    %v75 = vld [vmem:[%s0 + $0x38] sm:$0xff]
    %v76 = vld [vmem:[%s0 + $0x40] sm:$0xff]
    %v77 = vld [vmem:[%s0 + $0x48] sm:$0xff]
    %v78 = vld [vmem:[%s0 + $0x50] sm:$0xff]
    %v79 = vld [vmem:[%s0 + $0x58] sm:$0xff]
    %v80 = vld [vmem:[%s0 + $0x60] sm:$0xff]
    %v81 = vld [vmem:[%s0 + $0x68] sm:$0xff]
    %v82 = vld [vmem:[%s0 + $0x70] sm:$0xff]
    %v83 = vld [vmem:[%s0 + $0x78] sm:$0xff]
    %v84 = vld [vmem:[%s1] sm:$0x1]
    %v85 = vld [vmem:[%s2] sm:$0x1]
    %vm86 = vcmask 261120
    %v87 = vsel %vm86, %v68, 0.0
    %88 = vadd.xlane.f32.xlu0 %v87
    %v89 = vpop.xlane.xlu0 %88
    %v90 = vsel %vm86, %v69, 0.0
    %91 = vadd.xlane.f32.xlu0 %v90
    %v92 = vpop.xlane.xlu0 %91
    %v93 = vsel %vm86, %v70, 0.0
    %94 = vadd.xlane.f32.xlu0 %v93
    %v95 = vpop.xlane.xlu0 %94
    %v96 = vsel %vm86, %v71, 0.0
    %97 = vadd.xlane.f32.xlu0 %v96
    %v98 = vpop.xlane.xlu0 %97
    %v99 = vsel %vm86, %v72, 0.0
    %100 = vadd.xlane.f32.xlu0 %v99
    %v101 = vpop.xlane.xlu0 %100
    %v102 = vsel %vm86, %v73, 0.0
    %103 = vadd.xlane.f32.xlu0 %v102
    %v104 = vpop.xlane.xlu0 %103
    %v105 = vsel %vm86, %v74, 0.0
    %106 = vadd.xlane.f32.xlu0 %v105
    %v107 = vpop.xlane.xlu0 %106
    %v108 = vsel %vm86, %v75, 0.0
    %109 = vadd.xlane.f32.xlu0 %v108
    %v110 = vpop.xlane.xlu0 %109
    %v111 = vsel %vm86, %v76, 0.0
    %112 = vadd.xlane.f32.xlu0 %v111
    %v113 = vpop.xlane.xlu0 %112
    %v114 = vsel %vm86, %v77, 0.0
    %115 = vadd.xlane.f32.xlu0 %v114
    %v116 = vpop.xlane.xlu0 %115
    %v117 = vsel %vm86, %v78, 0.0
    %118 = vadd.xlane.f32.xlu0 %v117
    %v119 = vpop.xlane.xlu0 %118
    %v120 = vsel %vm86, %v79, 0.0
    %121 = vadd.xlane.f32.xlu0 %v120
    %v122 = vpop.xlane.xlu0 %121
    %v123 = vsel %vm86, %v80, 0.0
    %124 = vadd.xlane.f32.xlu0 %v123
    %v125 = vpop.xlane.xlu0 %124
    %v126 = vsel %vm86, %v81, 0.0
    %127 = vadd.xlane.f32.xlu0 %v126
    %v128 = vpop.xlane.xlu0 %127
    %v129 = vsel %vm86, %v82, 0.0
    %130 = vadd.xlane.f32.xlu0 %v129
    %v131 = vpop.xlane.xlu0 %130
    %v132 = vsel %vm86, %v83, 0.0
    %133 = vadd.xlane.f32.xlu0 %v132
    %v134 = vpop.xlane.xlu0 %133
    %v135 = vrcp.pop 32.0
    %v136 = vmul.f32 %v89, %v135
    %v137 = vmul.f32 %v92, %v135
    %v138 = vmul.f32 %v95, %v135
    %v139 = vmul.f32 %v98, %v135
    %v140 = vmul.f32 %v101, %v135
    %v141 = vmul.f32 %v104, %v135
    %v142 = vmul.f32 %v107, %v135
    %v143 = vmul.f32 %v110, %v135
    %v144 = vmul.f32 %v113, %v135
    %v145 = vmul.f32 %v116, %v135
    %v146 = vmul.f32 %v119, %v135
    %v147 = vmul.f32 %v122, %v135
    %v148 = vmul.f32 %v125, %v135
    %v149 = vmul.f32 %v128, %v135
    %v150 = vmul.f32 %v131, %v135
    %v151 = vmul.f32 %v134, %v135
    %v152 = vsub.f32 %v68, %v136
    %v153 = vsub.f32 %v69, %v137
    %v154 = vsub.f32 %v70, %v138
    %v155 = vsub.f32 %v71, %v139
    %v156 = vsub.f32 %v72, %v140
    %v157 = vsub.f32 %v73, %v141
    %v158 = vsub.f32 %v74, %v142
    %v159 = vsub.f32 %v75, %v143
    %v160 = vsub.f32 %v76, %v144
    %v161 = vsub.f32 %v77, %v145
    %v162 = vsub.f32 %v78, %v146
    %v163 = vsub.f32 %v79, %v147
    %v164 = vsub.f32 %v80, %v148
    %v165 = vsub.f32 %v81, %v149
    %v166 = vsub.f32 %v82, %v150
    %v167 = vsub.f32 %v83, %v151
    %v168 = vmul.f32 %v152, %v152
    %v169 = vmul.f32 %v153, %v153
    %v170 = vmul.f32 %v154, %v154
    %v171 = vmul.f32 %v155, %v155
    %v172 = vmul.f32 %v156, %v156
    %v173 = vmul.f32 %v157, %v157
    %v174 = vmul.f32 %v158, %v158
    %v175 = vmul.f32 %v159, %v159
    %v176 = vmul.f32 %v160, %v160
    %v177 = vmul.f32 %v161, %v161
    %v178 = vmul.f32 %v162, %v162
    %v179 = vmul.f32 %v163, %v163
    %v180 = vmul.f32 %v164, %v164
    %v181 = vmul.f32 %v165, %v165
    %v182 = vmul.f32 %v166, %v166
    %v183 = vmul.f32 %v167, %v167
    %v184 = vsel %vm86, %v168, 0.0
    %185 = vadd.xlane.f32.xlu0 %v184
    %v186 = vpop.xlane.xlu0 %185
    %v187 = vsel %vm86, %v169, 0.0
    %188 = vadd.xlane.f32.xlu0 %v187
    %v189 = vpop.xlane.xlu0 %188
    %v190 = vsel %vm86, %v170, 0.0
    %191 = vadd.xlane.f32.xlu0 %v190
    %v192 = vpop.xlane.xlu0 %191
    %v193 = vsel %vm86, %v171, 0.0
    %194 = vadd.xlane.f32.xlu0 %v193
    %v195 = vpop.xlane.xlu0 %194
    %v196 = vsel %vm86, %v172, 0.0
    %197 = vadd.xlane.f32.xlu0 %v196
    %v198 = vpop.xlane.xlu0 %197
    %v199 = vsel %vm86, %v173, 0.0
    %200 = vadd.xlane.f32.xlu0 %v199
    %v201 = vpop.xlane.xlu0 %200
    %v202 = vsel %vm86, %v174, 0.0
    %203 = vadd.xlane.f32.xlu0 %v202
    %v204 = vpop.xlane.xlu0 %203
    %v205 = vsel %vm86, %v175, 0.0
    %206 = vadd.xlane.f32.xlu0 %v205
    %v207 = vpop.xlane.xlu0 %206
    %v208 = vsel %vm86, %v176, 0.0
    %209 = vadd.xlane.f32.xlu0 %v208
    %v210 = vpop.xlane.xlu0 %209
    %v211 = vsel %vm86, %v177, 0.0
    %212 = vadd.xlane.f32.xlu0 %v211
    %v213 = vpop.xlane.xlu0 %212
    %v214 = vsel %vm86, %v178, 0.0
    %215 = vadd.xlane.f32.xlu0 %v214
    %v216 = vpop.xlane.xlu0 %215
    %v217 = vsel %vm86, %v179, 0.0
    %218 = vadd.xlane.f32.xlu0 %v217
    %v219 = vpop.xlane.xlu0 %218
    %v220 = vsel %vm86, %v180, 0.0
    %221 = vadd.xlane.f32.xlu0 %v220
    %v222 = vpop.xlane.xlu0 %221
    %v223 = vsel %vm86, %v181, 0.0
    %224 = vadd.xlane.f32.xlu0 %v223
    %v225 = vpop.xlane.xlu0 %224
    %v226 = vsel %vm86, %v182, 0.0
    %227 = vadd.xlane.f32.xlu0 %v226
    %v228 = vpop.xlane.xlu0 %227
    %v229 = vsel %vm86, %v183, 0.0
    %230 = vadd.xlane.f32.xlu0 %v229
    %v231 = vpop.xlane.xlu0 %230
    %v232 = vmul.f32 %v186, %v135
    %v233 = vmul.f32 %v189, %v135
    %v234 = vmul.f32 %v192, %v135
    %v235 = vmul.f32 %v195, %v135
    %v236 = vmul.f32 %v198, %v135
    %v237 = vmul.f32 %v201, %v135
    %v238 = vmul.f32 %v204, %v135
    %v239 = vmul.f32 %v207, %v135
    %v240 = vmul.f32 %v210, %v135
    %v241 = vmul.f32 %v213, %v135
    %v242 = vmul.f32 %v216, %v135
    %v243 = vmul.f32 %v219, %v135
    %v244 = vmul.f32 %v222, %v135
    %v245 = vmul.f32 %v225, %v135
    %v246 = vmul.f32 %v228, %v135
    %v247 = vmul.f32 %v231, %v135
    %v248 = vadd.f32 %v232, 1e-05
    %v249 = vadd.f32 %v233, 1e-05
    %v250 = vadd.f32 %v234, 1e-05
    %v251 = vadd.f32 %v235, 1e-05
    %v252 = vadd.f32 %v236, 1e-05
    %v253 = vadd.f32 %v237, 1e-05
    %v254 = vadd.f32 %v238, 1e-05
    %v255 = vadd.f32 %v239, 1e-05
    %v256 = vadd.f32 %v240, 1e-05
    %v257 = vadd.f32 %v241, 1e-05
    %v258 = vadd.f32 %v242, 1e-05
    %v259 = vadd.f32 %v243, 1e-05
    %v260 = vadd.f32 %v244, 1e-05
    %v261 = vadd.f32 %v245, 1e-05
    %v262 = vadd.f32 %v246, 1e-05
    %v263 = vadd.f32 %v247, 1e-05
    %v264 = vrsqrt.pop %v248
    %v265 = vrsqrt.pop %v249
    %v266 = vrsqrt.pop %v250
    %v267 = vrsqrt.pop %v251
    %v268 = vrsqrt.pop %v252
    %v269 = vrsqrt.pop %v253
    %v270 = vrsqrt.pop %v254
    %v271 = vrsqrt.pop %v255
    %v272 = vrsqrt.pop %v256
    %v273 = vrsqrt.pop %v257
    %v274 = vrsqrt.pop %v258
    %v275 = vrsqrt.pop %v259
    %v276 = vrsqrt.pop %v260
    %v277 = vrsqrt.pop %v261
    %v278 = vrsqrt.pop %v262
    %v279 = vrsqrt.pop %v263
    %v280 = vmul.f32 %v152, %v264
    %v281 = vmul.f32 %v153, %v265
    %v282 = vmul.f32 %v154, %v266
    %v283 = vmul.f32 %v155, %v267
    %v284 = vmul.f32 %v156, %v268
    %v285 = vmul.f32 %v157, %v269
    %v286 = vmul.f32 %v158, %v270
    %v287 = vmul.f32 %v159, %v271
    %v288 = vmul.f32 %v160, %v272
    %v289 = vmul.f32 %v161, %v273
    %v290 = vmul.f32 %v162, %v274
    %v291 = vmul.f32 %v163, %v275
    %v292 = vmul.f32 %v164, %v276
    %v293 = vmul.f32 %v165, %v277
    %v294 = vmul.f32 %v166, %v278
    %v295 = vmul.f32 %v167, %v279
    %v297 = vlaneseq
    %v298 = vshrl.u32 %v297, 7
    %v299 = vsub.s32 0, %v298
    %v300 = vrot.slane %v84, %v299
    %v302 = vmul.f32 %v280, %v300
    %v303 = vmul.f32 %v281, %v300
    %v304 = vmul.f32 %v282, %v300
    %v305 = vmul.f32 %v283, %v300
    %v306 = vmul.f32 %v284, %v300
    %v307 = vmul.f32 %v285, %v300
    %v308 = vmul.f32 %v286, %v300
    %v309 = vmul.f32 %v287, %v300
    %v310 = vmul.f32 %v288, %v300
    %v311 = vmul.f32 %v289, %v300
    %v312 = vmul.f32 %v290, %v300
    %v313 = vmul.f32 %v291, %v300
    %v314 = vmul.f32 %v292, %v300
    %v315 = vmul.f32 %v293, %v300
    %v316 = vmul.f32 %v294, %v300
    %v317 = vmul.f32 %v295, %v300
    %v319 = vlaneseq
    %v320 = vshrl.u32 %v319, 7
    %v321 = vsub.s32 0, %v320
    %v322 = vrot.slane %v85, %v321
    %v324 = vadd.f32 %v302, %v322
    %v325 = vadd.f32 %v303, %v322
    %v326 = vadd.f32 %v304, %v322
    %v327 = vadd.f32 %v305, %v322
    %v328 = vadd.f32 %v306, %v322
    %v329 = vadd.f32 %v307, %v322
    %v330 = vadd.f32 %v308, %v322
    %v331 = vadd.f32 %v309, %v322
    %v332 = vadd.f32 %v310, %v322
    %v333 = vadd.f32 %v311, %v322
    %v334 = vadd.f32 %v312, %v322
    %v335 = vadd.f32 %v313, %v322
    %v336 = vadd.f32 %v314, %v322
    %v337 = vadd.f32 %v315, %v322
    %v338 = vadd.f32 %v316, %v322
    %v339 = vadd.f32 %v317, %v322
    %v340 = vpack.c.bf16 %v325, %v324
    %v341 = vpack.c.bf16 %v327, %v326
    %v342 = vpack.c.bf16 %v329, %v328
    %v343 = vpack.c.bf16 %v331, %v330
    %v344 = vpack.c.bf16 %v333, %v332
    %v345 = vpack.c.bf16 %v335, %v334
    %v346 = vpack.c.bf16 %v337, %v336
    %v347 = vpack.c.bf16 %v339, %v338
    %v348 = vld [vmem:[%s3] sm:$0xf]
    %v349 = vld [vmem:[%s3 + $0x4] sm:$0xf]
    %v350 = vld [vmem:[%s3 + $0x8] sm:$0xf]
    %v351 = vld [vmem:[%s3 + $0xc] sm:$0xf]
    %v352 = vld [vmem:[%s4] sm:$0x1]
    %v354 = vlaneseq
    %v355 = vshrl.u32 %v354, 7
    %v356 = vsub.s32 0, %v355
    %v357 = vrot.slane %v352, %v356
    %v363 = vunpack.c.l.b16 %v348
    %v364 = vunpack.c.l.b16 %v349
    %v365 = vunpack.c.l.b16 %v350
    %v366 = vunpack.c.l.b16 %v351
    %v367 = vpack.c.b16 %v364, %v363
    %v368 = vpack.c.b16 %v366, %v365
    %v372 = vsel %vm86, %v340, 0
    %v375 = vsel %vm86, %v341, 0
    %v378 = vsel %vm86, %v342, 0
    %v381 = vsel %vm86, %v343, 0
    %v384 = vsel %vm86, %v344, 0
    %v387 = vsel %vm86, %v345, 0
    %v390 = vsel %vm86, %v346, 0
    %v393 = vsel %vm86, %v347, 0
    %395 = vmatprep.subr.bf16.mxu0 0
    %396 = vmatpush1.bf16.msra.mxu0 %v367
    %397 = vmatprep.subr.bf16.mxu0 0
    %398 = vmatpush1.bf16.msra.mxu0 %v368
    %399 = vmatprep.subr.bf16.mxu0 0
    %400 = vmatpush1.bf16.msra.mxu0 0
    %401 = vmatprep.subr.bf16.mxu0 0
    %402 = vmatpush1.bf16.msra.mxu0 0
    %403 = vmatprep.subr.bf16.mxu0 0
    %404 = vmatpush1.bf16.msra.mxu0 0
    %405 = vmatprep.subr.bf16.mxu0 0
    %406 = vmatpush1.bf16.msra.mxu0 0
    %407 = vmatprep.subr.bf16.mxu0 0
    %408 = vmatpush1.bf16.msra.mxu0 0
    %409 = vmatprep.subr.bf16.mxu0 0
    %410 = vmatpush1.bf16.msra.mxu0 0
    %411 = vmatprep.subr.bf16.mxu0 0
    %412 = vmatpush1.bf16.msra.mxu0 0
    %413 = vmatprep.subr.bf16.mxu0 0
    %414 = vmatpush1.bf16.msra.mxu0 0
    %415 = vmatprep.subr.bf16.mxu0 0
    %416 = vmatpush1.bf16.msra.mxu0 0
    %417 = vmatprep.subr.bf16.mxu0 0
    %418 = vmatpush1.bf16.msra.mxu0 0
    %419 = vmatprep.subr.bf16.mxu0 0
    %420 = vmatpush1.bf16.msra.mxu0 0
    %421 = vmatprep.subr.bf16.mxu0 0
    %422 = vmatpush1.bf16.msra.mxu0 0
    %423 = vmatprep.subr.bf16.mxu0 0
    %424 = vmatpush1.bf16.msra.mxu0 0
    %425 = vmatprep.subr.bf16.mxu0 0
    %426 = vmatpush1.bf16.msra.mxu0 0
    %427 = vmatprep.mubr.bf16.mxu0 0
    %428 = vmatmul.mubr.bf16.gmra.mrb[0].mxu0 %v372
    %v429 = vpop.f32.mrb[0].mxu0
    %v430 = vadd.f32 %v357, %v429
    %v431 = vpop.f32.mrb[0].mxu0
    %v432 = vpop.f32.mrb[0].mxu0
    %v433 = vadd.f32 %v357, %v432
    %v434 = vpop.f32.mrb[0].mxu0
    %435 = vmatprep.mubr.bf16.mxu0 0
    %436 = vmatmul.mubr.bf16.gmra.mrb[0].mxu0 %v375
    %v437 = vpop.f32.mrb[0].mxu0
    %v438 = vadd.f32 %v357, %v437
    %v439 = vpop.f32.mrb[0].mxu0
    %v440 = vpop.f32.mrb[0].mxu0
    %v441 = vadd.f32 %v357, %v440
    %v442 = vpop.f32.mrb[0].mxu0
    %443 = vmatprep.mubr.bf16.mxu0 0
    %444 = vmatmul.mubr.bf16.gmra.mrb[0].mxu0 %v378
    %v445 = vpop.f32.mrb[0].mxu0
    %v446 = vadd.f32 %v357, %v445
    %v447 = vpop.f32.mrb[0].mxu0
    %v448 = vpop.f32.mrb[0].mxu0
    %v449 = vadd.f32 %v357, %v448
    %v450 = vpop.f32.mrb[0].mxu0
    %451 = vmatprep.mubr.bf16.mxu0 0
    %452 = vmatmul.mubr.bf16.gmra.mrb[0].mxu0 %v381
    %v453 = vpop.f32.mrb[0].mxu0
    %v454 = vadd.f32 %v357, %v453
    %v455 = vpop.f32.mrb[0].mxu0
    %v456 = vpop.f32.mrb[0].mxu0
    %v457 = vadd.f32 %v357, %v456
    %v458 = vpop.f32.mrb[0].mxu0
    %459 = vmatprep.mubr.bf16.mxu0 0
    %460 = vmatmul.mubr.bf16.gmra.mrb[0].mxu0 %v384
    %v461 = vpop.f32.mrb[0].mxu0
    %v462 = vadd.f32 %v357, %v461
    %v463 = vpop.f32.mrb[0].mxu0
    %v464 = vpop.f32.mrb[0].mxu0
    %v465 = vadd.f32 %v357, %v464
    %v466 = vpop.f32.mrb[0].mxu0
    %467 = vmatprep.mubr.bf16.mxu0 0
    %468 = vmatmul.mubr.bf16.gmra.mrb[0].mxu0 %v387
    %v469 = vpop.f32.mrb[0].mxu0
    %v470 = vadd.f32 %v357, %v469
    %v471 = vpop.f32.mrb[0].mxu0
    %v472 = vpop.f32.mrb[0].mxu0
    %v473 = vadd.f32 %v357, %v472
    %v474 = vpop.f32.mrb[0].mxu0
    %475 = vmatprep.mubr.bf16.mxu0 0
    %476 = vmatmul.mubr.bf16.gmra.mrb[0].mxu0 %v390
    %v477 = vpop.f32.mrb[0].mxu0
    %v478 = vadd.f32 %v357, %v477
    %v479 = vpop.f32.mrb[0].mxu0
    %v480 = vpop.f32.mrb[0].mxu0
    %v481 = vadd.f32 %v357, %v480
    %v482 = vpop.f32.mrb[0].mxu0
    %483 = vmatprep.mubr.bf16.mxu0 0
    %484 = vmatmul.mubr.bf16.gmra.mrb[0].mxu0 %v393
    %v485 = vpop.f32.mrb[0].mxu0
    %v486 = vadd.f32 %v357, %v485
    %v487 = vpop.f32.mrb[0].mxu0
    %v488 = vpop.f32.mrb[0].mxu0
    %v489 = vadd.f32 %v357, %v488
    %v490 = vpop.f32.mrb[0].mxu0
    %491 = vdwg.mxu0
    %v492 = vpack.c.bf16 %v433, %v430
    %v493 = vpack.c.bf16 %v441, %v438
    %v494 = vpack.c.bf16 %v449, %v446
    %v495 = vpack.c.bf16 %v457, %v454
    %v496 = vpack.c.bf16 %v465, %v462
    %v497 = vpack.c.bf16 %v473, %v470
    %v498 = vpack.c.bf16 %v481, %v478
    %v499 = vpack.c.bf16 %v489, %v486
    %v500 = vld [vmem:[#allocation3] sm:$0xff]
    %v501 = vld [vmem:[#allocation3 + $0x8] sm:$0xff]
    %v502 = vld [vmem:[#allocation3 + $0x10] sm:$0xff]
    %v503 = vld [vmem:[#allocation3 + $0x18] sm:$0xff]
    %v504 = vld [vmem:[#allocation3 + $0x20] sm:$0xff]
    %v505 = vld [vmem:[#allocation3 + $0x28] sm:$0xff]
    %v506 = vld [vmem:[#allocation3 + $0x30] sm:$0xff]
    %v507 = vld [vmem:[#allocation3 + $0x38] sm:$0xff]
    %v508 = vld [vmem:[#allocation3 + $0x40] sm:$0xff]
    %v509 = vld [vmem:[#allocation3 + $0x48] sm:$0xff]
    %v510 = vld [vmem:[#allocation3 + $0x50] sm:$0xff]
    %v511 = vld [vmem:[#allocation3 + $0x58] sm:$0xff]
    %v512 = vld [vmem:[#allocation3 + $0x60] sm:$0xff]
    %v513 = vld [vmem:[#allocation3 + $0x68] sm:$0xff]
    %v514 = vld [vmem:[#allocation3 + $0x70] sm:$0xff]
    %v515 = vld [vmem:[#allocation3 + $0x78] sm:$0xff]
    %524 = vrot.lane.b32.xlu0 %v492, 96
    %v525 = vpop.permute.xlu0 %524
    %526 = vrot.lane.b32.xlu0 %v493, 96
    %v527 = vpop.permute.xlu0 %526
    %528 = vrot.lane.b32.xlu0 %v494, 96
    %v529 = vpop.permute.xlu0 %528
    %530 = vrot.lane.b32.xlu0 %v495, 96
    %v531 = vpop.permute.xlu0 %530
    %532 = vrot.lane.b32.xlu0 %v496, 96
    %v533 = vpop.permute.xlu0 %532
    %534 = vrot.lane.b32.xlu0 %v497, 96
    %v535 = vpop.permute.xlu0 %534
    %536 = vrot.lane.b32.xlu0 %v498, 96
    %v537 = vpop.permute.xlu0 %536
    %538 = vrot.lane.b32.xlu0 %v499, 96
    %v539 = vpop.permute.xlu0 %538
    %vm540 = vcmask 64512
    %v542 = vsel %vm540, %v492, 0
    %v545 = vsel %vm540, %v493, 0
    %v548 = vsel %vm540, %v494, 0
    %v551 = vsel %vm540, %v495, 0
    %v554 = vsel %vm540, %v496, 0
    %v557 = vsel %vm540, %v497, 0
    %v560 = vsel %vm540, %v498, 0
    %v563 = vsel %vm540, %v499, 0
    %v566 = vsel %vm540, %v525, 0
    %v569 = vsel %vm540, %v527, 0
    %v572 = vsel %vm540, %v529, 0
    %v575 = vsel %vm540, %v531, 0
    %v578 = vsel %vm540, %v533, 0
    %v581 = vsel %vm540, %v535, 0
    %v584 = vsel %vm540, %v537, 0
    %v587 = vsel %vm540, %v539, 0
    %589 = vmatprep.subr.bf16.mxu0 0
    %590 = vmatpush1.bf16.xpose.msra.mxu0 %v566
    %591 = vmatprep.subr.bf16.mxu0 0
    %592 = vmatpush1.bf16.xpose.msra.mxu0 %v569
    %593 = vmatprep.subr.bf16.mxu0 0
    %594 = vmatpush1.bf16.xpose.msra.mxu0 %v572
    %595 = vmatprep.subr.bf16.mxu0 0
    %596 = vmatpush1.bf16.xpose.msra.mxu0 %v575
    %597 = vmatprep.subr.bf16.mxu0 0
    %598 = vmatpush1.bf16.xpose.msra.mxu0 %v578
    %599 = vmatprep.subr.bf16.mxu0 0
    %600 = vmatpush1.bf16.xpose.msra.mxu0 %v581
    %601 = vmatprep.subr.bf16.mxu0 0
    %602 = vmatpush1.bf16.xpose.msra.mxu0 %v584
    %603 = vmatprep.subr.bf16.mxu0 0
    %604 = vmatpush1.bf16.xpose.msra.mxu0 %v587
    %605 = vmatprep.subr.bf16.mxu0 0
    %606 = vmatpush1.bf16.xpose.msra.mxu0 0
    %607 = vmatprep.subr.bf16.mxu0 0
    %608 = vmatpush1.bf16.xpose.msra.mxu0 0
    %609 = vmatprep.subr.bf16.mxu0 0
    %610 = vmatpush1.bf16.xpose.msra.mxu0 0
    %611 = vmatprep.subr.bf16.mxu0 0
    %612 = vmatpush1.bf16.xpose.msra.mxu0 0
    %613 = vmatprep.subr.bf16.mxu0 0
    %614 = vmatpush1.bf16.xpose.msra.mxu0 0
    %615 = vmatprep.subr.bf16.mxu0 0
    %616 = vmatpush1.bf16.xpose.msra.mxu0 0
    %617 = vmatprep.subr.bf16.mxu0 0
    %618 = vmatpush1.bf16.xpose.msra.mxu0 0
    %619 = vmatprep.subr.bf16.mxu0 0
    %620 = vmatpush1.bf16.xpose.msra.mxu0 0
    %621 = vmatprep.mubr.bf16.mxu0 0
    %622 = vmatmul.mubr.bf16.gmra.mrb[0].mxu0 %v542
    %v623 = vpop.f32.mrb[0].mxu0
    %v624 = vadd.f32 %v500, %v623
    %v625 = vpop.f32.mrb[0].mxu0
    %v626 = vpop.f32.mrb[0].mxu0
    %v627 = vadd.f32 %v501, %v626
    %v628 = vpop.f32.mrb[0].mxu0
    %629 = vmatprep.mubr.bf16.mxu0 0
    %630 = vmatmul.mubr.bf16.gmra.mrb[0].mxu0 %v545
    %v631 = vpop.f32.mrb[0].mxu0
    %v632 = vadd.f32 %v502, %v631
    %v633 = vpop.f32.mrb[0].mxu0
    %v634 = vpop.f32.mrb[0].mxu0
    %v635 = vadd.f32 %v503, %v634
    %v636 = vpop.f32.mrb[0].mxu0
    %637 = vmatprep.mubr.bf16.mxu0 0
    %638 = vmatmul.mubr.bf16.gmra.mrb[0].mxu0 %v548
    %v639 = vpop.f32.mrb[0].mxu0
    %v640 = vadd.f32 %v504, %v639
    %v641 = vpop.f32.mrb[0].mxu0
    %v642 = vpop.f32.mrb[0].mxu0
    %v643 = vadd.f32 %v505, %v642
    %v644 = vpop.f32.mrb[0].mxu0
    %645 = vmatprep.mubr.bf16.mxu0 0
    %646 = vmatmul.mubr.bf16.gmra.mrb[0].mxu0 %v551
    %v647 = vpop.f32.mrb[0].mxu0
    %v648 = vadd.f32 %v506, %v647
    %v649 = vpop.f32.mrb[0].mxu0
    %v650 = vpop.f32.mrb[0].mxu0
    %v651 = vadd.f32 %v507, %v650
    %v652 = vpop.f32.mrb[0].mxu0
    %653 = vmatprep.mubr.bf16.mxu0 0
    %654 = vmatmul.mubr.bf16.gmra.mrb[0].mxu0 %v554
    %v655 = vpop.f32.mrb[0].mxu0
    %v656 = vadd.f32 %v508, %v655
    %v657 = vpop.f32.mrb[0].mxu0
    %v658 = vpop.f32.mrb[0].mxu0
    %v659 = vadd.f32 %v509, %v658
    %v660 = vpop.f32.mrb[0].mxu0
    %661 = vmatprep.mubr.bf16.mxu0 0
    %662 = vmatmul.mubr.bf16.gmra.mrb[0].mxu0 %v557
    %v663 = vpop.f32.mrb[0].mxu0
    %v664 = vadd.f32 %v510, %v663
    %v665 = vpop.f32.mrb[0].mxu0
    %v666 = vpop.f32.mrb[0].mxu0
    %v667 = vadd.f32 %v511, %v666
    %v668 = vpop.f32.mrb[0].mxu0
    %669 = vmatprep.mubr.bf16.mxu0 0
    %670 = vmatmul.mubr.bf16.gmra.mrb[0].mxu0 %v560
    %v671 = vpop.f32.mrb[0].mxu0
    %v672 = vadd.f32 %v512, %v671
    %v673 = vpop.f32.mrb[0].mxu0
    %v674 = vpop.f32.mrb[0].mxu0
    %v675 = vadd.f32 %v513, %v674
    %v676 = vpop.f32.mrb[0].mxu0
    %677 = vmatprep.mubr.bf16.mxu0 0
    %678 = vmatmul.mubr.bf16.gmra.mrb[0].mxu0 %v563
    %v679 = vpop.f32.mrb[0].mxu0
    %v680 = vadd.f32 %v514, %v679
    %v681 = vpop.f32.mrb[0].mxu0
    %v682 = vpop.f32.mrb[0].mxu0
    %v683 = vadd.f32 %v515, %v682
    %v684 = vpop.f32.mrb[0].mxu0
    %685 = vdwg.mxu0
    %686 = vmax.xlane.f32.xlu0 %v624
    %v687 = vpop.xlane.xlu0 %686
    %688 = vmax.xlane.f32.xlu0 %v627
    %v689 = vpop.xlane.xlu0 %688
    %690 = vmax.xlane.f32.xlu0 %v632
    %v691 = vpop.xlane.xlu0 %690
    %692 = vmax.xlane.f32.xlu0 %v635
    %v693 = vpop.xlane.xlu0 %692
    %694 = vmax.xlane.f32.xlu0 %v640
    %v695 = vpop.xlane.xlu0 %694
    %696 = vmax.xlane.f32.xlu0 %v643
    %v697 = vpop.xlane.xlu0 %696
    %698 = vmax.xlane.f32.xlu0 %v648
    %v699 = vpop.xlane.xlu0 %698
    %700 = vmax.xlane.f32.xlu0 %v651
    %v701 = vpop.xlane.xlu0 %700
    %702 = vmax.xlane.f32.xlu0 %v656
    %v703 = vpop.xlane.xlu0 %702
    %704 = vmax.xlane.f32.xlu0 %v659
    %v705 = vpop.xlane.xlu0 %704
    %706 = vmax.xlane.f32.xlu0 %v664
    %v707 = vpop.xlane.xlu0 %706
    %708 = vmax.xlane.f32.xlu0 %v667
    %v709 = vpop.xlane.xlu0 %708
    %710 = vmax.xlane.f32.xlu0 %v672
    %v711 = vpop.xlane.xlu0 %710
    %712 = vmax.xlane.f32.xlu0 %v675
    %v713 = vpop.xlane.xlu0 %712
    %714 = vmax.xlane.f32.xlu0 %v680
    %v715 = vpop.xlane.xlu0 %714
    %716 = vmax.xlane.f32.xlu0 %v683
    %v717 = vpop.xlane.xlu0 %716
    %v718 = vsub.f32 %v624, %v687
    %v719 = vsub.f32 %v627, %v689
    %v720 = vsub.f32 %v632, %v691
    %v721 = vsub.f32 %v635, %v693
    %v722 = vsub.f32 %v640, %v695
    %v723 = vsub.f32 %v643, %v697
    %v724 = vsub.f32 %v648, %v699
    %v725 = vsub.f32 %v651, %v701
    %v726 = vsub.f32 %v656, %v703
    %v727 = vsub.f32 %v659, %v705
    %v728 = vsub.f32 %v664, %v707
    %v729 = vsub.f32 %v667, %v709
    %v730 = vsub.f32 %v672, %v711
    %v731 = vsub.f32 %v675, %v713
    %v732 = vsub.f32 %v680, %v715
    %v733 = vsub.f32 %v683, %v717
    %v734 = vmul.f32 %v718, 1.442695
    %v735 = vpow.pop %v734
    %v736 = vmul.f32 %v719, 1.442695
    %v737 = vpow.pop %v736
    %v738 = vmul.f32 %v720, 1.442695
    %v739 = vpow.pop %v738
    %v740 = vmul.f32 %v721, 1.442695
    %v741 = vpow.pop %v740
    %v742 = vmul.f32 %v722, 1.442695
    %v743 = vpow.pop %v742
    %v744 = vmul.f32 %v723, 1.442695
    %v745 = vpow.pop %v744
    %v746 = vmul.f32 %v724, 1.442695
    %v747 = vpow.pop %v746
    %v748 = vmul.f32 %v725, 1.442695
    %v749 = vpow.pop %v748
    %v750 = vmul.f32 %v726, 1.442695
    %v751 = vpow.pop %v750
    %v752 = vmul.f32 %v727, 1.442695
    %v753 = vpow.pop %v752
    %v754 = vmul.f32 %v728, 1.442695
    %v755 = vpow.pop %v754
    %v756 = vmul.f32 %v729, 1.442695
    %v757 = vpow.pop %v756
    %v758 = vmul.f32 %v730, 1.442695
    %v759 = vpow.pop %v758
    %v760 = vmul.f32 %v731, 1.442695
    %v761 = vpow.pop %v760
    %v762 = vmul.f32 %v732, 1.442695
    %v763 = vpow.pop %v762
    %v764 = vmul.f32 %v733, 1.442695
    %v765 = vpow.pop %v764
    %766 = vadd.xlane.f32.xlu0 %v735
    %v767 = vpop.xlane.xlu0 %766
    %768 = vadd.xlane.f32.xlu0 %v737
    %v769 = vpop.xlane.xlu0 %768
    %770 = vadd.xlane.f32.xlu0 %v739
    %v771 = vpop.xlane.xlu0 %770
    %772 = vadd.xlane.f32.xlu0 %v741
    %v773 = vpop.xlane.xlu0 %772
    %774 = vadd.xlane.f32.xlu0 %v743
    %v775 = vpop.xlane.xlu0 %774
    %776 = vadd.xlane.f32.xlu0 %v745
    %v777 = vpop.xlane.xlu0 %776
    %778 = vadd.xlane.f32.xlu0 %v747
    %v779 = vpop.xlane.xlu0 %778
    %780 = vadd.xlane.f32.xlu0 %v749
    %v781 = vpop.xlane.xlu0 %780
    %782 = vadd.xlane.f32.xlu0 %v751
    %v783 = vpop.xlane.xlu0 %782
    %784 = vadd.xlane.f32.xlu0 %v753
    %v785 = vpop.xlane.xlu0 %784
    %786 = vadd.xlane.f32.xlu0 %v755
    %v787 = vpop.xlane.xlu0 %786
    %788 = vadd.xlane.f32.xlu0 %v757
    %v789 = vpop.xlane.xlu0 %788
    %790 = vadd.xlane.f32.xlu0 %v759
    %v791 = vpop.xlane.xlu0 %790
    %792 = vadd.xlane.f32.xlu0 %v761
    %v793 = vpop.xlane.xlu0 %792
    %794 = vadd.xlane.f32.xlu0 %v763
    %v795 = vpop.xlane.xlu0 %794
    %796 = vadd.xlane.f32.xlu0 %v765
    %v797 = vpop.xlane.xlu0 %796
    %v798 = vrcp.pop %v767
    %v799 = vrcp.pop %v769
    %v800 = vrcp.pop %v771
    %v801 = vrcp.pop %v773
    %v802 = vrcp.pop %v775
    %v803 = vrcp.pop %v777
    %v804 = vrcp.pop %v779
    %v805 = vrcp.pop %v781
    %v806 = vrcp.pop %v783
    %v807 = vrcp.pop %v785
    %v808 = vrcp.pop %v787
    %v809 = vrcp.pop %v789
    %v810 = vrcp.pop %v791
    %v811 = vrcp.pop %v793
    %v812 = vrcp.pop %v795
    %v813 = vrcp.pop %v797
    %v814 = vmul.f32 %v735, %v798
    %v815 = vmul.f32 %v737, %v799
    %v816 = vmul.f32 %v739, %v800
    %v817 = vmul.f32 %v741, %v801
    %v818 = vmul.f32 %v743, %v802
    %v819 = vmul.f32 %v745, %v803
    %v820 = vmul.f32 %v747, %v804
    %v821 = vmul.f32 %v749, %v805
    %v822 = vmul.f32 %v751, %v806
    %v823 = vmul.f32 %v753, %v807
    %v824 = vmul.f32 %v755, %v808
    %v825 = vmul.f32 %v757, %v809
    %v826 = vmul.f32 %v759, %v810
    %v827 = vmul.f32 %v761, %v811
    %v828 = vmul.f32 %v763, %v812
    %v829 = vmul.f32 %v765, %v813
    %v830 = vpack.c.bf16 %v815, %v814
    %v831 = vpack.c.bf16 %v817, %v816
    %v832 = vpack.c.bf16 %v819, %v818
    %v833 = vpack.c.bf16 %v821, %v820
    %v834 = vpack.c.bf16 %v823, %v822
    %v835 = vpack.c.bf16 %v825, %v824
    %v836 = vpack.c.bf16 %v827, %v826
    %v837 = vpack.c.bf16 %v829, %v828
    %838 = vrot.lane.b32.xlu0 %v492, 64
    %v839 = vpop.permute.xlu0 %838
    %840 = vrot.lane.b32.xlu0 %v493, 64
    %v841 = vpop.permute.xlu0 %840
    %842 = vrot.lane.b32.xlu0 %v494, 64
    %v843 = vpop.permute.xlu0 %842
    %844 = vrot.lane.b32.xlu0 %v495, 64
    %v845 = vpop.permute.xlu0 %844
    %846 = vrot.lane.b32.xlu0 %v496, 64
    %v847 = vpop.permute.xlu0 %846
    %848 = vrot.lane.b32.xlu0 %v497, 64
    %v849 = vpop.permute.xlu0 %848
    %850 = vrot.lane.b32.xlu0 %v498, 64
    %v851 = vpop.permute.xlu0 %850
    %852 = vrot.lane.b32.xlu0 %v499, 64
    %v853 = vpop.permute.xlu0 %852
    %862 = vmatprep.subr.bf16.mxu0 0
    %863 = vmatpush1.bf16.msra.mxu0 %v839
    %864 = vmatprep.subr.bf16.mxu0 0
    %865 = vmatpush1.bf16.msra.mxu0 %v841
    %866 = vmatprep.subr.bf16.mxu0 0
    %867 = vmatpush1.bf16.msra.mxu0 %v843
    %868 = vmatprep.subr.bf16.mxu0 0
    %869 = vmatpush1.bf16.msra.mxu0 %v845
    %870 = vmatprep.subr.bf16.mxu0 0
    %871 = vmatpush1.bf16.msra.mxu0 %v847
    %872 = vmatprep.subr.bf16.mxu0 0
    %873 = vmatpush1.bf16.msra.mxu0 %v849
    %874 = vmatprep.subr.bf16.mxu0 0
    %875 = vmatpush1.bf16.msra.mxu0 %v851
    %876 = vmatprep.subr.bf16.mxu0 0
    %877 = vmatpush1.bf16.msra.mxu0 %v853
    %878 = vmatprep.subr.bf16.mxu0 0
    %879 = vmatpush1.bf16.msra.mxu0 0
    %880 = vmatprep.subr.bf16.mxu0 0
    %881 = vmatpush1.bf16.msra.mxu0 0
    %882 = vmatprep.subr.bf16.mxu0 0
    %883 = vmatpush1.bf16.msra.mxu0 0
    %884 = vmatprep.subr.bf16.mxu0 0
    %885 = vmatpush1.bf16.msra.mxu0 0
    %886 = vmatprep.subr.bf16.mxu0 0
    %887 = vmatpush1.bf16.msra.mxu0 0
    %888 = vmatprep.subr.bf16.mxu0 0
    %889 = vmatpush1.bf16.msra.mxu0 0
    %890 = vmatprep.subr.bf16.mxu0 0
    %891 = vmatpush1.bf16.msra.mxu0 0
    %892 = vmatprep.subr.bf16.mxu0 0
    %893 = vmatpush1.bf16.msra.mxu0 0
    %894 = vmatprep.mubr.bf16.mxu0 0
    %895 = vmatmul.mubr.bf16.gmra.mrb[0].mxu0 %v830
    %v896 = vpop.f32.mrb[0].mxu0
    %v897 = vadd.f32 0.0, %v896
    %v898 = vpop.f32.mrb[0].mxu0
    %v899 = vpop.f32.mrb[0].mxu0
    %v900 = vadd.f32 0.0, %v899
    %v901 = vpop.f32.mrb[0].mxu0
    %902 = vmatprep.mubr.bf16.mxu0 0
    %903 = vmatmul.mubr.bf16.gmra.mrb[0].mxu0 %v831
    %v904 = vpop.f32.mrb[0].mxu0
    %v905 = vadd.f32 0.0, %v904
    %v906 = vpop.f32.mrb[0].mxu0
    %v907 = vpop.f32.mrb[0].mxu0
    %v908 = vadd.f32 0.0, %v907
    %v909 = vpop.f32.mrb[0].mxu0
    %910 = vmatprep.mubr.bf16.mxu0 0
    %911 = vmatmul.mubr.bf16.gmra.mrb[0].mxu0 %v832
    %v912 = vpop.f32.mrb[0].mxu0
    %v913 = vadd.f32 0.0, %v912
    %v914 = vpop.f32.mrb[0].mxu0
    %v915 = vpop.f32.mrb[0].mxu0
    %v916 = vadd.f32 0.0, %v915
    %v917 = vpop.f32.mrb[0].mxu0
    %918 = vmatprep.mubr.bf16.mxu0 0
    %919 = vmatmul.mubr.bf16.gmra.mrb[0].mxu0 %v833
    %v920 = vpop.f32.mrb[0].mxu0
    %v921 = vadd.f32 0.0, %v920
    %v922 = vpop.f32.mrb[0].mxu0
    %v923 = vpop.f32.mrb[0].mxu0
    %v924 = vadd.f32 0.0, %v923
    %v925 = vpop.f32.mrb[0].mxu0
    %926 = vmatprep.mubr.bf16.mxu0 0
    %927 = vmatmul.mubr.bf16.gmra.mrb[0].mxu0 %v834
    %v928 = vpop.f32.mrb[0].mxu0
    %v929 = vadd.f32 0.0, %v928
    %v930 = vpop.f32.mrb[0].mxu0
    %v931 = vpop.f32.mrb[0].mxu0
    %v932 = vadd.f32 0.0, %v931
    %v933 = vpop.f32.mrb[0].mxu0
    %934 = vmatprep.mubr.bf16.mxu0 0
    %935 = vmatmul.mubr.bf16.gmra.mrb[0].mxu0 %v835
    %v936 = vpop.f32.mrb[0].mxu0
    %v937 = vadd.f32 0.0, %v936
    %v938 = vpop.f32.mrb[0].mxu0
    %v939 = vpop.f32.mrb[0].mxu0
    %v940 = vadd.f32 0.0, %v939
    %v941 = vpop.f32.mrb[0].mxu0
    %942 = vmatprep.mubr.bf16.mxu0 0
    %943 = vmatmul.mubr.bf16.gmra.mrb[0].mxu0 %v836
    %v944 = vpop.f32.mrb[0].mxu0
    %v945 = vadd.f32 0.0, %v944
    %v946 = vpop.f32.mrb[0].mxu0
    %v947 = vpop.f32.mrb[0].mxu0
    %v948 = vadd.f32 0.0, %v947
    %v949 = vpop.f32.mrb[0].mxu0
    %950 = vmatprep.mubr.bf16.mxu0 0
    %951 = vmatmul.mubr.bf16.gmra.mrb[0].mxu0 %v837
    %v952 = vpop.f32.mrb[0].mxu0
    %v953 = vadd.f32 0.0, %v952
    %v954 = vpop.f32.mrb[0].mxu0
    %v955 = vpop.f32.mrb[0].mxu0
    %v956 = vadd.f32 0.0, %v955
    %v957 = vpop.f32.mrb[0].mxu0
    %958 = vdwg.mxu0
    %s959 = scalar_lea.vmem [#allocation3], 128
    %v960 = vld [vmem:[%s959] sm:$0xff]
    %v961 = vld [vmem:[%s959 + $0x8] sm:$0xff]
    %v962 = vld [vmem:[%s959 + $0x10] sm:$0xff]
    %v963 = vld [vmem:[%s959 + $0x18] sm:$0xff]
    %v964 = vld [vmem:[%s959 + $0x20] sm:$0xff]
    %v965 = vld [vmem:[%s959 + $0x28] sm:$0xff]
    %v966 = vld [vmem:[%s959 + $0x30] sm:$0xff]
    %v967 = vld [vmem:[%s959 + $0x38] sm:$0xff]
    %v968 = vld [vmem:[%s959 + $0x40] sm:$0xff]
    %v969 = vld [vmem:[%s959 + $0x48] sm:$0xff]
    %v970 = vld [vmem:[%s959 + $0x50] sm:$0xff]
    %v971 = vld [vmem:[%s959 + $0x58] sm:$0xff]
    %v972 = vld [vmem:[%s959 + $0x60] sm:$0xff]
    %v973 = vld [vmem:[%s959 + $0x68] sm:$0xff]
    %v974 = vld [vmem:[%s959 + $0x70] sm:$0xff]
    %v975 = vld [vmem:[%s959 + $0x78] sm:$0xff]
    %976 = vrot.lane.b32.xlu0 %v492, 120
    %v977 = vpop.permute.xlu0 %976
    %978 = vrot.lane.b32.xlu0 %v493, 120
    %v979 = vpop.permute.xlu0 %978
    %980 = vrot.lane.b32.xlu0 %v494, 120
    %v981 = vpop.permute.xlu0 %980
    %982 = vrot.lane.b32.xlu0 %v495, 120
    %v983 = vpop.permute.xlu0 %982
    %984 = vrot.lane.b32.xlu0 %v496, 120
    %v985 = vpop.permute.xlu0 %984
    %986 = vrot.lane.b32.xlu0 %v497, 120
    %v987 = vpop.permute.xlu0 %986
    %988 = vrot.lane.b32.xlu0 %v498, 120
    %v989 = vpop.permute.xlu0 %988
    %990 = vrot.lane.b32.xlu0 %v499, 120
    %v991 = vpop.permute.xlu0 %990
    %992 = vrot.lane.b32.xlu0 %v492, 88
    %v993 = vpop.permute.xlu0 %992
    %994 = vrot.lane.b32.xlu0 %v493, 88
    %v995 = vpop.permute.xlu0 %994
    %996 = vrot.lane.b32.xlu0 %v494, 88
    %v997 = vpop.permute.xlu0 %996
    %998 = vrot.lane.b32.xlu0 %v495, 88
    %v999 = vpop.permute.xlu0 %998
    %1000 = vrot.lane.b32.xlu0 %v496, 88
    %v1001 = vpop.permute.xlu0 %1000
    %1002 = vrot.lane.b32.xlu0 %v497, 88
    %v1003 = vpop.permute.xlu0 %1002
    %1004 = vrot.lane.b32.xlu0 %v498, 88
    %v1005 = vpop.permute.xlu0 %1004
    %1006 = vrot.lane.b32.xlu0 %v499, 88
    %v1007 = vpop.permute.xlu0 %1006
    %v1009 = vsel %vm540, %v977, 0
    %v1012 = vsel %vm540, %v979, 0
    %v1015 = vsel %vm540, %v981, 0
    %v1018 = vsel %vm540, %v983, 0
    %v1021 = vsel %vm540, %v985, 0
    %v1024 = vsel %vm540, %v987, 0
    %v1027 = vsel %vm540, %v989, 0
    %v1030 = vsel %vm540, %v991, 0
    %v1033 = vsel %vm540, %v993, 0
    %v1036 = vsel %vm540, %v995, 0
    %v1039 = vsel %vm540, %v997, 0
    %v1042 = vsel %vm540, %v999, 0
    %v1045 = vsel %vm540, %v1001, 0
    %v1048 = vsel %vm540, %v1003, 0
    %v1051 = vsel %vm540, %v1005, 0
    %v1054 = vsel %vm540, %v1007, 0
    %1056 = vmatprep.subr.bf16.mxu0 0
    %1057 = vmatpush1.bf16.xpose.msra.mxu0 %v1033
    %1058 = vmatprep.subr.bf16.mxu0 0
    %1059 = vmatpush1.bf16.xpose.msra.mxu0 %v1036
    %1060 = vmatprep.subr.bf16.mxu0 0
    %1061 = vmatpush1.bf16.xpose.msra.mxu0 %v1039
    %1062 = vmatprep.subr.bf16.mxu0 0
    %1063 = vmatpush1.bf16.xpose.msra.mxu0 %v1042
    %1064 = vmatprep.subr.bf16.mxu0 0
    %1065 = vmatpush1.bf16.xpose.msra.mxu0 %v1045
    %1066 = vmatprep.subr.bf16.mxu0 0
    %1067 = vmatpush1.bf16.xpose.msra.mxu0 %v1048
    %1068 = vmatprep.subr.bf16.mxu0 0
    %1069 = vmatpush1.bf16.xpose.msra.mxu0 %v1051
    %1070 = vmatprep.subr.bf16.mxu0 0
    %1071 = vmatpush1.bf16.xpose.msra.mxu0 %v1054
    %1072 = vmatprep.subr.bf16.mxu0 0
    %1073 = vmatpush1.bf16.xpose.msra.mxu0 0
    %1074 = vmatprep.subr.bf16.mxu0 0
    %1075 = vmatpush1.bf16.xpose.msra.mxu0 0
    %1076 = vmatprep.subr.bf16.mxu0 0
    %1077 = vmatpush1.bf16.xpose.msra.mxu0 0
    %1078 = vmatprep.subr.bf16.mxu0 0
    %1079 = vmatpush1.bf16.xpose.msra.mxu0 0
    %1080 = vmatprep.subr.bf16.mxu0 0
    %1081 = vmatpush1.bf16.xpose.msra.mxu0 0
    %1082 = vmatprep.subr.bf16.mxu0 0
    %1083 = vmatpush1.bf16.xpose.msra.mxu0 0
    %1084 = vmatprep.subr.bf16.mxu0 0
    %1085 = vmatpush1.bf16.xpose.msra.mxu0 0
    %1086 = vmatprep.subr.bf16.mxu0 0
    %1087 = vmatpush1.bf16.xpose.msra.mxu0 0
    %1088 = vmatprep.mubr.bf16.mxu0 0
    %1089 = vmatmul.mubr.bf16.gmra.mrb[0].mxu0 %v1009
    %v1090 = vpop.f32.mrb[0].mxu0
    %v1091 = vadd.f32 %v960, %v1090
    %v1092 = vpop.f32.mrb[0].mxu0
    %v1093 = vpop.f32.mrb[0].mxu0
    %v1094 = vadd.f32 %v961, %v1093
    %v1095 = vpop.f32.mrb[0].mxu0
    %1096 = vmatprep.mubr.bf16.mxu0 0
    %1097 = vmatmul.mubr.bf16.gmra.mrb[0].mxu0 %v1012
    %v1098 = vpop.f32.mrb[0].mxu0
    %v1099 = vadd.f32 %v962, %v1098
    %v1100 = vpop.f32.mrb[0].mxu0
    %v1101 = vpop.f32.mrb[0].mxu0
    %v1102 = vadd.f32 %v963, %v1101
    %v1103 = vpop.f32.mrb[0].mxu0
    %1104 = vmatprep.mubr.bf16.mxu0 0
    %1105 = vmatmul.mubr.bf16.gmra.mrb[0].mxu0 %v1015
    %v1106 = vpop.f32.mrb[0].mxu0
    %v1107 = vadd.f32 %v964, %v1106
    %v1108 = vpop.f32.mrb[0].mxu0
    %v1109 = vpop.f32.mrb[0].mxu0
    %v1110 = vadd.f32 %v965, %v1109
    %v1111 = vpop.f32.mrb[0].mxu0
    %1112 = vmatprep.mubr.bf16.mxu0 0
    %1113 = vmatmul.mubr.bf16.gmra.mrb[0].mxu0 %v1018
    %v1114 = vpop.f32.mrb[0].mxu0
    %v1115 = vadd.f32 %v966, %v1114
    %v1116 = vpop.f32.mrb[0].mxu0
    %v1117 = vpop.f32.mrb[0].mxu0
    %v1118 = vadd.f32 %v967, %v1117
    %v1119 = vpop.f32.mrb[0].mxu0
    %1120 = vmatprep.mubr.bf16.mxu0 0
    %1121 = vmatmul.mubr.bf16.gmra.mrb[0].mxu0 %v1021
    %v1122 = vpop.f32.mrb[0].mxu0
    %v1123 = vadd.f32 %v968, %v1122
    %v1124 = vpop.f32.mrb[0].mxu0
    %v1125 = vpop.f32.mrb[0].mxu0
    %v1126 = vadd.f32 %v969, %v1125
    %v1127 = vpop.f32.mrb[0].mxu0
    %1128 = vmatprep.mubr.bf16.mxu0 0
    %1129 = vmatmul.mubr.bf16.gmra.mrb[0].mxu0 %v1024
    %v1130 = vpop.f32.mrb[0].mxu0
    %v1131 = vadd.f32 %v970, %v1130
    %v1132 = vpop.f32.mrb[0].mxu0
    %v1133 = vpop.f32.mrb[0].mxu0
    %v1134 = vadd.f32 %v971, %v1133
    %v1135 = vpop.f32.mrb[0].mxu0
    %1136 = vmatprep.mubr.bf16.mxu0 0
    %1137 = vmatmul.mubr.bf16.gmra.mrb[0].mxu0 %v1027
    %v1138 = vpop.f32.mrb[0].mxu0
    %v1139 = vadd.f32 %v972, %v1138
    %v1140 = vpop.f32.mrb[0].mxu0
    %v1141 = vpop.f32.mrb[0].mxu0
    %v1142 = vadd.f32 %v973, %v1141
    %v1143 = vpop.f32.mrb[0].mxu0
    %1144 = vmatprep.mubr.bf16.mxu0 0
    %1145 = vmatmul.mubr.bf16.gmra.mrb[0].mxu0 %v1030
    %v1146 = vpop.f32.mrb[0].mxu0
    %v1147 = vadd.f32 %v974, %v1146
    %v1148 = vpop.f32.mrb[0].mxu0
    %v1149 = vpop.f32.mrb[0].mxu0
    %v1150 = vadd.f32 %v975, %v1149
    %v1151 = vpop.f32.mrb[0].mxu0
    %1152 = vdwg.mxu0
    %1153 = vmax.xlane.f32.xlu0 %v1091
    %v1154 = vpop.xlane.xlu0 %1153
    %1155 = vmax.xlane.f32.xlu0 %v1094
    %v1156 = vpop.xlane.xlu0 %1155
    %1157 = vmax.xlane.f32.xlu0 %v1099
    %v1158 = vpop.xlane.xlu0 %1157
    %1159 = vmax.xlane.f32.xlu0 %v1102
    %v1160 = vpop.xlane.xlu0 %1159
    %1161 = vmax.xlane.f32.xlu0 %v1107
    %v1162 = vpop.xlane.xlu0 %1161
    %1163 = vmax.xlane.f32.xlu0 %v1110
    %v1164 = vpop.xlane.xlu0 %1163
    %1165 = vmax.xlane.f32.xlu0 %v1115
    %v1166 = vpop.xlane.xlu0 %1165
    %1167 = vmax.xlane.f32.xlu0 %v1118
    %v1168 = vpop.xlane.xlu0 %1167
    %1169 = vmax.xlane.f32.xlu0 %v1123
    %v1170 = vpop.xlane.xlu0 %1169
    %1171 = vmax.xlane.f32.xlu0 %v1126
    %v1172 = vpop.xlane.xlu0 %1171
    %1173 = vmax.xlane.f32.xlu0 %v1131
    %v1174 = vpop.xlane.xlu0 %1173
    %1175 = vmax.xlane.f32.xlu0 %v1134
    %v1176 = vpop.xlane.xlu0 %1175
    %1177 = vmax.xlane.f32.xlu0 %v1139
    %v1178 = vpop.xlane.xlu0 %1177
    %1179 = vmax.xlane.f32.xlu0 %v1142
    %v1180 = vpop.xlane.xlu0 %1179
    %1181 = vmax.xlane.f32.xlu0 %v1147
    %v1182 = vpop.xlane.xlu0 %1181
    %1183 = vmax.xlane.f32.xlu0 %v1150
    %v1184 = vpop.xlane.xlu0 %1183
    %v1185 = vsub.f32 %v1091, %v1154
    %v1186 = vsub.f32 %v1094, %v1156
    %v1187 = vsub.f32 %v1099, %v1158
    %v1188 = vsub.f32 %v1102, %v1160
    %v1189 = vsub.f32 %v1107, %v1162
    %v1190 = vsub.f32 %v1110, %v1164
    %v1191 = vsub.f32 %v1115, %v1166
    %v1192 = vsub.f32 %v1118, %v1168
    %v1193 = vsub.f32 %v1123, %v1170
    %v1194 = vsub.f32 %v1126, %v1172
    %v1195 = vsub.f32 %v1131, %v1174
    %v1196 = vsub.f32 %v1134, %v1176
    %v1197 = vsub.f32 %v1139, %v1178
    %v1198 = vsub.f32 %v1142, %v1180
    %v1199 = vsub.f32 %v1147, %v1182
    %v1200 = vsub.f32 %v1150, %v1184
    %v1201 = vmul.f32 %v1185, 1.442695
    %v1202 = vpow.pop %v1201
    %v1203 = vmul.f32 %v1186, 1.442695
    %v1204 = vpow.pop %v1203
    %v1205 = vmul.f32 %v1187, 1.442695
    %v1206 = vpow.pop %v1205
    %v1207 = vmul.f32 %v1188, 1.442695
    %v1208 = vpow.pop %v1207
    %v1209 = vmul.f32 %v1189, 1.442695
    %v1210 = vpow.pop %v1209
    %v1211 = vmul.f32 %v1190, 1.442695
    %v1212 = vpow.pop %v1211
    %v1213 = vmul.f32 %v1191, 1.442695
    %v1214 = vpow.pop %v1213
    %v1215 = vmul.f32 %v1192, 1.442695
    %v1216 = vpow.pop %v1215
    %v1217 = vmul.f32 %v1193, 1.442695
    %v1218 = vpow.pop %v1217
    %v1219 = vmul.f32 %v1194, 1.442695
    %v1220 = vpow.pop %v1219
    %v1221 = vmul.f32 %v1195, 1.442695
    %v1222 = vpow.pop %v1221
    %v1223 = vmul.f32 %v1196, 1.442695
    %v1224 = vpow.pop %v1223
    %v1225 = vmul.f32 %v1197, 1.442695
    %v1226 = vpow.pop %v1225
    %v1227 = vmul.f32 %v1198, 1.442695
    %v1228 = vpow.pop %v1227
    %v1229 = vmul.f32 %v1199, 1.442695
    %v1230 = vpow.pop %v1229
    %v1231 = vmul.f32 %v1200, 1.442695
    %v1232 = vpow.pop %v1231
    %1233 = vadd.xlane.f32.xlu0 %v1202
    %v1234 = vpop.xlane.xlu0 %1233
    %1235 = vadd.xlane.f32.xlu0 %v1204
    %v1236 = vpop.xlane.xlu0 %1235
    %1237 = vadd.xlane.f32.xlu0 %v1206
    %v1238 = vpop.xlane.xlu0 %1237
    %1239 = vadd.xlane.f32.xlu0 %v1208
    %v1240 = vpop.xlane.xlu0 %1239
    %1241 = vadd.xlane.f32.xlu0 %v1210
    %v1242 = vpop.xlane.xlu0 %1241
    %1243 = vadd.xlane.f32.xlu0 %v1212
    %v1244 = vpop.xlane.xlu0 %1243
    %1245 = vadd.xlane.f32.xlu0 %v1214
    %v1246 = vpop.xlane.xlu0 %1245
    %1247 = vadd.xlane.f32.xlu0 %v1216
    %v1248 = vpop.xlane.xlu0 %1247
    %1249 = vadd.xlane.f32.xlu0 %v1218
    %v1250 = vpop.xlane.xlu0 %1249
    %1251 = vadd.xlane.f32.xlu0 %v1220
    %v1252 = vpop.xlane.xlu0 %1251
    %1253 = vadd.xlane.f32.xlu0 %v1222
    %v1254 = vpop.xlane.xlu0 %1253
    %1255 = vadd.xlane.f32.xlu0 %v1224
    %v1256 = vpop.xlane.xlu0 %1255
    %1257 = vadd.xlane.f32.xlu0 %v1226
    %v1258 = vpop.xlane.xlu0 %1257
    %1259 = vadd.xlane.f32.xlu0 %v1228
    %v1260 = vpop.xlane.xlu0 %1259
    %1261 = vadd.xlane.f32.xlu0 %v1230
    %v1262 = vpop.xlane.xlu0 %1261
    %1263 = vadd.xlane.f32.xlu0 %v1232
    %v1264 = vpop.xlane.xlu0 %1263
    %v1265 = vrcp.pop %v1234
    %v1266 = vrcp.pop %v1236
    %v1267 = vrcp.pop %v1238
    %v1268 = vrcp.pop %v1240
    %v1269 = vrcp.pop %v1242
    %v1270 = vrcp.pop %v1244
    %v1271 = vrcp.pop %v1246
    %v1272 = vrcp.pop %v1248
    %v1273 = vrcp.pop %v1250
    %v1274 = vrcp.pop %v1252
    %v1275 = vrcp.pop %v1254
    %v1276 = vrcp.pop %v1256
    %v1277 = vrcp.pop %v1258
    %v1278 = vrcp.pop %v1260
    %v1279 = vrcp.pop %v1262
    %v1280 = vrcp.pop %v1264
    %v1281 = vmul.f32 %v1202, %v1265
    %v1282 = vmul.f32 %v1204, %v1266
    %v1283 = vmul.f32 %v1206, %v1267
    %v1284 = vmul.f32 %v1208, %v1268
    %v1285 = vmul.f32 %v1210, %v1269
    %v1286 = vmul.f32 %v1212, %v1270
    %v1287 = vmul.f32 %v1214, %v1271
    %v1288 = vmul.f32 %v1216, %v1272
    %v1289 = vmul.f32 %v1218, %v1273
    %v1290 = vmul.f32 %v1220, %v1274
    %v1291 = vmul.f32 %v1222, %v1275
    %v1292 = vmul.f32 %v1224, %v1276
    %v1293 = vmul.f32 %v1226, %v1277
    %v1294 = vmul.f32 %v1228, %v1278
    %v1295 = vmul.f32 %v1230, %v1279
    %v1296 = vmul.f32 %v1232, %v1280
    %v1297 = vpack.c.bf16 %v1282, %v1281
    %v1298 = vpack.c.bf16 %v1284, %v1283
    %v1299 = vpack.c.bf16 %v1286, %v1285
    %v1300 = vpack.c.bf16 %v1288, %v1287
    %v1301 = vpack.c.bf16 %v1290, %v1289
    %v1302 = vpack.c.bf16 %v1292, %v1291
    %v1303 = vpack.c.bf16 %v1294, %v1293
    %v1304 = vpack.c.bf16 %v1296, %v1295
    %1305 = vrot.lane.b32.xlu0 %v492, 56
    %v1306 = vpop.permute.xlu0 %1305
    %1307 = vrot.lane.b32.xlu0 %v493, 56
    %v1308 = vpop.permute.xlu0 %1307
    %1309 = vrot.lane.b32.xlu0 %v494, 56
    %v1310 = vpop.permute.xlu0 %1309
    %1311 = vrot.lane.b32.xlu0 %v495, 56
    %v1312 = vpop.permute.xlu0 %1311
    %1313 = vrot.lane.b32.xlu0 %v496, 56
    %v1314 = vpop.permute.xlu0 %1313
    %1315 = vrot.lane.b32.xlu0 %v497, 56
    %v1316 = vpop.permute.xlu0 %1315
    %1317 = vrot.lane.b32.xlu0 %v498, 56
    %v1318 = vpop.permute.xlu0 %1317
    %1319 = vrot.lane.b32.xlu0 %v499, 56
    %v1320 = vpop.permute.xlu0 %1319
    %1329 = vmatprep.subr.bf16.mxu0 0
    %1330 = vmatpush1.bf16.msra.mxu0 %v1306
    %1331 = vmatprep.subr.bf16.mxu0 0
    %1332 = vmatpush1.bf16.msra.mxu0 %v1308
    %1333 = vmatprep.subr.bf16.mxu0 0
    %1334 = vmatpush1.bf16.msra.mxu0 %v1310
    %1335 = vmatprep.subr.bf16.mxu0 0
    %1336 = vmatpush1.bf16.msra.mxu0 %v1312
    %1337 = vmatprep.subr.bf16.mxu0 0
    %1338 = vmatpush1.bf16.msra.mxu0 %v1314
    %1339 = vmatprep.subr.bf16.mxu0 0
    %1340 = vmatpush1.bf16.msra.mxu0 %v1316
    %1341 = vmatprep.subr.bf16.mxu0 0
    %1342 = vmatpush1.bf16.msra.mxu0 %v1318
    %1343 = vmatprep.subr.bf16.mxu0 0
    %1344 = vmatpush1.bf16.msra.mxu0 %v1320
    %1345 = vmatprep.subr.bf16.mxu0 0
    %1346 = vmatpush1.bf16.msra.mxu0 0
    %1347 = vmatprep.subr.bf16.mxu0 0
    %1348 = vmatpush1.bf16.msra.mxu0 0
    %1349 = vmatprep.subr.bf16.mxu0 0
    %1350 = vmatpush1.bf16.msra.mxu0 0
    %1351 = vmatprep.subr.bf16.mxu0 0
    %1352 = vmatpush1.bf16.msra.mxu0 0
    %1353 = vmatprep.subr.bf16.mxu0 0
    %1354 = vmatpush1.bf16.msra.mxu0 0
    %1355 = vmatprep.subr.bf16.mxu0 0
    %1356 = vmatpush1.bf16.msra.mxu0 0
    %1357 = vmatprep.subr.bf16.mxu0 0
    %1358 = vmatpush1.bf16.msra.mxu0 0
    %1359 = vmatprep.subr.bf16.mxu0 0
    %1360 = vmatpush1.bf16.msra.mxu0 0
    %1361 = vmatprep.mubr.bf16.mxu0 0
    %1362 = vmatmul.mubr.bf16.gmra.mrb[0].mxu0 %v1297
    %v1363 = vpop.f32.mrb[0].mxu0
    %v1364 = vadd.f32 0.0, %v1363
    %v1365 = vpop.f32.mrb[0].mxu0
    %v1366 = vpop.f32.mrb[0].mxu0
    %v1367 = vadd.f32 0.0, %v1366
    %v1368 = vpop.f32.mrb[0].mxu0
    %1369 = vmatprep.mubr.bf16.mxu0 0
    %1370 = vmatmul.mubr.bf16.gmra.mrb[0].mxu0 %v1298
    %v1371 = vpop.f32.mrb[0].mxu0
    %v1372 = vadd.f32 0.0, %v1371
    %v1373 = vpop.f32.mrb[0].mxu0
    %v1374 = vpop.f32.mrb[0].mxu0
    %v1375 = vadd.f32 0.0, %v1374
    %v1376 = vpop.f32.mrb[0].mxu0
    %1377 = vmatprep.mubr.bf16.mxu0 0
    %1378 = vmatmul.mubr.bf16.gmra.mrb[0].mxu0 %v1299
    %v1379 = vpop.f32.mrb[0].mxu0
    %v1380 = vadd.f32 0.0, %v1379
    %v1381 = vpop.f32.mrb[0].mxu0
    %v1382 = vpop.f32.mrb[0].mxu0
    %v1383 = vadd.f32 0.0, %v1382
    %v1384 = vpop.f32.mrb[0].mxu0
    %1385 = vmatprep.mubr.bf16.mxu0 0
    %1386 = vmatmul.mubr.bf16.gmra.mrb[0].mxu0 %v1300
    %v1387 = vpop.f32.mrb[0].mxu0
    %v1388 = vadd.f32 0.0, %v1387
    %v1389 = vpop.f32.mrb[0].mxu0
    %v1390 = vpop.f32.mrb[0].mxu0
    %v1391 = vadd.f32 0.0, %v1390
    %v1392 = vpop.f32.mrb[0].mxu0
    %1393 = vmatprep.mubr.bf16.mxu0 0
    %1394 = vmatmul.mubr.bf16.gmra.mrb[0].mxu0 %v1301
    %v1395 = vpop.f32.mrb[0].mxu0
    %v1396 = vadd.f32 0.0, %v1395
    %v1397 = vpop.f32.mrb[0].mxu0
    %v1398 = vpop.f32.mrb[0].mxu0
    %v1399 = vadd.f32 0.0, %v1398
    %v1400 = vpop.f32.mrb[0].mxu0
    %1401 = vmatprep.mubr.bf16.mxu0 0
    %1402 = vmatmul.mubr.bf16.gmra.mrb[0].mxu0 %v1302
    %v1403 = vpop.f32.mrb[0].mxu0
    %v1404 = vadd.f32 0.0, %v1403
    %v1405 = vpop.f32.mrb[0].mxu0
    %v1406 = vpop.f32.mrb[0].mxu0
    %v1407 = vadd.f32 0.0, %v1406
    %v1408 = vpop.f32.mrb[0].mxu0
    %1409 = vmatprep.mubr.bf16.mxu0 0
    %1410 = vmatmul.mubr.bf16.gmra.mrb[0].mxu0 %v1303
    %v1411 = vpop.f32.mrb[0].mxu0
    %v1412 = vadd.f32 0.0, %v1411
    %v1413 = vpop.f32.mrb[0].mxu0
    %v1414 = vpop.f32.mrb[0].mxu0
    %v1415 = vadd.f32 0.0, %v1414
    %v1416 = vpop.f32.mrb[0].mxu0
    %1417 = vmatprep.mubr.bf16.mxu0 0
    %1418 = vmatmul.mubr.bf16.gmra.mrb[0].mxu0 %v1304
    %v1419 = vpop.f32.mrb[0].mxu0
    %v1420 = vadd.f32 0.0, %v1419
    %v1421 = vpop.f32.mrb[0].mxu0
    %v1422 = vpop.f32.mrb[0].mxu0
    %v1423 = vadd.f32 0.0, %v1422
    %v1424 = vpop.f32.mrb[0].mxu0
    %1425 = vdwg.mxu0
    %s1426 = scalar_lea.vmem [#allocation3], 256
    %v1427 = vld [vmem:[%s1426] sm:$0xff]
    %v1428 = vld [vmem:[%s1426 + $0x8] sm:$0xff]
    %v1429 = vld [vmem:[%s1426 + $0x10] sm:$0xff]
    %v1430 = vld [vmem:[%s1426 + $0x18] sm:$0xff]
    %v1431 = vld [vmem:[%s1426 + $0x20] sm:$0xff]
    %v1432 = vld [vmem:[%s1426 + $0x28] sm:$0xff]
    %v1433 = vld [vmem:[%s1426 + $0x30] sm:$0xff]
    %v1434 = vld [vmem:[%s1426 + $0x38] sm:$0xff]
    %v1435 = vld [vmem:[%s1426 + $0x40] sm:$0xff]
    %v1436 = vld [vmem:[%s1426 + $0x48] sm:$0xff]
    %v1437 = vld [vmem:[%s1426 + $0x50] sm:$0xff]
    %v1438 = vld [vmem:[%s1426 + $0x58] sm:$0xff]
    %v1439 = vld [vmem:[%s1426 + $0x60] sm:$0xff]
    %v1440 = vld [vmem:[%s1426 + $0x68] sm:$0xff]
    %v1441 = vld [vmem:[%s1426 + $0x70] sm:$0xff]
    %v1442 = vld [vmem:[%s1426 + $0x78] sm:$0xff]
    %1443 = vrot.lane.b32.xlu0 %v492, 112
    %v1444 = vpop.permute.xlu0 %1443
    %1445 = vrot.lane.b32.xlu0 %v493, 112
    %v1446 = vpop.permute.xlu0 %1445
    %1447 = vrot.lane.b32.xlu0 %v494, 112
    %v1448 = vpop.permute.xlu0 %1447
    %1449 = vrot.lane.b32.xlu0 %v495, 112
    %v1450 = vpop.permute.xlu0 %1449
    %1451 = vrot.lane.b32.xlu0 %v496, 112
    %v1452 = vpop.permute.xlu0 %1451
    %1453 = vrot.lane.b32.xlu0 %v497, 112
    %v1454 = vpop.permute.xlu0 %1453
    %1455 = vrot.lane.b32.xlu0 %v498, 112
    %v1456 = vpop.permute.xlu0 %1455
    %1457 = vrot.lane.b32.xlu0 %v499, 112
    %v1458 = vpop.permute.xlu0 %1457
    %1459 = vrot.lane.b32.xlu0 %v492, 80
    %v1460 = vpop.permute.xlu0 %1459
    %1461 = vrot.lane.b32.xlu0 %v493, 80
    %v1462 = vpop.permute.xlu0 %1461
    %1463 = vrot.lane.b32.xlu0 %v494, 80
    %v1464 = vpop.permute.xlu0 %1463
    %1465 = vrot.lane.b32.xlu0 %v495, 80
    %v1466 = vpop.permute.xlu0 %1465
    %1467 = vrot.lane.b32.xlu0 %v496, 80
    %v1468 = vpop.permute.xlu0 %1467
    %1469 = vrot.lane.b32.xlu0 %v497, 80
    %v1470 = vpop.permute.xlu0 %1469
    %1471 = vrot.lane.b32.xlu0 %v498, 80
    %v1472 = vpop.permute.xlu0 %1471
    %1473 = vrot.lane.b32.xlu0 %v499, 80
    %v1474 = vpop.permute.xlu0 %1473
    %v1476 = vsel %vm540, %v1444, 0
    %v1479 = vsel %vm540, %v1446, 0
    %v1482 = vsel %vm540, %v1448, 0
    %v1485 = vsel %vm540, %v1450, 0
    %v1488 = vsel %vm540, %v1452, 0
    %v1491 = vsel %vm540, %v1454, 0
    %v1494 = vsel %vm540, %v1456, 0
    %v1497 = vsel %vm540, %v1458, 0
    %v1500 = vsel %vm540, %v1460, 0
    %v1503 = vsel %vm540, %v1462, 0
    %v1506 = vsel %vm540, %v1464, 0
    %v1509 = vsel %vm540, %v1466, 0
    %v1512 = vsel %vm540, %v1468, 0
    %v1515 = vsel %vm540, %v1470, 0
    %v1518 = vsel %vm540, %v1472, 0
    %v1521 = vsel %vm540, %v1474, 0
    %1523 = vmatprep.subr.bf16.mxu0 0
    %1524 = vmatpush1.bf16.xpose.msra.mxu0 %v1500
    %1525 = vmatprep.subr.bf16.mxu0 0
    %1526 = vmatpush1.bf16.xpose.msra.mxu0 %v1503
    %1527 = vmatprep.subr.bf16.mxu0 0
    %1528 = vmatpush1.bf16.xpose.msra.mxu0 %v1506
    %1529 = vmatprep.subr.bf16.mxu0 0
    %1530 = vmatpush1.bf16.xpose.msra.mxu0 %v1509
    %1531 = vmatprep.subr.bf16.mxu0 0
    %1532 = vmatpush1.bf16.xpose.msra.mxu0 %v1512
    %1533 = vmatprep.subr.bf16.mxu0 0
    %1534 = vmatpush1.bf16.xpose.msra.mxu0 %v1515
    %1535 = vmatprep.subr.bf16.mxu0 0
    %1536 = vmatpush1.bf16.xpose.msra.mxu0 %v1518
    %1537 = vmatprep.subr.bf16.mxu0 0
    %1538 = vmatpush1.bf16.xpose.msra.mxu0 %v1521
    %1539 = vmatprep.subr.bf16.mxu0 0
    %1540 = vmatpush1.bf16.xpose.msra.mxu0 0
    %1541 = vmatprep.subr.bf16.mxu0 0
    %1542 = vmatpush1.bf16.xpose.msra.mxu0 0
    %1543 = vmatprep.subr.bf16.mxu0 0
    %1544 = vmatpush1.bf16.xpose.msra.mxu0 0
    %1545 = vmatprep.subr.bf16.mxu0 0
    %1546 = vmatpush1.bf16.xpose.msra.mxu0 0
    %1547 = vmatprep.subr.bf16.mxu0 0
    %1548 = vmatpush1.bf16.xpose.msra.mxu0 0
    %1549 = vmatprep.subr.bf16.mxu0 0
    %1550 = vmatpush1.bf16.xpose.msra.mxu0 0
    %1551 = vmatprep.subr.bf16.mxu0 0
    %1552 = vmatpush1.bf16.xpose.msra.mxu0 0
    %1553 = vmatprep.subr.bf16.mxu0 0
    %1554 = vmatpush1.bf16.xpose.msra.mxu0 0
    %1555 = vmatprep.mubr.bf16.mxu0 0
    %1556 = vmatmul.mubr.bf16.gmra.mrb[0].mxu0 %v1476
    %v1557 = vpop.f32.mrb[0].mxu0
    %v1558 = vadd.f32 %v1427, %v1557
    %v1559 = vpop.f32.mrb[0].mxu0
    %v1560 = vpop.f32.mrb[0].mxu0
    %v1561 = vadd.f32 %v1428, %v1560
    %v1562 = vpop.f32.mrb[0].mxu0
    %1563 = vmatprep.mubr.bf16.mxu0 0
    %1564 = vmatmul.mubr.bf16.gmra.mrb[0].mxu0 %v1479
    %v1565 = vpop.f32.mrb[0].mxu0
    %v1566 = vadd.f32 %v1429, %v1565
    %v1567 = vpop.f32.mrb[0].mxu0
    %v1568 = vpop.f32.mrb[0].mxu0
    %v1569 = vadd.f32 %v1430, %v1568
    %v1570 = vpop.f32.mrb[0].mxu0
    %1571 = vmatprep.mubr.bf16.mxu0 0
    %1572 = vmatmul.mubr.bf16.gmra.mrb[0].mxu0 %v1482
    %v1573 = vpop.f32.mrb[0].mxu0
    %v1574 = vadd.f32 %v1431, %v1573
    %v1575 = vpop.f32.mrb[0].mxu0
    %v1576 = vpop.f32.mrb[0].mxu0
    %v1577 = vadd.f32 %v1432, %v1576
    %v1578 = vpop.f32.mrb[0].mxu0
    %1579 = vmatprep.mubr.bf16.mxu0 0
    %1580 = vmatmul.mubr.bf16.gmra.mrb[0].mxu0 %v1485
    %v1581 = vpop.f32.mrb[0].mxu0
    %v1582 = vadd.f32 %v1433, %v1581
    %v1583 = vpop.f32.mrb[0].mxu0
    %v1584 = vpop.f32.mrb[0].mxu0
    %v1585 = vadd.f32 %v1434, %v1584
    %v1586 = vpop.f32.mrb[0].mxu0
    %1587 = vmatprep.mubr.bf16.mxu0 0
    %1588 = vmatmul.mubr.bf16.gmra.mrb[0].mxu0 %v1488
    %v1589 = vpop.f32.mrb[0].mxu0
    %v1590 = vadd.f32 %v1435, %v1589
    %v1591 = vpop.f32.mrb[0].mxu0
    %v1592 = vpop.f32.mrb[0].mxu0
    %v1593 = vadd.f32 %v1436, %v1592
    %v1594 = vpop.f32.mrb[0].mxu0
    %1595 = vmatprep.mubr.bf16.mxu0 0
    %1596 = vmatmul.mubr.bf16.gmra.mrb[0].mxu0 %v1491
    %v1597 = vpop.f32.mrb[0].mxu0
    %v1598 = vadd.f32 %v1437, %v1597
    %v1599 = vpop.f32.mrb[0].mxu0
    %v1600 = vpop.f32.mrb[0].mxu0
    %v1601 = vadd.f32 %v1438, %v1600
    %v1602 = vpop.f32.mrb[0].mxu0
    %1603 = vmatprep.mubr.bf16.mxu0 0
    %1604 = vmatmul.mubr.bf16.gmra.mrb[0].mxu0 %v1494
    %v1605 = vpop.f32.mrb[0].mxu0
    %v1606 = vadd.f32 %v1439, %v1605
    %v1607 = vpop.f32.mrb[0].mxu0
    %v1608 = vpop.f32.mrb[0].mxu0
    %v1609 = vadd.f32 %v1440, %v1608
    %v1610 = vpop.f32.mrb[0].mxu0
    %1611 = vmatprep.mubr.bf16.mxu0 0
    %1612 = vmatmul.mubr.bf16.gmra.mrb[0].mxu0 %v1497
    %v1613 = vpop.f32.mrb[0].mxu0
    %v1614 = vadd.f32 %v1441, %v1613
    %v1615 = vpop.f32.mrb[0].mxu0
    %v1616 = vpop.f32.mrb[0].mxu0
    %v1617 = vadd.f32 %v1442, %v1616
    %v1618 = vpop.f32.mrb[0].mxu0
    %1619 = vdwg.mxu0
    %1620 = vmax.xlane.f32.xlu0 %v1558
    %v1621 = vpop.xlane.xlu0 %1620
    %1622 = vmax.xlane.f32.xlu0 %v1561
    %v1623 = vpop.xlane.xlu0 %1622
    %1624 = vmax.xlane.f32.xlu0 %v1566
    %v1625 = vpop.xlane.xlu0 %1624
    %1626 = vmax.xlane.f32.xlu0 %v1569
    %v1627 = vpop.xlane.xlu0 %1626
    %1628 = vmax.xlane.f32.xlu0 %v1574
    %v1629 = vpop.xlane.xlu0 %1628
    %1630 = vmax.xlane.f32.xlu0 %v1577
    %v1631 = vpop.xlane.xlu0 %1630
    %1632 = vmax.xlane.f32.xlu0 %v1582
    %v1633 = vpop.xlane.xlu0 %1632
    %1634 = vmax.xlane.f32.xlu0 %v1585
    %v1635 = vpop.xlane.xlu0 %1634
    %1636 = vmax.xlane.f32.xlu0 %v1590
    %v1637 = vpop.xlane.xlu0 %1636
    %1638 = vmax.xlane.f32.xlu0 %v1593
    %v1639 = vpop.xlane.xlu0 %1638
    %1640 = vmax.xlane.f32.xlu0 %v1598
    %v1641 = vpop.xlane.xlu0 %1640
    %1642 = vmax.xlane.f32.xlu0 %v1601
    %v1643 = vpop.xlane.xlu0 %1642
    %1644 = vmax.xlane.f32.xlu0 %v1606
    %v1645 = vpop.xlane.xlu0 %1644
    %1646 = vmax.xlane.f32.xlu0 %v1609
    %v1647 = vpop.xlane.xlu0 %1646
    %1648 = vmax.xlane.f32.xlu0 %v1614
    %v1649 = vpop.xlane.xlu0 %1648
    %1650 = vmax.xlane.f32.xlu0 %v1617
    %v1651 = vpop.xlane.xlu0 %1650
    %v1652 = vsub.f32 %v1558, %v1621
    %v1653 = vsub.f32 %v1561, %v1623
    %v1654 = vsub.f32 %v1566, %v1625
    %v1655 = vsub.f32 %v1569, %v1627
    %v1656 = vsub.f32 %v1574, %v1629
    %v1657 = vsub.f32 %v1577, %v1631
    %v1658 = vsub.f32 %v1582, %v1633
    %v1659 = vsub.f32 %v1585, %v1635
    %v1660 = vsub.f32 %v1590, %v1637
    %v1661 = vsub.f32 %v1593, %v1639
    %v1662 = vsub.f32 %v1598, %v1641
    %v1663 = vsub.f32 %v1601, %v1643
    %v1664 = vsub.f32 %v1606, %v1645
    %v1665 = vsub.f32 %v1609, %v1647
    %v1666 = vsub.f32 %v1614, %v1649
    %v1667 = vsub.f32 %v1617, %v1651
    %v1668 = vmul.f32 %v1652, 1.442695
    %v1669 = vpow.pop %v1668
    %v1670 = vmul.f32 %v1653, 1.442695
    %v1671 = vpow.pop %v1670
    %v1672 = vmul.f32 %v1654, 1.442695
    %v1673 = vpow.pop %v1672
    %v1674 = vmul.f32 %v1655, 1.442695
    %v1675 = vpow.pop %v1674
    %v1676 = vmul.f32 %v1656, 1.442695
    %v1677 = vpow.pop %v1676
    %v1678 = vmul.f32 %v1657, 1.442695
    %v1679 = vpow.pop %v1678
    %v1680 = vmul.f32 %v1658, 1.442695
    %v1681 = vpow.pop %v1680
    %v1682 = vmul.f32 %v1659, 1.442695
    %v1683 = vpow.pop %v1682
    %v1684 = vmul.f32 %v1660, 1.442695
    %v1685 = vpow.pop %v1684
    %v1686 = vmul.f32 %v1661, 1.442695
    %v1687 = vpow.pop %v1686
    %v1688 = vmul.f32 %v1662, 1.442695
    %v1689 = vpow.pop %v1688
    %v1690 = vmul.f32 %v1663, 1.442695
    %v1691 = vpow.pop %v1690
    %v1692 = vmul.f32 %v1664, 1.442695
    %v1693 = vpow.pop %v1692
    %v1694 = vmul.f32 %v1665, 1.442695
    %v1695 = vpow.pop %v1694
    %v1696 = vmul.f32 %v1666, 1.442695
    %v1697 = vpow.pop %v1696
    %v1698 = vmul.f32 %v1667, 1.442695
    %v1699 = vpow.pop %v1698
    %1700 = vadd.xlane.f32.xlu0 %v1669
    %v1701 = vpop.xlane.xlu0 %1700
    %1702 = vadd.xlane.f32.xlu0 %v1671
    %v1703 = vpop.xlane.xlu0 %1702
    %1704 = vadd.xlane.f32.xlu0 %v1673
    %v1705 = vpop.xlane.xlu0 %1704
    %1706 = vadd.xlane.f32.xlu0 %v1675
    %v1707 = vpop.xlane.xlu0 %1706
    %1708 = vadd.xlane.f32.xlu0 %v1677
    %v1709 = vpop.xlane.xlu0 %1708
    %1710 = vadd.xlane.f32.xlu0 %v1679
    %v1711 = vpop.xlane.xlu0 %1710
    %1712 = vadd.xlane.f32.xlu0 %v1681
    %v1713 = vpop.xlane.xlu0 %1712
    %1714 = vadd.xlane.f32.xlu0 %v1683
    %v1715 = vpop.xlane.xlu0 %1714
    %1716 = vadd.xlane.f32.xlu0 %v1685
    %v1717 = vpop.xlane.xlu0 %1716
    %1718 = vadd.xlane.f32.xlu0 %v1687
    %v1719 = vpop.xlane.xlu0 %1718
    %1720 = vadd.xlane.f32.xlu0 %v1689
    %v1721 = vpop.xlane.xlu0 %1720
    %1722 = vadd.xlane.f32.xlu0 %v1691
    %v1723 = vpop.xlane.xlu0 %1722
    %1724 = vadd.xlane.f32.xlu0 %v1693
    %v1725 = vpop.xlane.xlu0 %1724
    %1726 = vadd.xlane.f32.xlu0 %v1695
    %v1727 = vpop.xlane.xlu0 %1726
    %1728 = vadd.xlane.f32.xlu0 %v1697
    %v1729 = vpop.xlane.xlu0 %1728
    %1730 = vadd.xlane.f32.xlu0 %v1699
    %v1731 = vpop.xlane.xlu0 %1730
    %v1732 = vrcp.pop %v1701
    %v1733 = vrcp.pop %v1703
    %v1734 = vrcp.pop %v1705
    %v1735 = vrcp.pop %v1707
    %v1736 = vrcp.pop %v1709
    %v1737 = vrcp.pop %v1711
    %v1738 = vrcp.pop %v1713
    %v1739 = vrcp.pop %v1715
    %v1740 = vrcp.pop %v1717
    %v1741 = vrcp.pop %v1719
    %v1742 = vrcp.pop %v1721
    %v1743 = vrcp.pop %v1723
    %v1744 = vrcp.pop %v1725
    %v1745 = vrcp.pop %v1727
    %v1746 = vrcp.pop %v1729
    %v1747 = vrcp.pop %v1731
    %v1748 = vmul.f32 %v1669, %v1732
    %v1749 = vmul.f32 %v1671, %v1733
    %v1750 = vmul.f32 %v1673, %v1734
    %v1751 = vmul.f32 %v1675, %v1735
    %v1752 = vmul.f32 %v1677, %v1736
    %v1753 = vmul.f32 %v1679, %v1737
    %v1754 = vmul.f32 %v1681, %v1738
    %v1755 = vmul.f32 %v1683, %v1739
    %v1756 = vmul.f32 %v1685, %v1740
    %v1757 = vmul.f32 %v1687, %v1741
    %v1758 = vmul.f32 %v1689, %v1742
    %v1759 = vmul.f32 %v1691, %v1743
    %v1760 = vmul.f32 %v1693, %v1744
    %v1761 = vmul.f32 %v1695, %v1745
    %v1762 = vmul.f32 %v1697, %v1746
    %v1763 = vmul.f32 %v1699, %v1747
    %v1764 = vpack.c.bf16 %v1749, %v1748
    %v1765 = vpack.c.bf16 %v1751, %v1750
    %v1766 = vpack.c.bf16 %v1753, %v1752
    %v1767 = vpack.c.bf16 %v1755, %v1754
    %v1768 = vpack.c.bf16 %v1757, %v1756
    %v1769 = vpack.c.bf16 %v1759, %v1758
    %v1770 = vpack.c.bf16 %v1761, %v1760
    %v1771 = vpack.c.bf16 %v1763, %v1762
    %1772 = vrot.lane.b32.xlu0 %v492, 48
    %v1773 = vpop.permute.xlu0 %1772
    %1774 = vrot.lane.b32.xlu0 %v493, 48
    %v1775 = vpop.permute.xlu0 %1774
    %1776 = vrot.lane.b32.xlu0 %v494, 48
    %v1777 = vpop.permute.xlu0 %1776
    %1778 = vrot.lane.b32.xlu0 %v495, 48
    %v1779 = vpop.permute.xlu0 %1778
    %1780 = vrot.lane.b32.xlu0 %v496, 48
    %v1781 = vpop.permute.xlu0 %1780
    %1782 = vrot.lane.b32.xlu0 %v497, 48
    %v1783 = vpop.permute.xlu0 %1782
    %1784 = vrot.lane.b32.xlu0 %v498, 48
    %v1785 = vpop.permute.xlu0 %1784
    %1786 = vrot.lane.b32.xlu0 %v499, 48
    %v1787 = vpop.permute.xlu0 %1786
    %1796 = vmatprep.subr.bf16.mxu0 0
    %1797 = vmatpush1.bf16.msra.mxu0 %v1773
    %1798 = vmatprep.subr.bf16.mxu0 0
    %1799 = vmatpush1.bf16.msra.mxu0 %v1775
    %1800 = vmatprep.subr.bf16.mxu0 0
    %1801 = vmatpush1.bf16.msra.mxu0 %v1777
    %1802 = vmatprep.subr.bf16.mxu0 0
    %1803 = vmatpush1.bf16.msra.mxu0 %v1779
    %1804 = vmatprep.subr.bf16.mxu0 0
    %1805 = vmatpush1.bf16.msra.mxu0 %v1781
    %1806 = vmatprep.subr.bf16.mxu0 0
    %1807 = vmatpush1.bf16.msra.mxu0 %v1783
    %1808 = vmatprep.subr.bf16.mxu0 0
    %1809 = vmatpush1.bf16.msra.mxu0 %v1785
    %1810 = vmatprep.subr.bf16.mxu0 0
    %1811 = vmatpush1.bf16.msra.mxu0 %v1787
    %1812 = vmatprep.subr.bf16.mxu0 0
    %1813 = vmatpush1.bf16.msra.mxu0 0
    %1814 = vmatprep.subr.bf16.mxu0 0
    %1815 = vmatpush1.bf16.msra.mxu0 0
    %1816 = vmatprep.subr.bf16.mxu0 0
    %1817 = vmatpush1.bf16.msra.mxu0 0
    %1818 = vmatprep.subr.bf16.mxu0 0
    %1819 = vmatpush1.bf16.msra.mxu0 0
    %1820 = vmatprep.subr.bf16.mxu0 0
    %1821 = vmatpush1.bf16.msra.mxu0 0
    %1822 = vmatprep.subr.bf16.mxu0 0
    %1823 = vmatpush1.bf16.msra.mxu0 0
    %1824 = vmatprep.subr.bf16.mxu0 0
    %1825 = vmatpush1.bf16.msra.mxu0 0
    %1826 = vmatprep.subr.bf16.mxu0 0
    %1827 = vmatpush1.bf16.msra.mxu0 0
    %1828 = vmatprep.mubr.bf16.mxu0 0
    %1829 = vmatmul.mubr.bf16.gmra.mrb[0].mxu0 %v1764
    %v1830 = vpop.f32.mrb[0].mxu0
    %v1831 = vadd.f32 0.0, %v1830
    %v1832 = vpop.f32.mrb[0].mxu0
    %v1833 = vpop.f32.mrb[0].mxu0
    %v1834 = vadd.f32 0.0, %v1833
    %v1835 = vpop.f32.mrb[0].mxu0
    %1836 = vmatprep.mubr.bf16.mxu0 0
    %1837 = vmatmul.mubr.bf16.gmra.mrb[0].mxu0 %v1765
    %v1838 = vpop.f32.mrb[0].mxu0
    %v1839 = vadd.f32 0.0, %v1838
    %v1840 = vpop.f32.mrb[0].mxu0
    %v1841 = vpop.f32.mrb[0].mxu0
    %v1842 = vadd.f32 0.0, %v1841
    %v1843 = vpop.f32.mrb[0].mxu0
    %1844 = vmatprep.mubr.bf16.mxu0 0
    %1845 = vmatmul.mubr.bf16.gmra.mrb[0].mxu0 %v1766
    %v1846 = vpop.f32.mrb[0].mxu0
    %v1847 = vadd.f32 0.0, %v1846
    %v1848 = vpop.f32.mrb[0].mxu0
    %v1849 = vpop.f32.mrb[0].mxu0
    %v1850 = vadd.f32 0.0, %v1849
    %v1851 = vpop.f32.mrb[0].mxu0
    %1852 = vmatprep.mubr.bf16.mxu0 0
    %1853 = vmatmul.mubr.bf16.gmra.mrb[0].mxu0 %v1767
    %v1854 = vpop.f32.mrb[0].mxu0
    %v1855 = vadd.f32 0.0, %v1854
    %v1856 = vpop.f32.mrb[0].mxu0
    %v1857 = vpop.f32.mrb[0].mxu0
    %v1858 = vadd.f32 0.0, %v1857
    %v1859 = vpop.f32.mrb[0].mxu0
    %1860 = vmatprep.mubr.bf16.mxu0 0
    %1861 = vmatmul.mubr.bf16.gmra.mrb[0].mxu0 %v1768
    %v1862 = vpop.f32.mrb[0].mxu0
    %v1863 = vadd.f32 0.0, %v1862
    %v1864 = vpop.f32.mrb[0].mxu0
    %v1865 = vpop.f32.mrb[0].mxu0
    %v1866 = vadd.f32 0.0, %v1865
    %v1867 = vpop.f32.mrb[0].mxu0
    %1868 = vmatprep.mubr.bf16.mxu0 0
    %1869 = vmatmul.mubr.bf16.gmra.mrb[0].mxu0 %v1769
    %v1870 = vpop.f32.mrb[0].mxu0
    %v1871 = vadd.f32 0.0, %v1870
    %v1872 = vpop.f32.mrb[0].mxu0
    %v1873 = vpop.f32.mrb[0].mxu0
    %v1874 = vadd.f32 0.0, %v1873
    %v1875 = vpop.f32.mrb[0].mxu0
    %1876 = vmatprep.mubr.bf16.mxu0 0
    %1877 = vmatmul.mubr.bf16.gmra.mrb[0].mxu0 %v1770
    %v1878 = vpop.f32.mrb[0].mxu0
    %v1879 = vadd.f32 0.0, %v1878
    %v1880 = vpop.f32.mrb[0].mxu0
    %v1881 = vpop.f32.mrb[0].mxu0
    %v1882 = vadd.f32 0.0, %v1881
    %v1883 = vpop.f32.mrb[0].mxu0
    %1884 = vmatprep.mubr.bf16.mxu0 0
    %1885 = vmatmul.mubr.bf16.gmra.mrb[0].mxu0 %v1771
    %v1886 = vpop.f32.mrb[0].mxu0
    %v1887 = vadd.f32 0.0, %v1886
    %v1888 = vpop.f32.mrb[0].mxu0
    %v1889 = vpop.f32.mrb[0].mxu0
    %v1890 = vadd.f32 0.0, %v1889
    %v1891 = vpop.f32.mrb[0].mxu0
    %1892 = vdwg.mxu0
    %s1893 = scalar_lea.vmem [#allocation3], 384
    %v1894 = vld [vmem:[%s1893] sm:$0xff]
    %v1895 = vld [vmem:[%s1893 + $0x8] sm:$0xff]
    %v1896 = vld [vmem:[%s1893 + $0x10] sm:$0xff]
    %v1897 = vld [vmem:[%s1893 + $0x18] sm:$0xff]
    %v1898 = vld [vmem:[%s1893 + $0x20] sm:$0xff]
    %v1899 = vld [vmem:[%s1893 + $0x28] sm:$0xff]
    %v1900 = vld [vmem:[%s1893 + $0x30] sm:$0xff]
    %v1901 = vld [vmem:[%s1893 + $0x38] sm:$0xff]
    %v1902 = vld [vmem:[%s1893 + $0x40] sm:$0xff]
    %v1903 = vld [vmem:[%s1893 + $0x48] sm:$0xff]
    %v1904 = vld [vmem:[%s1893 + $0x50] sm:$0xff]
    %v1905 = vld [vmem:[%s1893 + $0x58] sm:$0xff]
    %v1906 = vld [vmem:[%s1893 + $0x60] sm:$0xff]
    %v1907 = vld [vmem:[%s1893 + $0x68] sm:$0xff]
    %v1908 = vld [vmem:[%s1893 + $0x70] sm:$0xff]
    %v1909 = vld [vmem:[%s1893 + $0x78] sm:$0xff]
    %1910 = vrot.lane.b32.xlu0 %v492, 104
    %v1911 = vpop.permute.xlu0 %1910
    %1912 = vrot.lane.b32.xlu0 %v493, 104
    %v1913 = vpop.permute.xlu0 %1912
    %1914 = vrot.lane.b32.xlu0 %v494, 104
    %v1915 = vpop.permute.xlu0 %1914
    %1916 = vrot.lane.b32.xlu0 %v495, 104
    %v1917 = vpop.permute.xlu0 %1916
    %1918 = vrot.lane.b32.xlu0 %v496, 104
    %v1919 = vpop.permute.xlu0 %1918
    %1920 = vrot.lane.b32.xlu0 %v497, 104
    %v1921 = vpop.permute.xlu0 %1920
    %1922 = vrot.lane.b32.xlu0 %v498, 104
    %v1923 = vpop.permute.xlu0 %1922
    %1924 = vrot.lane.b32.xlu0 %v499, 104
    %v1925 = vpop.permute.xlu0 %1924
    %1926 = vrot.lane.b32.xlu0 %v492, 72
    %v1927 = vpop.permute.xlu0 %1926
    %1928 = vrot.lane.b32.xlu0 %v493, 72
    %v1929 = vpop.permute.xlu0 %1928
    %1930 = vrot.lane.b32.xlu0 %v494, 72
    %v1931 = vpop.permute.xlu0 %1930
    %1932 = vrot.lane.b32.xlu0 %v495, 72
    %v1933 = vpop.permute.xlu0 %1932
    %1934 = vrot.lane.b32.xlu0 %v496, 72
    %v1935 = vpop.permute.xlu0 %1934
    %1936 = vrot.lane.b32.xlu0 %v497, 72
    %v1937 = vpop.permute.xlu0 %1936
    %1938 = vrot.lane.b32.xlu0 %v498, 72
    %v1939 = vpop.permute.xlu0 %1938
    %1940 = vrot.lane.b32.xlu0 %v499, 72
    %v1941 = vpop.permute.xlu0 %1940
    %v1943 = vsel %vm540, %v1911, 0
    %v1946 = vsel %vm540, %v1913, 0
    %v1949 = vsel %vm540, %v1915, 0
    %v1952 = vsel %vm540, %v1917, 0
    %v1955 = vsel %vm540, %v1919, 0
    %v1958 = vsel %vm540, %v1921, 0
    %v1961 = vsel %vm540, %v1923, 0
    %v1964 = vsel %vm540, %v1925, 0
    %v1967 = vsel %vm540, %v1927, 0
    %v1970 = vsel %vm540, %v1929, 0
    %v1973 = vsel %vm540, %v1931, 0
    %v1976 = vsel %vm540, %v1933, 0
    %v1979 = vsel %vm540, %v1935, 0
    %v1982 = vsel %vm540, %v1937, 0
    %v1985 = vsel %vm540, %v1939, 0
    %v1988 = vsel %vm540, %v1941, 0
    %1990 = vmatprep.subr.bf16.mxu0 0
    %1991 = vmatpush1.bf16.xpose.msra.mxu0 %v1967
    %1992 = vmatprep.subr.bf16.mxu0 0
    %1993 = vmatpush1.bf16.xpose.msra.mxu0 %v1970
    %1994 = vmatprep.subr.bf16.mxu0 0
    %1995 = vmatpush1.bf16.xpose.msra.mxu0 %v1973
    %1996 = vmatprep.subr.bf16.mxu0 0
    %1997 = vmatpush1.bf16.xpose.msra.mxu0 %v1976
    %1998 = vmatprep.subr.bf16.mxu0 0
    %1999 = vmatpush1.bf16.xpose.msra.mxu0 %v1979
    %2000 = vmatprep.subr.bf16.mxu0 0
    %2001 = vmatpush1.bf16.xpose.msra.mxu0 %v1982
    %2002 = vmatprep.subr.bf16.mxu0 0
    %2003 = vmatpush1.bf16.xpose.msra.mxu0 %v1985
    %2004 = vmatprep.subr.bf16.mxu0 0
    %2005 = vmatpush1.bf16.xpose.msra.mxu0 %v1988
    %2006 = vmatprep.subr.bf16.mxu0 0
    %2007 = vmatpush1.bf16.xpose.msra.mxu0 0
    %2008 = vmatprep.subr.bf16.mxu0 0
    %2009 = vmatpush1.bf16.xpose.msra.mxu0 0
    %2010 = vmatprep.subr.bf16.mxu0 0
    %2011 = vmatpush1.bf16.xpose.msra.mxu0 0
    %2012 = vmatprep.subr.bf16.mxu0 0
    %2013 = vmatpush1.bf16.xpose.msra.mxu0 0
    %2014 = vmatprep.subr.bf16.mxu0 0
    %2015 = vmatpush1.bf16.xpose.msra.mxu0 0
    %2016 = vmatprep.subr.bf16.mxu0 0
    %2017 = vmatpush1.bf16.xpose.msra.mxu0 0
    %2018 = vmatprep.subr.bf16.mxu0 0
    %2019 = vmatpush1.bf16.xpose.msra.mxu0 0
    %2020 = vmatprep.subr.bf16.mxu0 0
    %2021 = vmatpush1.bf16.xpose.msra.mxu0 0
    %2022 = vmatprep.mubr.bf16.mxu0 0
    %2023 = vmatmul.mubr.bf16.gmra.mrb[0].mxu0 %v1943
    %v2024 = vpop.f32.mrb[0].mxu0
    %v2025 = vadd.f32 %v1894, %v2024
    %v2026 = vpop.f32.mrb[0].mxu0
    %v2027 = vpop.f32.mrb[0].mxu0
    %v2028 = vadd.f32 %v1895, %v2027
    %v2029 = vpop.f32.mrb[0].mxu0
    %2030 = vmatprep.mubr.bf16.mxu0 0
    %2031 = vmatmul.mubr.bf16.gmra.mrb[0].mxu0 %v1946
    %v2032 = vpop.f32.mrb[0].mxu0
    %v2033 = vadd.f32 %v1896, %v2032
    %v2034 = vpop.f32.mrb[0].mxu0
    %v2035 = vpop.f32.mrb[0].mxu0
    %v2036 = vadd.f32 %v1897, %v2035
    %v2037 = vpop.f32.mrb[0].mxu0
    %2038 = vmatprep.mubr.bf16.mxu0 0
    %2039 = vmatmul.mubr.bf16.gmra.mrb[0].mxu0 %v1949
    %v2040 = vpop.f32.mrb[0].mxu0
    %v2041 = vadd.f32 %v1898, %v2040
    %v2042 = vpop.f32.mrb[0].mxu0
    %v2043 = vpop.f32.mrb[0].mxu0
    %v2044 = vadd.f32 %v1899, %v2043
    %v2045 = vpop.f32.mrb[0].mxu0
    %2046 = vmatprep.mubr.bf16.mxu0 0
    %2047 = vmatmul.mubr.bf16.gmra.mrb[0].mxu0 %v1952
    %v2048 = vpop.f32.mrb[0].mxu0
    %v2049 = vadd.f32 %v1900, %v2048
    %v2050 = vpop.f32.mrb[0].mxu0
    %v2051 = vpop.f32.mrb[0].mxu0
    %v2052 = vadd.f32 %v1901, %v2051
    %v2053 = vpop.f32.mrb[0].mxu0
    %2054 = vmatprep.mubr.bf16.mxu0 0
    %2055 = vmatmul.mubr.bf16.gmra.mrb[0].mxu0 %v1955
    %v2056 = vpop.f32.mrb[0].mxu0
    %v2057 = vadd.f32 %v1902, %v2056
    %v2058 = vpop.f32.mrb[0].mxu0
    %v2059 = vpop.f32.mrb[0].mxu0
    %v2060 = vadd.f32 %v1903, %v2059
    %v2061 = vpop.f32.mrb[0].mxu0
    %2062 = vmatprep.mubr.bf16.mxu0 0
    %2063 = vmatmul.mubr.bf16.gmra.mrb[0].mxu0 %v1958
    %v2064 = vpop.f32.mrb[0].mxu0
    %v2065 = vadd.f32 %v1904, %v2064
    %v2066 = vpop.f32.mrb[0].mxu0
    %v2067 = vpop.f32.mrb[0].mxu0
    %v2068 = vadd.f32 %v1905, %v2067
    %v2069 = vpop.f32.mrb[0].mxu0
    %2070 = vmatprep.mubr.bf16.mxu0 0
    %2071 = vmatmul.mubr.bf16.gmra.mrb[0].mxu0 %v1961
    %v2072 = vpop.f32.mrb[0].mxu0
    %v2073 = vadd.f32 %v1906, %v2072
    %v2074 = vpop.f32.mrb[0].mxu0
    %v2075 = vpop.f32.mrb[0].mxu0
    %v2076 = vadd.f32 %v1907, %v2075
    %v2077 = vpop.f32.mrb[0].mxu0
    %2078 = vmatprep.mubr.bf16.mxu0 0
    %2079 = vmatmul.mubr.bf16.gmra.mrb[0].mxu0 %v1964
    %v2080 = vpop.f32.mrb[0].mxu0
    %v2081 = vadd.f32 %v1908, %v2080
    %v2082 = vpop.f32.mrb[0].mxu0
    %v2083 = vpop.f32.mrb[0].mxu0
    %v2084 = vadd.f32 %v1909, %v2083
    %v2085 = vpop.f32.mrb[0].mxu0
    %2086 = vdwg.mxu0
    %2087 = vmax.xlane.f32.xlu0 %v2025
    %v2088 = vpop.xlane.xlu0 %2087
    %2089 = vmax.xlane.f32.xlu0 %v2028
    %v2090 = vpop.xlane.xlu0 %2089
    %2091 = vmax.xlane.f32.xlu0 %v2033
    %v2092 = vpop.xlane.xlu0 %2091
    %2093 = vmax.xlane.f32.xlu0 %v2036
    %v2094 = vpop.xlane.xlu0 %2093
    %2095 = vmax.xlane.f32.xlu0 %v2041
    %v2096 = vpop.xlane.xlu0 %2095
    %2097 = vmax.xlane.f32.xlu0 %v2044
    %v2098 = vpop.xlane.xlu0 %2097
    %2099 = vmax.xlane.f32.xlu0 %v2049
    %v2100 = vpop.xlane.xlu0 %2099
    %2101 = vmax.xlane.f32.xlu0 %v2052
    %v2102 = vpop.xlane.xlu0 %2101
    %2103 = vmax.xlane.f32.xlu0 %v2057
    %v2104 = vpop.xlane.xlu0 %2103
    %2105 = vmax.xlane.f32.xlu0 %v2060
    %v2106 = vpop.xlane.xlu0 %2105
    %2107 = vmax.xlane.f32.xlu0 %v2065
    %v2108 = vpop.xlane.xlu0 %2107
    %2109 = vmax.xlane.f32.xlu0 %v2068
    %v2110 = vpop.xlane.xlu0 %2109
    %2111 = vmax.xlane.f32.xlu0 %v2073
    %v2112 = vpop.xlane.xlu0 %2111
    %2113 = vmax.xlane.f32.xlu0 %v2076
    %v2114 = vpop.xlane.xlu0 %2113
    %2115 = vmax.xlane.f32.xlu0 %v2081
    %v2116 = vpop.xlane.xlu0 %2115
    %2117 = vmax.xlane.f32.xlu0 %v2084
    %v2118 = vpop.xlane.xlu0 %2117
    %v2119 = vsub.f32 %v2025, %v2088
    %v2120 = vsub.f32 %v2028, %v2090
    %v2121 = vsub.f32 %v2033, %v2092
    %v2122 = vsub.f32 %v2036, %v2094
    %v2123 = vsub.f32 %v2041, %v2096
    %v2124 = vsub.f32 %v2044, %v2098
    %v2125 = vsub.f32 %v2049, %v2100
    %v2126 = vsub.f32 %v2052, %v2102
    %v2127 = vsub.f32 %v2057, %v2104
    %v2128 = vsub.f32 %v2060, %v2106
    %v2129 = vsub.f32 %v2065, %v2108
    %v2130 = vsub.f32 %v2068, %v2110
    %v2131 = vsub.f32 %v2073, %v2112
    %v2132 = vsub.f32 %v2076, %v2114
    %v2133 = vsub.f32 %v2081, %v2116
    %v2134 = vsub.f32 %v2084, %v2118
    %v2135 = vmul.f32 %v2119, 1.442695
    %v2136 = vpow.pop %v2135
    %v2137 = vmul.f32 %v2120, 1.442695
    %v2138 = vpow.pop %v2137
    %v2139 = vmul.f32 %v2121, 1.442695
    %v2140 = vpow.pop %v2139
    %v2141 = vmul.f32 %v2122, 1.442695
    %v2142 = vpow.pop %v2141
    %v2143 = vmul.f32 %v2123, 1.442695
    %v2144 = vpow.pop %v2143
    %v2145 = vmul.f32 %v2124, 1.442695
    %v2146 = vpow.pop %v2145
    %v2147 = vmul.f32 %v2125, 1.442695
    %v2148 = vpow.pop %v2147
    %v2149 = vmul.f32 %v2126, 1.442695
    %v2150 = vpow.pop %v2149
    %v2151 = vmul.f32 %v2127, 1.442695
    %v2152 = vpow.pop %v2151
    %v2153 = vmul.f32 %v2128, 1.442695
    %v2154 = vpow.pop %v2153
    %v2155 = vmul.f32 %v2129, 1.442695
    %v2156 = vpow.pop %v2155
    %v2157 = vmul.f32 %v2130, 1.442695
    %v2158 = vpow.pop %v2157
    %v2159 = vmul.f32 %v2131, 1.442695
    %v2160 = vpow.pop %v2159
    %v2161 = vmul.f32 %v2132, 1.442695
    %v2162 = vpow.pop %v2161
    %v2163 = vmul.f32 %v2133, 1.442695
    %v2164 = vpow.pop %v2163
    %v2165 = vmul.f32 %v2134, 1.442695
    %v2166 = vpow.pop %v2165
    %2167 = vadd.xlane.f32.xlu0 %v2136
    %v2168 = vpop.xlane.xlu0 %2167
    %2169 = vadd.xlane.f32.xlu0 %v2138
    %v2170 = vpop.xlane.xlu0 %2169
    %2171 = vadd.xlane.f32.xlu0 %v2140
    %v2172 = vpop.xlane.xlu0 %2171
    %2173 = vadd.xlane.f32.xlu0 %v2142
    %v2174 = vpop.xlane.xlu0 %2173
    %2175 = vadd.xlane.f32.xlu0 %v2144
    %v2176 = vpop.xlane.xlu0 %2175
    %2177 = vadd.xlane.f32.xlu0 %v2146
    %v2178 = vpop.xlane.xlu0 %2177
    %2179 = vadd.xlane.f32.xlu0 %v2148
    %v2180 = vpop.xlane.xlu0 %2179
    %2181 = vadd.xlane.f32.xlu0 %v2150
    %v2182 = vpop.xlane.xlu0 %2181
    %2183 = vadd.xlane.f32.xlu0 %v2152
    %v2184 = vpop.xlane.xlu0 %2183
    %2185 = vadd.xlane.f32.xlu0 %v2154
    %v2186 = vpop.xlane.xlu0 %2185
    %2187 = vadd.xlane.f32.xlu0 %v2156
    %v2188 = vpop.xlane.xlu0 %2187
    %2189 = vadd.xlane.f32.xlu0 %v2158
    %v2190 = vpop.xlane.xlu0 %2189
    %2191 = vadd.xlane.f32.xlu0 %v2160
    %v2192 = vpop.xlane.xlu0 %2191
    %2193 = vadd.xlane.f32.xlu0 %v2162
    %v2194 = vpop.xlane.xlu0 %2193
    %2195 = vadd.xlane.f32.xlu0 %v2164
    %v2196 = vpop.xlane.xlu0 %2195
    %2197 = vadd.xlane.f32.xlu0 %v2166
    %v2198 = vpop.xlane.xlu0 %2197
    %v2199 = vrcp.pop %v2168
    %v2200 = vrcp.pop %v2170
    %v2201 = vrcp.pop %v2172
    %v2202 = vrcp.pop %v2174
    %v2203 = vrcp.pop %v2176
    %v2204 = vrcp.pop %v2178
    %v2205 = vrcp.pop %v2180
    %v2206 = vrcp.pop %v2182
    %v2207 = vrcp.pop %v2184
    %v2208 = vrcp.pop %v2186
    %v2209 = vrcp.pop %v2188
    %v2210 = vrcp.pop %v2190
    %v2211 = vrcp.pop %v2192
    %v2212 = vrcp.pop %v2194
    %v2213 = vrcp.pop %v2196
    %v2214 = vrcp.pop %v2198
    %v2215 = vmul.f32 %v2136, %v2199
    %v2216 = vmul.f32 %v2138, %v2200
    %v2217 = vmul.f32 %v2140, %v2201
    %v2218 = vmul.f32 %v2142, %v2202
    %v2219 = vmul.f32 %v2144, %v2203
    %v2220 = vmul.f32 %v2146, %v2204
    %v2221 = vmul.f32 %v2148, %v2205
    %v2222 = vmul.f32 %v2150, %v2206
    %v2223 = vmul.f32 %v2152, %v2207
    %v2224 = vmul.f32 %v2154, %v2208
    %v2225 = vmul.f32 %v2156, %v2209
    %v2226 = vmul.f32 %v2158, %v2210
    %v2227 = vmul.f32 %v2160, %v2211
    %v2228 = vmul.f32 %v2162, %v2212
    %v2229 = vmul.f32 %v2164, %v2213
    %v2230 = vmul.f32 %v2166, %v2214
    %v2231 = vpack.c.bf16 %v2216, %v2215
    %v2232 = vpack.c.bf16 %v2218, %v2217
    %v2233 = vpack.c.bf16 %v2220, %v2219
    %v2234 = vpack.c.bf16 %v2222, %v2221
    %v2235 = vpack.c.bf16 %v2224, %v2223
    %v2236 = vpack.c.bf16 %v2226, %v2225
    %v2237 = vpack.c.bf16 %v2228, %v2227
    %v2238 = vpack.c.bf16 %v2230, %v2229
    %2239 = vrot.lane.b32.xlu0 %v492, 40
    %v2240 = vpop.permute.xlu0 %2239
    %2241 = vrot.lane.b32.xlu0 %v493, 40
    %v2242 = vpop.permute.xlu0 %2241
    %2243 = vrot.lane.b32.xlu0 %v494, 40
    %v2244 = vpop.permute.xlu0 %2243
    %2245 = vrot.lane.b32.xlu0 %v495, 40
    %v2246 = vpop.permute.xlu0 %2245
    %2247 = vrot.lane.b32.xlu0 %v496, 40
    %v2248 = vpop.permute.xlu0 %2247
    %2249 = vrot.lane.b32.xlu0 %v497, 40
    %v2250 = vpop.permute.xlu0 %2249
    %2251 = vrot.lane.b32.xlu0 %v498, 40
    %v2252 = vpop.permute.xlu0 %2251
    %2253 = vrot.lane.b32.xlu0 %v499, 40
    %v2254 = vpop.permute.xlu0 %2253
    %2263 = vmatprep.subr.bf16.mxu0 0
    %2264 = vmatpush1.bf16.msra.mxu0 %v2240
    %2265 = vmatprep.subr.bf16.mxu0 0
    %2266 = vmatpush1.bf16.msra.mxu0 %v2242
    %2267 = vmatprep.subr.bf16.mxu0 0
    %2268 = vmatpush1.bf16.msra.mxu0 %v2244
    %2269 = vmatprep.subr.bf16.mxu0 0
    %2270 = vmatpush1.bf16.msra.mxu0 %v2246
    %2271 = vmatprep.subr.bf16.mxu0 0
    %2272 = vmatpush1.bf16.msra.mxu0 %v2248
    %2273 = vmatprep.subr.bf16.mxu0 0
    %2274 = vmatpush1.bf16.msra.mxu0 %v2250
    %2275 = vmatprep.subr.bf16.mxu0 0
    %2276 = vmatpush1.bf16.msra.mxu0 %v2252
    %2277 = vmatprep.subr.bf16.mxu0 0
    %2278 = vmatpush1.bf16.msra.mxu0 %v2254
    %2279 = vmatprep.subr.bf16.mxu0 0
    %2280 = vmatpush1.bf16.msra.mxu0 0
    %2281 = vmatprep.subr.bf16.mxu0 0
    %2282 = vmatpush1.bf16.msra.mxu0 0
    %2283 = vmatprep.subr.bf16.mxu0 0
    %2284 = vmatpush1.bf16.msra.mxu0 0
    %2285 = vmatprep.subr.bf16.mxu0 0
    %2286 = vmatpush1.bf16.msra.mxu0 0
    %2287 = vmatprep.subr.bf16.mxu0 0
    %2288 = vmatpush1.bf16.msra.mxu0 0
    %2289 = vmatprep.subr.bf16.mxu0 0
    %2290 = vmatpush1.bf16.msra.mxu0 0
    %2291 = vmatprep.subr.bf16.mxu0 0
    %2292 = vmatpush1.bf16.msra.mxu0 0
    %2293 = vmatprep.subr.bf16.mxu0 0
    %2294 = vmatpush1.bf16.msra.mxu0 0
    %2295 = vmatprep.mubr.bf16.mxu0 0
    %2296 = vmatmul.mubr.bf16.gmra.mrb[0].mxu0 %v2231
    %v2297 = vpop.f32.mrb[0].mxu0
    %v2298 = vadd.f32 0.0, %v2297
    %v2299 = vpop.f32.mrb[0].mxu0
    %v2300 = vpop.f32.mrb[0].mxu0
    %v2301 = vadd.f32 0.0, %v2300
    %v2302 = vpop.f32.mrb[0].mxu0
    %2303 = vmatprep.mubr.bf16.mxu0 0
    %2304 = vmatmul.mubr.bf16.gmra.mrb[0].mxu0 %v2232
    %v2305 = vpop.f32.mrb[0].mxu0
    %v2306 = vadd.f32 0.0, %v2305
    %v2307 = vpop.f32.mrb[0].mxu0
    %v2308 = vpop.f32.mrb[0].mxu0
    %v2309 = vadd.f32 0.0, %v2308
    %v2310 = vpop.f32.mrb[0].mxu0
    %2311 = vmatprep.mubr.bf16.mxu0 0
    %2312 = vmatmul.mubr.bf16.gmra.mrb[0].mxu0 %v2233
    %v2313 = vpop.f32.mrb[0].mxu0
    %v2314 = vadd.f32 0.0, %v2313
    %v2315 = vpop.f32.mrb[0].mxu0
    %v2316 = vpop.f32.mrb[0].mxu0
    %v2317 = vadd.f32 0.0, %v2316
    %v2318 = vpop.f32.mrb[0].mxu0
    %2319 = vmatprep.mubr.bf16.mxu0 0
    %2320 = vmatmul.mubr.bf16.gmra.mrb[0].mxu0 %v2234
    %v2321 = vpop.f32.mrb[0].mxu0
    %v2322 = vadd.f32 0.0, %v2321
    %v2323 = vpop.f32.mrb[0].mxu0
    %v2324 = vpop.f32.mrb[0].mxu0
    %v2325 = vadd.f32 0.0, %v2324
    %v2326 = vpop.f32.mrb[0].mxu0
    %2327 = vmatprep.mubr.bf16.mxu0 0
    %2328 = vmatmul.mubr.bf16.gmra.mrb[0].mxu0 %v2235
    %v2329 = vpop.f32.mrb[0].mxu0
    %v2330 = vadd.f32 0.0, %v2329
    %v2331 = vpop.f32.mrb[0].mxu0
    %v2332 = vpop.f32.mrb[0].mxu0
    %v2333 = vadd.f32 0.0, %v2332
    %v2334 = vpop.f32.mrb[0].mxu0
    %2335 = vmatprep.mubr.bf16.mxu0 0
    %2336 = vmatmul.mubr.bf16.gmra.mrb[0].mxu0 %v2236
    %v2337 = vpop.f32.mrb[0].mxu0
    %v2338 = vadd.f32 0.0, %v2337
    %v2339 = vpop.f32.mrb[0].mxu0
    %v2340 = vpop.f32.mrb[0].mxu0
    %v2341 = vadd.f32 0.0, %v2340
    %v2342 = vpop.f32.mrb[0].mxu0
    %2343 = vmatprep.mubr.bf16.mxu0 0
    %2344 = vmatmul.mubr.bf16.gmra.mrb[0].mxu0 %v2237
    %v2345 = vpop.f32.mrb[0].mxu0
    %v2346 = vadd.f32 0.0, %v2345
    %v2347 = vpop.f32.mrb[0].mxu0
    %v2348 = vpop.f32.mrb[0].mxu0
    %v2349 = vadd.f32 0.0, %v2348
    %v2350 = vpop.f32.mrb[0].mxu0
    %2351 = vmatprep.mubr.bf16.mxu0 0
    %2352 = vmatmul.mubr.bf16.gmra.mrb[0].mxu0 %v2238
    %v2353 = vpop.f32.mrb[0].mxu0
    %v2354 = vadd.f32 0.0, %v2353
    %v2355 = vpop.f32.mrb[0].mxu0
    %v2356 = vpop.f32.mrb[0].mxu0
    %v2357 = vadd.f32 0.0, %v2356
    %v2358 = vpop.f32.mrb[0].mxu0
    %2359 = vdwg.mxu0
    %2376 = vrot.lane.b32.xlu0 %v1364, 8
    %v2377 = vpop.permute.xlu0 %2376
    %2378 = vrot.lane.b32.xlu0 %v1367, 8
    %v2379 = vpop.permute.xlu0 %2378
    %2380 = vrot.lane.b32.xlu0 %v1372, 8
    %v2381 = vpop.permute.xlu0 %2380
    %2382 = vrot.lane.b32.xlu0 %v1375, 8
    %v2383 = vpop.permute.xlu0 %2382
    %2384 = vrot.lane.b32.xlu0 %v1380, 8
    %v2385 = vpop.permute.xlu0 %2384
    %2386 = vrot.lane.b32.xlu0 %v1383, 8
    %v2387 = vpop.permute.xlu0 %2386
    %2388 = vrot.lane.b32.xlu0 %v1388, 8
    %v2389 = vpop.permute.xlu0 %2388
    %2390 = vrot.lane.b32.xlu0 %v1391, 8
    %v2391 = vpop.permute.xlu0 %2390
    %2392 = vrot.lane.b32.xlu0 %v1396, 8
    %v2393 = vpop.permute.xlu0 %2392
    %2394 = vrot.lane.b32.xlu0 %v1399, 8
    %v2395 = vpop.permute.xlu0 %2394
    %2396 = vrot.lane.b32.xlu0 %v1404, 8
    %v2397 = vpop.permute.xlu0 %2396
    %2398 = vrot.lane.b32.xlu0 %v1407, 8
    %v2399 = vpop.permute.xlu0 %2398
    %2400 = vrot.lane.b32.xlu0 %v1412, 8
    %v2401 = vpop.permute.xlu0 %2400
    %2402 = vrot.lane.b32.xlu0 %v1415, 8
    %v2403 = vpop.permute.xlu0 %2402
    %2404 = vrot.lane.b32.xlu0 %v1420, 8
    %v2405 = vpop.permute.xlu0 %2404
    %2406 = vrot.lane.b32.xlu0 %v1423, 8
    %v2407 = vpop.permute.xlu0 %2406
    %2440 = vrot.lane.b32.xlu0 %v1831, 16
    %v2441 = vpop.permute.xlu0 %2440
    %2442 = vrot.lane.b32.xlu0 %v1834, 16
    %v2443 = vpop.permute.xlu0 %2442
    %2444 = vrot.lane.b32.xlu0 %v1839, 16
    %v2445 = vpop.permute.xlu0 %2444
    %2446 = vrot.lane.b32.xlu0 %v1842, 16
    %v2447 = vpop.permute.xlu0 %2446
    %2448 = vrot.lane.b32.xlu0 %v1847, 16
    %v2449 = vpop.permute.xlu0 %2448
    %2450 = vrot.lane.b32.xlu0 %v1850, 16
    %v2451 = vpop.permute.xlu0 %2450
    %2452 = vrot.lane.b32.xlu0 %v1855, 16
    %v2453 = vpop.permute.xlu0 %2452
    %2454 = vrot.lane.b32.xlu0 %v1858, 16
    %v2455 = vpop.permute.xlu0 %2454
    %2456 = vrot.lane.b32.xlu0 %v1863, 16
    %v2457 = vpop.permute.xlu0 %2456
    %2458 = vrot.lane.b32.xlu0 %v1866, 16
    %v2459 = vpop.permute.xlu0 %2458
    %2460 = vrot.lane.b32.xlu0 %v1871, 16
    %v2461 = vpop.permute.xlu0 %2460
    %2462 = vrot.lane.b32.xlu0 %v1874, 16
    %v2463 = vpop.permute.xlu0 %2462
    %2464 = vrot.lane.b32.xlu0 %v1879, 16
    %v2465 = vpop.permute.xlu0 %2464
    %2466 = vrot.lane.b32.xlu0 %v1882, 16
    %v2467 = vpop.permute.xlu0 %2466
    %2468 = vrot.lane.b32.xlu0 %v1887, 16
    %v2469 = vpop.permute.xlu0 %2468
    %2470 = vrot.lane.b32.xlu0 %v1890, 16
    %v2471 = vpop.permute.xlu0 %2470
    %2504 = vrot.lane.b32.xlu0 %v2298, 24
    %v2505 = vpop.permute.xlu0 %2504
    %2506 = vrot.lane.b32.xlu0 %v2301, 24
    %v2507 = vpop.permute.xlu0 %2506
    %2508 = vrot.lane.b32.xlu0 %v2306, 24
    %v2509 = vpop.permute.xlu0 %2508
    %2510 = vrot.lane.b32.xlu0 %v2309, 24
    %v2511 = vpop.permute.xlu0 %2510
    %2512 = vrot.lane.b32.xlu0 %v2314, 24
    %v2513 = vpop.permute.xlu0 %2512
    %2514 = vrot.lane.b32.xlu0 %v2317, 24
    %v2515 = vpop.permute.xlu0 %2514
    %2516 = vrot.lane.b32.xlu0 %v2322, 24
    %v2517 = vpop.permute.xlu0 %2516
    %2518 = vrot.lane.b32.xlu0 %v2325, 24
    %v2519 = vpop.permute.xlu0 %2518
    %2520 = vrot.lane.b32.xlu0 %v2330, 24
    %v2521 = vpop.permute.xlu0 %2520
    %2522 = vrot.lane.b32.xlu0 %v2333, 24
    %v2523 = vpop.permute.xlu0 %2522
    %2524 = vrot.lane.b32.xlu0 %v2338, 24
    %v2525 = vpop.permute.xlu0 %2524
    %2526 = vrot.lane.b32.xlu0 %v2341, 24
    %v2527 = vpop.permute.xlu0 %2526
    %2528 = vrot.lane.b32.xlu0 %v2346, 24
    %v2529 = vpop.permute.xlu0 %2528
    %2530 = vrot.lane.b32.xlu0 %v2349, 24
    %v2531 = vpop.permute.xlu0 %2530
    %2532 = vrot.lane.b32.xlu0 %v2354, 24
    %v2533 = vpop.permute.xlu0 %2532
    %2534 = vrot.lane.b32.xlu0 %v2357, 24
    %v2535 = vpop.permute.xlu0 %2534
    %v2552 = vsel %vm540, %v897, %v2377
    %v2553 = vsel %vm540, %v900, %v2379
    %v2554 = vsel %vm540, %v905, %v2381
    %v2555 = vsel %vm540, %v908, %v2383
    %v2556 = vsel %vm540, %v913, %v2385
    %v2557 = vsel %vm540, %v916, %v2387
    %v2558 = vsel %vm540, %v921, %v2389
    %v2559 = vsel %vm540, %v924, %v2391
    %v2560 = vsel %vm540, %v929, %v2393
    %v2561 = vsel %vm540, %v932, %v2395
    %v2562 = vsel %vm540, %v937, %v2397
    %v2563 = vsel %vm540, %v940, %v2399
    %v2564 = vsel %vm540, %v945, %v2401
    %v2565 = vsel %vm540, %v948, %v2403
    %v2566 = vsel %vm540, %v953, %v2405
    %v2567 = vsel %vm540, %v956, %v2407
    %vm2568 = vcmask 130048
    %v2569 = vsel %vm2568, %v2552, %v2441
    %v2570 = vsel %vm2568, %v2553, %v2443
    %v2571 = vsel %vm2568, %v2554, %v2445
    %v2572 = vsel %vm2568, %v2555, %v2447
    %v2573 = vsel %vm2568, %v2556, %v2449
    %v2574 = vsel %vm2568, %v2557, %v2451
    %v2575 = vsel %vm2568, %v2558, %v2453
    %v2576 = vsel %vm2568, %v2559, %v2455
    %v2577 = vsel %vm2568, %v2560, %v2457
    %v2578 = vsel %vm2568, %v2561, %v2459
    %v2579 = vsel %vm2568, %v2562, %v2461
    %v2580 = vsel %vm2568, %v2563, %v2463
    %v2581 = vsel %vm2568, %v2564, %v2465
    %v2582 = vsel %vm2568, %v2565, %v2467
    %v2583 = vsel %vm2568, %v2566, %v2469
    %v2584 = vsel %vm2568, %v2567, %v2471
    %vm2585 = vcmask 195584
    %v2586 = vsel %vm2585, %v2569, %v2505
    %v2587 = vsel %vm2585, %v2570, %v2507
    %v2588 = vsel %vm2585, %v2571, %v2509
    %v2589 = vsel %vm2585, %v2572, %v2511
    %v2590 = vsel %vm2585, %v2573, %v2513
    %v2591 = vsel %vm2585, %v2574, %v2515
    %v2592 = vsel %vm2585, %v2575, %v2517
    %v2593 = vsel %vm2585, %v2576, %v2519
    %v2594 = vsel %vm2585, %v2577, %v2521
    %v2595 = vsel %vm2585, %v2578, %v2523
    %v2596 = vsel %vm2585, %v2579, %v2525
    %v2597 = vsel %vm2585, %v2580, %v2527
    %v2598 = vsel %vm2585, %v2581, %v2529
    %v2599 = vsel %vm2585, %v2582, %v2531
    %v2600 = vsel %vm2585, %v2583, %v2533
    %v2601 = vsel %vm2585, %v2584, %v2535
    %v2602 = vpack.c.bf16 %v2587, %v2586
    %v2603 = vpack.c.bf16 %v2589, %v2588
    %v2604 = vpack.c.bf16 %v2591, %v2590
    %v2605 = vpack.c.bf16 %v2593, %v2592
    %v2606 = vpack.c.bf16 %v2595, %v2594
    %v2607 = vpack.c.bf16 %v2597, %v2596
    %v2608 = vpack.c.bf16 %v2599, %v2598
    %v2609 = vpack.c.bf16 %v2601, %v2600
    %v2610 = vld [vmem:[%s6] sm:$0xf]
    %v2611 = vld [vmem:[%s6 + $0x4] sm:$0xf]
    %v2612 = vld [vmem:[%s6 + $0x8] sm:$0xf]
    %v2613 = vld [vmem:[%s6 + $0xc] sm:$0xf]
    %v2614 = vld [vmem:[%s7] sm:$0x1]
    %v2616 = vlaneseq
    %v2617 = vshrl.u32 %v2616, 7
    %v2618 = vsub.s32 0, %v2617
    %v2619 = vrot.slane %v2614, %v2618
    %v2625 = vunpack.c.l.b16 %v2610
    %v2626 = vunpack.c.l.b16 %v2611
    %v2627 = vunpack.c.l.b16 %v2612
    %v2628 = vunpack.c.l.b16 %v2613
    %v2629 = vpack.c.b16 %v2626, %v2625
    %v2630 = vpack.c.b16 %v2628, %v2627
    %v2634 = vsel %vm86, %v2602, 0
    %v2637 = vsel %vm86, %v2603, 0
    %v2640 = vsel %vm86, %v2604, 0
    %v2643 = vsel %vm86, %v2605, 0
    %v2646 = vsel %vm86, %v2606, 0
    %v2649 = vsel %vm86, %v2607, 0
    %v2652 = vsel %vm86, %v2608, 0
    %v2655 = vsel %vm86, %v2609, 0
    %2657 = vmatprep.subr.bf16.mxu0 0
    %2658 = vmatpush1.bf16.msra.mxu0 %v2629
    %2659 = vmatprep.subr.bf16.mxu0 0
    %2660 = vmatpush1.bf16.msra.mxu0 %v2630
    %2661 = vmatprep.subr.bf16.mxu0 0
    %2662 = vmatpush1.bf16.msra.mxu0 0
    %2663 = vmatprep.subr.bf16.mxu0 0
    %2664 = vmatpush1.bf16.msra.mxu0 0
    %2665 = vmatprep.subr.bf16.mxu0 0
    %2666 = vmatpush1.bf16.msra.mxu0 0
    %2667 = vmatprep.subr.bf16.mxu0 0
    %2668 = vmatpush1.bf16.msra.mxu0 0
    %2669 = vmatprep.subr.bf16.mxu0 0
    %2670 = vmatpush1.bf16.msra.mxu0 0
    %2671 = vmatprep.subr.bf16.mxu0 0
    %2672 = vmatpush1.bf16.msra.mxu0 0
    %2673 = vmatprep.subr.bf16.mxu0 0
    %2674 = vmatpush1.bf16.msra.mxu0 0
    %2675 = vmatprep.subr.bf16.mxu0 0
    %2676 = vmatpush1.bf16.msra.mxu0 0
    %2677 = vmatprep.subr.bf16.mxu0 0
    %2678 = vmatpush1.bf16.msra.mxu0 0
    %2679 = vmatprep.subr.bf16.mxu0 0
    %2680 = vmatpush1.bf16.msra.mxu0 0
    %2681 = vmatprep.subr.bf16.mxu0 0
    %2682 = vmatpush1.bf16.msra.mxu0 0
    %2683 = vmatprep.subr.bf16.mxu0 0
    %2684 = vmatpush1.bf16.msra.mxu0 0
    %2685 = vmatprep.subr.bf16.mxu0 0
    %2686 = vmatpush1.bf16.msra.mxu0 0
    %2687 = vmatprep.subr.bf16.mxu0 0
    %2688 = vmatpush1.bf16.msra.mxu0 0
    %2689 = vmatprep.mubr.bf16.mxu0 0
    %2690 = vmatmul.mubr.bf16.gmra.mrb[0].mxu0 %v2634
    %v2691 = vpop.f32.mrb[0].mxu0
    %v2692 = vadd.f32 %v2619, %v2691
    %v2693 = vpop.f32.mrb[0].mxu0
    %v2694 = vpop.f32.mrb[0].mxu0
    %v2695 = vadd.f32 %v2619, %v2694
    %v2696 = vpop.f32.mrb[0].mxu0
    %2697 = vmatprep.mubr.bf16.mxu0 0
    %2698 = vmatmul.mubr.bf16.gmra.mrb[0].mxu0 %v2637
    %v2699 = vpop.f32.mrb[0].mxu0
    %v2700 = vadd.f32 %v2619, %v2699
    %v2701 = vpop.f32.mrb[0].mxu0
    %v2702 = vpop.f32.mrb[0].mxu0
    %v2703 = vadd.f32 %v2619, %v2702
    %v2704 = vpop.f32.mrb[0].mxu0
    %2705 = vmatprep.mubr.bf16.mxu0 0
    %2706 = vmatmul.mubr.bf16.gmra.mrb[0].mxu0 %v2640
    %v2707 = vpop.f32.mrb[0].mxu0
    %v2708 = vadd.f32 %v2619, %v2707
    %v2709 = vpop.f32.mrb[0].mxu0
    %v2710 = vpop.f32.mrb[0].mxu0
    %v2711 = vadd.f32 %v2619, %v2710
    %v2712 = vpop.f32.mrb[0].mxu0
    %2713 = vmatprep.mubr.bf16.mxu0 0
    %2714 = vmatmul.mubr.bf16.gmra.mrb[0].mxu0 %v2643
    %v2715 = vpop.f32.mrb[0].mxu0
    %v2716 = vadd.f32 %v2619, %v2715
    %v2717 = vpop.f32.mrb[0].mxu0
    %v2718 = vpop.f32.mrb[0].mxu0
    %v2719 = vadd.f32 %v2619, %v2718
    %v2720 = vpop.f32.mrb[0].mxu0
    %2721 = vmatprep.mubr.bf16.mxu0 0
    %2722 = vmatmul.mubr.bf16.gmra.mrb[0].mxu0 %v2646
    %v2723 = vpop.f32.mrb[0].mxu0
    %v2724 = vadd.f32 %v2619, %v2723
    %v2725 = vpop.f32.mrb[0].mxu0
    %v2726 = vpop.f32.mrb[0].mxu0
    %v2727 = vadd.f32 %v2619, %v2726
    %v2728 = vpop.f32.mrb[0].mxu0
    %2729 = vmatprep.mubr.bf16.mxu0 0
    %2730 = vmatmul.mubr.bf16.gmra.mrb[0].mxu0 %v2649
    %v2731 = vpop.f32.mrb[0].mxu0
    %v2732 = vadd.f32 %v2619, %v2731
    %v2733 = vpop.f32.mrb[0].mxu0
    %v2734 = vpop.f32.mrb[0].mxu0
    %v2735 = vadd.f32 %v2619, %v2734
    %v2736 = vpop.f32.mrb[0].mxu0
    %2737 = vmatprep.mubr.bf16.mxu0 0
    %2738 = vmatmul.mubr.bf16.gmra.mrb[0].mxu0 %v2652
    %v2739 = vpop.f32.mrb[0].mxu0
    %v2740 = vadd.f32 %v2619, %v2739
    %v2741 = vpop.f32.mrb[0].mxu0
    %v2742 = vpop.f32.mrb[0].mxu0
    %v2743 = vadd.f32 %v2619, %v2742
    %v2744 = vpop.f32.mrb[0].mxu0
    %2745 = vmatprep.mubr.bf16.mxu0 0
    %2746 = vmatmul.mubr.bf16.gmra.mrb[0].mxu0 %v2655
    %v2747 = vpop.f32.mrb[0].mxu0
    %v2748 = vadd.f32 %v2619, %v2747
    %v2749 = vpop.f32.mrb[0].mxu0
    %v2750 = vpop.f32.mrb[0].mxu0
    %v2751 = vadd.f32 %v2619, %v2750
    %v2752 = vpop.f32.mrb[0].mxu0
    %2753 = vdwg.mxu0
    %v2754 = vadd.f32 %v68, %v2692
    %v2755 = vadd.f32 %v69, %v2695
    %v2756 = vadd.f32 %v70, %v2700
    %v2757 = vadd.f32 %v71, %v2703
    %v2758 = vadd.f32 %v72, %v2708
    %v2759 = vadd.f32 %v73, %v2711
    %v2760 = vadd.f32 %v74, %v2716
    %v2761 = vadd.f32 %v75, %v2719
    %v2762 = vadd.f32 %v76, %v2724
    %v2763 = vadd.f32 %v77, %v2727
    %v2764 = vadd.f32 %v78, %v2732
    %v2765 = vadd.f32 %v79, %v2735
    %v2766 = vadd.f32 %v80, %v2740
    %v2767 = vadd.f32 %v81, %v2743
    %v2768 = vadd.f32 %v82, %v2748
    %v2769 = vadd.f32 %v83, %v2751
    %v2770 = vld [vmem:[%s8] sm:$0x1]
    %v2771 = vld [vmem:[%s9] sm:$0x1]
    %v2772 = vsel %vm86, %v2754, 0.0
    %2773 = vadd.xlane.f32.xlu0 %v2772
    %v2774 = vpop.xlane.xlu0 %2773
    %v2775 = vsel %vm86, %v2755, 0.0
    %2776 = vadd.xlane.f32.xlu0 %v2775
    %v2777 = vpop.xlane.xlu0 %2776
    %v2778 = vsel %vm86, %v2756, 0.0
    %2779 = vadd.xlane.f32.xlu0 %v2778
    %v2780 = vpop.xlane.xlu0 %2779
    %v2781 = vsel %vm86, %v2757, 0.0
    %2782 = vadd.xlane.f32.xlu0 %v2781
    %v2783 = vpop.xlane.xlu0 %2782
    %v2784 = vsel %vm86, %v2758, 0.0
    %2785 = vadd.xlane.f32.xlu0 %v2784
    %v2786 = vpop.xlane.xlu0 %2785
    %v2787 = vsel %vm86, %v2759, 0.0
    %2788 = vadd.xlane.f32.xlu0 %v2787
    %v2789 = vpop.xlane.xlu0 %2788
    %v2790 = vsel %vm86, %v2760, 0.0
    %2791 = vadd.xlane.f32.xlu0 %v2790
    %v2792 = vpop.xlane.xlu0 %2791
    %v2793 = vsel %vm86, %v2761, 0.0
    %2794 = vadd.xlane.f32.xlu0 %v2793
    %v2795 = vpop.xlane.xlu0 %2794
    %v2796 = vsel %vm86, %v2762, 0.0
    %2797 = vadd.xlane.f32.xlu0 %v2796
    %v2798 = vpop.xlane.xlu0 %2797
    %v2799 = vsel %vm86, %v2763, 0.0
    %2800 = vadd.xlane.f32.xlu0 %v2799
    %v2801 = vpop.xlane.xlu0 %2800
    %v2802 = vsel %vm86, %v2764, 0.0
    %2803 = vadd.xlane.f32.xlu0 %v2802
    %v2804 = vpop.xlane.xlu0 %2803
    %v2805 = vsel %vm86, %v2765, 0.0
    %2806 = vadd.xlane.f32.xlu0 %v2805
    %v2807 = vpop.xlane.xlu0 %2806
    %v2808 = vsel %vm86, %v2766, 0.0
    %2809 = vadd.xlane.f32.xlu0 %v2808
    %v2810 = vpop.xlane.xlu0 %2809
    %v2811 = vsel %vm86, %v2767, 0.0
    %2812 = vadd.xlane.f32.xlu0 %v2811
    %v2813 = vpop.xlane.xlu0 %2812
    %v2814 = vsel %vm86, %v2768, 0.0
    %2815 = vadd.xlane.f32.xlu0 %v2814
    %v2816 = vpop.xlane.xlu0 %2815
    %v2817 = vsel %vm86, %v2769, 0.0
    %2818 = vadd.xlane.f32.xlu0 %v2817
    %v2819 = vpop.xlane.xlu0 %2818
    %v2820 = vmul.f32 %v2774, %v135
    %v2821 = vmul.f32 %v2777, %v135
    %v2822 = vmul.f32 %v2780, %v135
    %v2823 = vmul.f32 %v2783, %v135
    %v2824 = vmul.f32 %v2786, %v135
    %v2825 = vmul.f32 %v2789, %v135
    %v2826 = vmul.f32 %v2792, %v135
    %v2827 = vmul.f32 %v2795, %v135
    %v2828 = vmul.f32 %v2798, %v135
    %v2829 = vmul.f32 %v2801, %v135
    %v2830 = vmul.f32 %v2804, %v135
    %v2831 = vmul.f32 %v2807, %v135
    %v2832 = vmul.f32 %v2810, %v135
    %v2833 = vmul.f32 %v2813, %v135
    %v2834 = vmul.f32 %v2816, %v135
    %v2835 = vmul.f32 %v2819, %v135
    %v2836 = vsub.f32 %v2754, %v2820
    %v2837 = vsub.f32 %v2755, %v2821
    %v2838 = vsub.f32 %v2756, %v2822
    %v2839 = vsub.f32 %v2757, %v2823
    %v2840 = vsub.f32 %v2758, %v2824
    %v2841 = vsub.f32 %v2759, %v2825
    %v2842 = vsub.f32 %v2760, %v2826
    %v2843 = vsub.f32 %v2761, %v2827
    %v2844 = vsub.f32 %v2762, %v2828
    %v2845 = vsub.f32 %v2763, %v2829
    %v2846 = vsub.f32 %v2764, %v2830
    %v2847 = vsub.f32 %v2765, %v2831
    %v2848 = vsub.f32 %v2766, %v2832
    %v2849 = vsub.f32 %v2767, %v2833
    %v2850 = vsub.f32 %v2768, %v2834
    %v2851 = vsub.f32 %v2769, %v2835
    %v2852 = vmul.f32 %v2836, %v2836
    %v2853 = vmul.f32 %v2837, %v2837
    %v2854 = vmul.f32 %v2838, %v2838
    %v2855 = vmul.f32 %v2839, %v2839
    %v2856 = vmul.f32 %v2840, %v2840
    %v2857 = vmul.f32 %v2841, %v2841
    %v2858 = vmul.f32 %v2842, %v2842
    %v2859 = vmul.f32 %v2843, %v2843
    %v2860 = vmul.f32 %v2844, %v2844
    %v2861 = vmul.f32 %v2845, %v2845
    %v2862 = vmul.f32 %v2846, %v2846
    %v2863 = vmul.f32 %v2847, %v2847
    %v2864 = vmul.f32 %v2848, %v2848
    %v2865 = vmul.f32 %v2849, %v2849
    %v2866 = vmul.f32 %v2850, %v2850
    %v2867 = vmul.f32 %v2851, %v2851
    %v2868 = vsel %vm86, %v2852, 0.0
    %2869 = vadd.xlane.f32.xlu0 %v2868
    %v2870 = vpop.xlane.xlu0 %2869
    %v2871 = vsel %vm86, %v2853, 0.0
    %2872 = vadd.xlane.f32.xlu0 %v2871
    %v2873 = vpop.xlane.xlu0 %2872
    %v2874 = vsel %vm86, %v2854, 0.0
    %2875 = vadd.xlane.f32.xlu0 %v2874
    %v2876 = vpop.xlane.xlu0 %2875
    %v2877 = vsel %vm86, %v2855, 0.0
    %2878 = vadd.xlane.f32.xlu0 %v2877
    %v2879 = vpop.xlane.xlu0 %2878
    %v2880 = vsel %vm86, %v2856, 0.0
    %2881 = vadd.xlane.f32.xlu0 %v2880
    %v2882 = vpop.xlane.xlu0 %2881
    %v2883 = vsel %vm86, %v2857, 0.0
    %2884 = vadd.xlane.f32.xlu0 %v2883
    %v2885 = vpop.xlane.xlu0 %2884
    %v2886 = vsel %vm86, %v2858, 0.0
    %2887 = vadd.xlane.f32.xlu0 %v2886
    %v2888 = vpop.xlane.xlu0 %2887
    %v2889 = vsel %vm86, %v2859, 0.0
    %2890 = vadd.xlane.f32.xlu0 %v2889
    %v2891 = vpop.xlane.xlu0 %2890
    %v2892 = vsel %vm86, %v2860, 0.0
    %2893 = vadd.xlane.f32.xlu0 %v2892
    %v2894 = vpop.xlane.xlu0 %2893
    %v2895 = vsel %vm86, %v2861, 0.0
    %2896 = vadd.xlane.f32.xlu0 %v2895
    %v2897 = vpop.xlane.xlu0 %2896
    %v2898 = vsel %vm86, %v2862, 0.0
    %2899 = vadd.xlane.f32.xlu0 %v2898
    %v2900 = vpop.xlane.xlu0 %2899
    %v2901 = vsel %vm86, %v2863, 0.0
    %2902 = vadd.xlane.f32.xlu0 %v2901
    %v2903 = vpop.xlane.xlu0 %2902
    %v2904 = vsel %vm86, %v2864, 0.0
    %2905 = vadd.xlane.f32.xlu0 %v2904
    %v2906 = vpop.xlane.xlu0 %2905
    %v2907 = vsel %vm86, %v2865, 0.0
    %2908 = vadd.xlane.f32.xlu0 %v2907
    %v2909 = vpop.xlane.xlu0 %2908
    %v2910 = vsel %vm86, %v2866, 0.0
    %2911 = vadd.xlane.f32.xlu0 %v2910
    %v2912 = vpop.xlane.xlu0 %2911
    %v2913 = vsel %vm86, %v2867, 0.0
    %2914 = vadd.xlane.f32.xlu0 %v2913
    %v2915 = vpop.xlane.xlu0 %2914
    %v2916 = vmul.f32 %v2870, %v135
    %v2917 = vmul.f32 %v2873, %v135
    %v2918 = vmul.f32 %v2876, %v135
    %v2919 = vmul.f32 %v2879, %v135
    %v2920 = vmul.f32 %v2882, %v135
    %v2921 = vmul.f32 %v2885, %v135
    %v2922 = vmul.f32 %v2888, %v135
    %v2923 = vmul.f32 %v2891, %v135
    %v2924 = vmul.f32 %v2894, %v135
    %v2925 = vmul.f32 %v2897, %v135
    %v2926 = vmul.f32 %v2900, %v135
    %v2927 = vmul.f32 %v2903, %v135
    %v2928 = vmul.f32 %v2906, %v135
    %v2929 = vmul.f32 %v2909, %v135
    %v2930 = vmul.f32 %v2912, %v135
    %v2931 = vmul.f32 %v2915, %v135
    %v2932 = vadd.f32 %v2916, 1e-05
    %v2933 = vadd.f32 %v2917, 1e-05
    %v2934 = vadd.f32 %v2918, 1e-05
    %v2935 = vadd.f32 %v2919, 1e-05
    %v2936 = vadd.f32 %v2920, 1e-05
    %v2937 = vadd.f32 %v2921, 1e-05
    %v2938 = vadd.f32 %v2922, 1e-05
    %v2939 = vadd.f32 %v2923, 1e-05
    %v2940 = vadd.f32 %v2924, 1e-05
    %v2941 = vadd.f32 %v2925, 1e-05
    %v2942 = vadd.f32 %v2926, 1e-05
    %v2943 = vadd.f32 %v2927, 1e-05
    %v2944 = vadd.f32 %v2928, 1e-05
    %v2945 = vadd.f32 %v2929, 1e-05
    %v2946 = vadd.f32 %v2930, 1e-05
    %v2947 = vadd.f32 %v2931, 1e-05
    %v2948 = vrsqrt.pop %v2932
    %v2949 = vrsqrt.pop %v2933
    %v2950 = vrsqrt.pop %v2934
    %v2951 = vrsqrt.pop %v2935
    %v2952 = vrsqrt.pop %v2936
    %v2953 = vrsqrt.pop %v2937
    %v2954 = vrsqrt.pop %v2938
    %v2955 = vrsqrt.pop %v2939
    %v2956 = vrsqrt.pop %v2940
    %v2957 = vrsqrt.pop %v2941
    %v2958 = vrsqrt.pop %v2942
    %v2959 = vrsqrt.pop %v2943
    %v2960 = vrsqrt.pop %v2944
    %v2961 = vrsqrt.pop %v2945
    %v2962 = vrsqrt.pop %v2946
    %v2963 = vrsqrt.pop %v2947
    %v2964 = vmul.f32 %v2836, %v2948
    %v2965 = vmul.f32 %v2837, %v2949
    %v2966 = vmul.f32 %v2838, %v2950
    %v2967 = vmul.f32 %v2839, %v2951
    %v2968 = vmul.f32 %v2840, %v2952
    %v2969 = vmul.f32 %v2841, %v2953
    %v2970 = vmul.f32 %v2842, %v2954
    %v2971 = vmul.f32 %v2843, %v2955
    %v2972 = vmul.f32 %v2844, %v2956
    %v2973 = vmul.f32 %v2845, %v2957
    %v2974 = vmul.f32 %v2846, %v2958
    %v2975 = vmul.f32 %v2847, %v2959
    %v2976 = vmul.f32 %v2848, %v2960
    %v2977 = vmul.f32 %v2849, %v2961
    %v2978 = vmul.f32 %v2850, %v2962
    %v2979 = vmul.f32 %v2851, %v2963
    %v2981 = vlaneseq
    %v2982 = vshrl.u32 %v2981, 7
    %v2983 = vsub.s32 0, %v2982
    %v2984 = vrot.slane %v2770, %v2983
    %v2986 = vmul.f32 %v2964, %v2984
    %v2987 = vmul.f32 %v2965, %v2984
    %v2988 = vmul.f32 %v2966, %v2984
    %v2989 = vmul.f32 %v2967, %v2984
    %v2990 = vmul.f32 %v2968, %v2984
    %v2991 = vmul.f32 %v2969, %v2984
    %v2992 = vmul.f32 %v2970, %v2984
    %v2993 = vmul.f32 %v2971, %v2984
    %v2994 = vmul.f32 %v2972, %v2984
    %v2995 = vmul.f32 %v2973, %v2984
    %v2996 = vmul.f32 %v2974, %v2984
    %v2997 = vmul.f32 %v2975, %v2984
    %v2998 = vmul.f32 %v2976, %v2984
    %v2999 = vmul.f32 %v2977, %v2984
    %v3000 = vmul.f32 %v2978, %v2984
    %v3001 = vmul.f32 %v2979, %v2984
    %v3003 = vlaneseq
    %v3004 = vshrl.u32 %v3003, 7
    %v3005 = vsub.s32 0, %v3004
    %v3006 = vrot.slane %v2771, %v3005
    %v3008 = vadd.f32 %v2986, %v3006
    %v3009 = vadd.f32 %v2987, %v3006
    %v3010 = vadd.f32 %v2988, %v3006
    %v3011 = vadd.f32 %v2989, %v3006
    %v3012 = vadd.f32 %v2990, %v3006
    %v3013 = vadd.f32 %v2991, %v3006
    %v3014 = vadd.f32 %v2992, %v3006
    %v3015 = vadd.f32 %v2993, %v3006
    %v3016 = vadd.f32 %v2994, %v3006
    %v3017 = vadd.f32 %v2995, %v3006
    %v3018 = vadd.f32 %v2996, %v3006
    %v3019 = vadd.f32 %v2997, %v3006
    %v3020 = vadd.f32 %v2998, %v3006
    %v3021 = vadd.f32 %v2999, %v3006
    %v3022 = vadd.f32 %v3000, %v3006
    %v3023 = vadd.f32 %v3001, %v3006
    %v3024 = vpack.c.bf16 %v3009, %v3008
    %v3025 = vpack.c.bf16 %v3011, %v3010
    %v3026 = vpack.c.bf16 %v3013, %v3012
    %v3027 = vpack.c.bf16 %v3015, %v3014
    %v3028 = vpack.c.bf16 %v3017, %v3016
    %v3029 = vpack.c.bf16 %v3019, %v3018
    %v3030 = vpack.c.bf16 %v3021, %v3020
    %v3031 = vpack.c.bf16 %v3023, %v3022
    %v3032 = vld [vmem:[%s10] sm:$0xf]
    %v3033 = vld [vmem:[%s10 + $0x4] sm:$0xf]
    %v3034 = vld [vmem:[%s10 + $0x8] sm:$0xf]
    %v3035 = vld [vmem:[%s10 + $0xc] sm:$0xf]
    %v3036 = vld [vmem:[%s11] sm:$0x1]
    %v3038 = vlaneseq
    %v3039 = vshrl.u32 %v3038, 7
    %v3040 = vsub.s32 0, %v3039
    %v3041 = vrot.slane %v3036, %v3040
    %v3047 = vunpack.c.l.b16 %v3032
    %v3048 = vunpack.c.l.b16 %v3033
    %v3049 = vunpack.c.l.b16 %v3034
    %v3050 = vunpack.c.l.b16 %v3035
    %v3051 = vpack.c.b16 %v3048, %v3047
    %v3052 = vpack.c.b16 %v3050, %v3049
    %v3056 = vsel %vm86, %v3024, 0
    %v3059 = vsel %vm86, %v3025, 0
    %v3062 = vsel %vm86, %v3026, 0
    %v3065 = vsel %vm86, %v3027, 0
    %v3068 = vsel %vm86, %v3028, 0
    %v3071 = vsel %vm86, %v3029, 0
    %v3074 = vsel %vm86, %v3030, 0
    %v3077 = vsel %vm86, %v3031, 0
    %3079 = vmatprep.subr.bf16.mxu0 0
    %3080 = vmatpush1.bf16.msra.mxu0 %v3051
    %3081 = vmatprep.subr.bf16.mxu0 0
    %3082 = vmatpush1.bf16.msra.mxu0 %v3052
    %3083 = vmatprep.subr.bf16.mxu0 0
    %3084 = vmatpush1.bf16.msra.mxu0 0
    %3085 = vmatprep.subr.bf16.mxu0 0
    %3086 = vmatpush1.bf16.msra.mxu0 0
    %3087 = vmatprep.subr.bf16.mxu0 0
    %3088 = vmatpush1.bf16.msra.mxu0 0
    %3089 = vmatprep.subr.bf16.mxu0 0
    %3090 = vmatpush1.bf16.msra.mxu0 0
    %3091 = vmatprep.subr.bf16.mxu0 0
    %3092 = vmatpush1.bf16.msra.mxu0 0
    %3093 = vmatprep.subr.bf16.mxu0 0
    %3094 = vmatpush1.bf16.msra.mxu0 0
    %3095 = vmatprep.subr.bf16.mxu0 0
    %3096 = vmatpush1.bf16.msra.mxu0 0
    %3097 = vmatprep.subr.bf16.mxu0 0
    %3098 = vmatpush1.bf16.msra.mxu0 0
    %3099 = vmatprep.subr.bf16.mxu0 0
    %3100 = vmatpush1.bf16.msra.mxu0 0
    %3101 = vmatprep.subr.bf16.mxu0 0
    %3102 = vmatpush1.bf16.msra.mxu0 0
    %3103 = vmatprep.subr.bf16.mxu0 0
    %3104 = vmatpush1.bf16.msra.mxu0 0
    %3105 = vmatprep.subr.bf16.mxu0 0
    %3106 = vmatpush1.bf16.msra.mxu0 0
    %3107 = vmatprep.subr.bf16.mxu0 0
    %3108 = vmatpush1.bf16.msra.mxu0 0
    %3109 = vmatprep.subr.bf16.mxu0 0
    %3110 = vmatpush1.bf16.msra.mxu0 0
    %3111 = vmatprep.mubr.bf16.mxu0 0
    %3112 = vmatmul.mubr.bf16.gmra.mrb[0].mxu0 %v3056
    %v3113 = vpop.f32.mrb[0].mxu0
    %v3114 = vadd.f32 %v3041, %v3113
    %v3115 = vpop.f32.mrb[0].mxu0
    %v3116 = vpop.f32.mrb[0].mxu0
    %v3117 = vadd.f32 %v3041, %v3116
    %v3118 = vpop.f32.mrb[0].mxu0
    %3119 = vmatprep.mubr.bf16.mxu0 0
    %3120 = vmatmul.mubr.bf16.gmra.mrb[0].mxu0 %v3059
    %v3121 = vpop.f32.mrb[0].mxu0
    %v3122 = vadd.f32 %v3041, %v3121
    %v3123 = vpop.f32.mrb[0].mxu0
    %v3124 = vpop.f32.mrb[0].mxu0
    %v3125 = vadd.f32 %v3041, %v3124
    %v3126 = vpop.f32.mrb[0].mxu0
    %3127 = vmatprep.mubr.bf16.mxu0 0
    %3128 = vmatmul.mubr.bf16.gmra.mrb[0].mxu0 %v3062
    %v3129 = vpop.f32.mrb[0].mxu0
    %v3130 = vadd.f32 %v3041, %v3129
    %v3131 = vpop.f32.mrb[0].mxu0
    %v3132 = vpop.f32.mrb[0].mxu0
    %v3133 = vadd.f32 %v3041, %v3132
    %v3134 = vpop.f32.mrb[0].mxu0
    %3135 = vmatprep.mubr.bf16.mxu0 0
    %3136 = vmatmul.mubr.bf16.gmra.mrb[0].mxu0 %v3065
    %v3137 = vpop.f32.mrb[0].mxu0
    %v3138 = vadd.f32 %v3041, %v3137
    %v3139 = vpop.f32.mrb[0].mxu0
    %v3140 = vpop.f32.mrb[0].mxu0
    %v3141 = vadd.f32 %v3041, %v3140
    %v3142 = vpop.f32.mrb[0].mxu0
    %3143 = vmatprep.mubr.bf16.mxu0 0
    %3144 = vmatmul.mubr.bf16.gmra.mrb[0].mxu0 %v3068
    %v3145 = vpop.f32.mrb[0].mxu0
    %v3146 = vadd.f32 %v3041, %v3145
    %v3147 = vpop.f32.mrb[0].mxu0
    %v3148 = vpop.f32.mrb[0].mxu0
    %v3149 = vadd.f32 %v3041, %v3148
    %v3150 = vpop.f32.mrb[0].mxu0
    %3151 = vmatprep.mubr.bf16.mxu0 0
    %3152 = vmatmul.mubr.bf16.gmra.mrb[0].mxu0 %v3071
    %v3153 = vpop.f32.mrb[0].mxu0
    %v3154 = vadd.f32 %v3041, %v3153
    %v3155 = vpop.f32.mrb[0].mxu0
    %v3156 = vpop.f32.mrb[0].mxu0
    %v3157 = vadd.f32 %v3041, %v3156
    %v3158 = vpop.f32.mrb[0].mxu0
    %3159 = vmatprep.mubr.bf16.mxu0 0
    %3160 = vmatmul.mubr.bf16.gmra.mrb[0].mxu0 %v3074
    %v3161 = vpop.f32.mrb[0].mxu0
    %v3162 = vadd.f32 %v3041, %v3161
    %v3163 = vpop.f32.mrb[0].mxu0
    %v3164 = vpop.f32.mrb[0].mxu0
    %v3165 = vadd.f32 %v3041, %v3164
    %v3166 = vpop.f32.mrb[0].mxu0
    %3167 = vmatprep.mubr.bf16.mxu0 0
    %3168 = vmatmul.mubr.bf16.gmra.mrb[0].mxu0 %v3077
    %v3169 = vpop.f32.mrb[0].mxu0
    %v3170 = vadd.f32 %v3041, %v3169
    %v3171 = vpop.f32.mrb[0].mxu0
    %v3172 = vpop.f32.mrb[0].mxu0
    %v3173 = vadd.f32 %v3041, %v3172
    %v3174 = vpop.f32.mrb[0].mxu0
    %3175 = vdwg.mxu0
    %v3176 = vmul.f32 %v3114, 0.5
    %v3177 = vmul.f32 %v3117, 0.5
    %v3178 = vmul.f32 %v3122, 0.5
    %v3179 = vmul.f32 %v3125, 0.5
    %v3180 = vmul.f32 %v3130, 0.5
    %v3181 = vmul.f32 %v3133, 0.5
    %v3182 = vmul.f32 %v3138, 0.5
    %v3183 = vmul.f32 %v3141, 0.5
    %v3184 = vmul.f32 %v3146, 0.5
    %v3185 = vmul.f32 %v3149, 0.5
    %v3186 = vmul.f32 %v3154, 0.5
    %v3187 = vmul.f32 %v3157, 0.5
    %v3188 = vmul.f32 %v3162, 0.5
    %v3189 = vmul.f32 %v3165, 0.5
    %v3190 = vmul.f32 %v3170, 0.5
    %v3191 = vmul.f32 %v3173, 0.5
    %v3192 = vmul.f32 %v3114, 0.70710677
    %v3193 = vmul.f32 %v3117, 0.70710677
    %v3194 = vmul.f32 %v3122, 0.70710677
    %v3195 = vmul.f32 %v3125, 0.70710677
    %v3196 = vmul.f32 %v3130, 0.70710677
    %v3197 = vmul.f32 %v3133, 0.70710677
    %v3198 = vmul.f32 %v3138, 0.70710677
    %v3199 = vmul.f32 %v3141, 0.70710677
    %v3200 = vmul.f32 %v3146, 0.70710677
    %v3201 = vmul.f32 %v3149, 0.70710677
    %v3202 = vmul.f32 %v3154, 0.70710677
    %v3203 = vmul.f32 %v3157, 0.70710677
    %v3204 = vmul.f32 %v3162, 0.70710677
    %v3205 = vmul.f32 %v3165, 0.70710677
    %v3206 = vmul.f32 %v3170, 0.70710677
    %v3207 = vmul.f32 %v3173, 0.70710677
    %v3208 = verf.f32.pop %v3192
    %v3209 = verf.f32.pop %v3193
    %v3210 = verf.f32.pop %v3194
    %v3211 = verf.f32.pop %v3195
    %v3212 = verf.f32.pop %v3196
    %v3213 = verf.f32.pop %v3197
    %v3214 = verf.f32.pop %v3198
    %v3215 = verf.f32.pop %v3199
    %v3216 = verf.f32.pop %v3200
    %v3217 = verf.f32.pop %v3201
    %v3218 = verf.f32.pop %v3202
    %v3219 = verf.f32.pop %v3203
    %v3220 = verf.f32.pop %v3204
    %v3221 = verf.f32.pop %v3205
    %v3222 = verf.f32.pop %v3206
    %v3223 = verf.f32.pop %v3207
    %v3224 = vadd.f32 %v3208, 1.0
    %v3225 = vadd.f32 %v3209, 1.0
    %v3226 = vadd.f32 %v3210, 1.0
    %v3227 = vadd.f32 %v3211, 1.0
    %v3228 = vadd.f32 %v3212, 1.0
    %v3229 = vadd.f32 %v3213, 1.0
    %v3230 = vadd.f32 %v3214, 1.0
    %v3231 = vadd.f32 %v3215, 1.0
    %v3232 = vadd.f32 %v3216, 1.0
    %v3233 = vadd.f32 %v3217, 1.0
    %v3234 = vadd.f32 %v3218, 1.0
    %v3235 = vadd.f32 %v3219, 1.0
    %v3236 = vadd.f32 %v3220, 1.0
    %v3237 = vadd.f32 %v3221, 1.0
    %v3238 = vadd.f32 %v3222, 1.0
    %v3239 = vadd.f32 %v3223, 1.0
    %v3240 = vmul.f32 %v3176, %v3224
    %v3241 = vmul.f32 %v3177, %v3225
    %v3242 = vmul.f32 %v3178, %v3226
    %v3243 = vmul.f32 %v3179, %v3227
    %v3244 = vmul.f32 %v3180, %v3228
    %v3245 = vmul.f32 %v3181, %v3229
    %v3246 = vmul.f32 %v3182, %v3230
    %v3247 = vmul.f32 %v3183, %v3231
    %v3248 = vmul.f32 %v3184, %v3232
    %v3249 = vmul.f32 %v3185, %v3233
    %v3250 = vmul.f32 %v3186, %v3234
    %v3251 = vmul.f32 %v3187, %v3235
    %v3252 = vmul.f32 %v3188, %v3236
    %v3253 = vmul.f32 %v3189, %v3237
    %v3254 = vmul.f32 %v3190, %v3238
    %v3255 = vmul.f32 %v3191, %v3239
    %3256 = vst [vmem:[#allocation2] sm:$0xff] 0.0
    %3257 = vst [vmem:[#allocation2 + $0x8] sm:$0xff] 0.0
    %3258 = vst [vmem:[#allocation2 + $0x90] sm:$0xff] 0.0
    %3259 = vst [vmem:[#allocation2 + $0x98] sm:$0xff] 0.0
    %3260 = vst [vmem:[#allocation2 + $0x10] sm:$0xff] %v3240
    %3261 = vst [vmem:[#allocation2 + $0x18] sm:$0xff] %v3241
    %3262 = vst [vmem:[#allocation2 + $0x20] sm:$0xff] %v3242
    %3263 = vst [vmem:[#allocation2 + $0x28] sm:$0xff] %v3243
    %3264 = vst [vmem:[#allocation2 + $0x30] sm:$0xff] %v3244
    %3265 = vst [vmem:[#allocation2 + $0x38] sm:$0xff] %v3245
    %3266 = vst [vmem:[#allocation2 + $0x40] sm:$0xff] %v3246
    %3267 = vst [vmem:[#allocation2 + $0x48] sm:$0xff] %v3247
    %3268 = vst [vmem:[#allocation2 + $0x50] sm:$0xff] %v3248
    %3269 = vst [vmem:[#allocation2 + $0x58] sm:$0xff] %v3249
    %3270 = vst [vmem:[#allocation2 + $0x60] sm:$0xff] %v3250
    %3271 = vst [vmem:[#allocation2 + $0x68] sm:$0xff] %v3251
    %3272 = vst [vmem:[#allocation2 + $0x70] sm:$0xff] %v3252
    %3273 = vst [vmem:[#allocation2 + $0x78] sm:$0xff] %v3253
    %3274 = vst [vmem:[#allocation2 + $0x80] sm:$0xff] %v3254
    %3275 = vst [vmem:[#allocation2 + $0x88] sm:$0xff] %v3255
    %v3276 = vlaneseq
    %v3277 = vshrl.u32 %v3276, 7
    %v3278 = vadd.s32 %v3277, 8
    %v3279 = vadd.s32 %v3277, 16
    %v3280 = vadd.s32 %v3277, 24
    %v3281 = vadd.s32 %v3277, 32
    %v3282 = vadd.s32 %v3277, 40
    %v3283 = vadd.s32 %v3277, 48
    %v3284 = vadd.s32 %v3277, 56
    %v3285 = vadd.s32 %v3277, 64
    %v3286 = vadd.s32 %v3277, 72
    %v3287 = vadd.s32 %v3277, 80
    %v3288 = vadd.s32 %v3277, 88
    %v3289 = vadd.s32 %v3277, 96
    %v3290 = vadd.s32 %v3277, 104
    %v3291 = vadd.s32 %v3277, 112
    %v3292 = vadd.s32 %v3277, 120
    %v3293 = vand.u32 %v3277, 7
    %v3294 = vand.u32 %v3278, 7
    %v3295 = vand.u32 %v3279, 7
    %v3296 = vand.u32 %v3280, 7
    %v3297 = vand.u32 %v3281, 7
    %v3298 = vand.u32 %v3282, 7
    %v3299 = vand.u32 %v3283, 7
    %v3300 = vand.u32 %v3284, 7
    %v3301 = vand.u32 %v3285, 7
    %v3302 = vand.u32 %v3286, 7
    %v3303 = vand.u32 %v3287, 7
    %v3304 = vand.u32 %v3288, 7
    %v3305 = vand.u32 %v3289, 7
    %v3306 = vand.u32 %v3290, 7
    %v3307 = vand.u32 %v3291, 7
    %v3308 = vand.u32 %v3292, 7
    %v3309 = vshra.s32 %v3277, 3
    %v3310 = vshra.s32 %v3278, 3
    %v3311 = vshra.s32 %v3279, 3
    %v3312 = vshra.s32 %v3280, 3
    %v3313 = vshra.s32 %v3281, 3
    %v3314 = vshra.s32 %v3282, 3
    %v3315 = vshra.s32 %v3283, 3
    %v3316 = vshra.s32 %v3284, 3
    %v3317 = vshra.s32 %v3285, 3
    %v3318 = vshra.s32 %v3286, 3
    %v3319 = vshra.s32 %v3287, 3
    %v3320 = vshra.s32 %v3288, 3
    %v3321 = vshra.s32 %v3289, 3
    %v3322 = vshra.s32 %v3290, 3
    %v3323 = vshra.s32 %v3291, 3
    %v3324 = vshra.s32 %v3292, 3
    %v3325 = vand.u32 %v3309, 7
    %v3326 = vand.u32 %v3310, 7
    %v3327 = vand.u32 %v3311, 7
    %v3328 = vand.u32 %v3312, 7
    %v3329 = vand.u32 %v3313, 7
    %v3330 = vand.u32 %v3314, 7
    %v3331 = vand.u32 %v3315, 7
    %v3332 = vand.u32 %v3316, 7
    %v3333 = vand.u32 %v3317, 7
    %v3334 = vand.u32 %v3318, 7
    %v3335 = vand.u32 %v3319, 7
    %v3336 = vand.u32 %v3320, 7
    %v3337 = vand.u32 %v3321, 7
    %v3338 = vand.u32 %v3322, 7
    %v3339 = vand.u32 %v3323, 7
    %v3340 = vand.u32 %v3324, 7
    %v3341 = vadd.s32 %v3325, 4294967295
    %v3342 = vadd.s32 %v3326, 4294967295
    %v3343 = vadd.s32 %v3327, 4294967295
    %v3344 = vadd.s32 %v3328, 4294967295
    %v3345 = vadd.s32 %v3329, 4294967295
    %v3346 = vadd.s32 %v3330, 4294967295
    %v3347 = vadd.s32 %v3331, 4294967295
    %v3348 = vadd.s32 %v3332, 4294967295
    %v3349 = vadd.s32 %v3333, 4294967295
    %v3350 = vadd.s32 %v3334, 4294967295
    %v3351 = vadd.s32 %v3335, 4294967295
    %v3352 = vadd.s32 %v3336, 4294967295
    %v3353 = vadd.s32 %v3337, 4294967295
    %v3354 = vadd.s32 %v3338, 4294967295
    %v3355 = vadd.s32 %v3339, 4294967295
    %v3356 = vadd.s32 %v3340, 4294967295
    %vm3357 = vcmp.ge.s32.totalorder %v3341, 0
    %vm3358 = vcmp.ge.s32.totalorder %v3342, 0
    %vm3359 = vcmp.ge.s32.totalorder %v3343, 0
    %vm3360 = vcmp.ge.s32.totalorder %v3344, 0
    %vm3361 = vcmp.ge.s32.totalorder %v3345, 0
    %vm3362 = vcmp.ge.s32.totalorder %v3346, 0
    %vm3363 = vcmp.ge.s32.totalorder %v3347, 0
    %vm3364 = vcmp.ge.s32.totalorder %v3348, 0
    %vm3365 = vcmp.ge.s32.totalorder %v3349, 0
    %vm3366 = vcmp.ge.s32.totalorder %v3350, 0
    %vm3367 = vcmp.ge.s32.totalorder %v3351, 0
    %vm3368 = vcmp.ge.s32.totalorder %v3352, 0
    %vm3369 = vcmp.ge.s32.totalorder %v3353, 0
    %vm3370 = vcmp.ge.s32.totalorder %v3354, 0
    %vm3371 = vcmp.ge.s32.totalorder %v3355, 0
    %vm3372 = vcmp.ge.s32.totalorder %v3356, 0
    %vm3373 = vcmp.lt.s32.totalorder %v3341, 8
    %vm3374 = vcmp.lt.s32.totalorder %v3342, 8
    %vm3375 = vcmp.lt.s32.totalorder %v3343, 8
    %vm3376 = vcmp.lt.s32.totalorder %v3344, 8
    %vm3377 = vcmp.lt.s32.totalorder %v3345, 8
    %vm3378 = vcmp.lt.s32.totalorder %v3346, 8
    %vm3379 = vcmp.lt.s32.totalorder %v3347, 8
    %vm3380 = vcmp.lt.s32.totalorder %v3348, 8
    %vm3381 = vcmp.lt.s32.totalorder %v3349, 8
    %vm3382 = vcmp.lt.s32.totalorder %v3350, 8
    %vm3383 = vcmp.lt.s32.totalorder %v3351, 8
    %vm3384 = vcmp.lt.s32.totalorder %v3352, 8
    %vm3385 = vcmp.lt.s32.totalorder %v3353, 8
    %vm3386 = vcmp.lt.s32.totalorder %v3354, 8
    %vm3387 = vcmp.lt.s32.totalorder %v3355, 8
    %vm3388 = vcmp.lt.s32.totalorder %v3356, 8
    %vm3389 = vmand %vm3357, %vm3373
    %vm3390 = vmand %vm3358, %vm3374
    %vm3391 = vmand %vm3359, %vm3375
    %vm3392 = vmand %vm3360, %vm3376
    %vm3393 = vmand %vm3361, %vm3377
    %vm3394 = vmand %vm3362, %vm3378
    %vm3395 = vmand %vm3363, %vm3379
    %vm3396 = vmand %vm3364, %vm3380
    %vm3397 = vmand %vm3365, %vm3381
    %vm3398 = vmand %vm3366, %vm3382
    %vm3399 = vmand %vm3367, %vm3383
    %vm3400 = vmand %vm3368, %vm3384
    %vm3401 = vmand %vm3369, %vm3385
    %vm3402 = vmand %vm3370, %vm3386
    %vm3403 = vmand %vm3371, %vm3387
    %vm3404 = vmand %vm3372, %vm3388
    %v3405 = vadd.s32 %v3293, 4294967295
    %v3406 = vadd.s32 %v3294, 4294967295
    %v3407 = vadd.s32 %v3295, 4294967295
    %v3408 = vadd.s32 %v3296, 4294967295
    %v3409 = vadd.s32 %v3297, 4294967295
    %v3410 = vadd.s32 %v3298, 4294967295
    %v3411 = vadd.s32 %v3299, 4294967295
    %v3412 = vadd.s32 %v3300, 4294967295
    %v3413 = vadd.s32 %v3301, 4294967295
    %v3414 = vadd.s32 %v3302, 4294967295
    %v3415 = vadd.s32 %v3303, 4294967295
    %v3416 = vadd.s32 %v3304, 4294967295
    %v3417 = vadd.s32 %v3305, 4294967295
    %v3418 = vadd.s32 %v3306, 4294967295
    %v3419 = vadd.s32 %v3307, 4294967295
    %v3420 = vadd.s32 %v3308, 4294967295
    %vm3421 = vcmp.ge.s32.totalorder %v3405, 0
    %vm3422 = vcmp.ge.s32.totalorder %v3406, 0
    %vm3423 = vcmp.ge.s32.totalorder %v3407, 0
    %vm3424 = vcmp.ge.s32.totalorder %v3408, 0
    %vm3425 = vcmp.ge.s32.totalorder %v3409, 0
    %vm3426 = vcmp.ge.s32.totalorder %v3410, 0
    %vm3427 = vcmp.ge.s32.totalorder %v3411, 0
    %vm3428 = vcmp.ge.s32.totalorder %v3412, 0
    %vm3429 = vcmp.ge.s32.totalorder %v3413, 0
    %vm3430 = vcmp.ge.s32.totalorder %v3414, 0
    %vm3431 = vcmp.ge.s32.totalorder %v3415, 0
    %vm3432 = vcmp.ge.s32.totalorder %v3416, 0
    %vm3433 = vcmp.ge.s32.totalorder %v3417, 0
    %vm3434 = vcmp.ge.s32.totalorder %v3418, 0
    %vm3435 = vcmp.ge.s32.totalorder %v3419, 0
    %vm3436 = vcmp.ge.s32.totalorder %v3420, 0
    %vm3437 = vcmp.lt.s32.totalorder %v3405, 8
    %vm3438 = vcmp.lt.s32.totalorder %v3406, 8
    %vm3439 = vcmp.lt.s32.totalorder %v3407, 8
    %vm3440 = vcmp.lt.s32.totalorder %v3408, 8
    %vm3441 = vcmp.lt.s32.totalorder %v3409, 8
    %vm3442 = vcmp.lt.s32.totalorder %v3410, 8
    %vm3443 = vcmp.lt.s32.totalorder %v3411, 8
    %vm3444 = vcmp.lt.s32.totalorder %v3412, 8
    %vm3445 = vcmp.lt.s32.totalorder %v3413, 8
    %vm3446 = vcmp.lt.s32.totalorder %v3414, 8
    %vm3447 = vcmp.lt.s32.totalorder %v3415, 8
    %vm3448 = vcmp.lt.s32.totalorder %v3416, 8
    %vm3449 = vcmp.lt.s32.totalorder %v3417, 8
    %vm3450 = vcmp.lt.s32.totalorder %v3418, 8
    %vm3451 = vcmp.lt.s32.totalorder %v3419, 8
    %vm3452 = vcmp.lt.s32.totalorder %v3420, 8
    %vm3453 = vmand %vm3421, %vm3437
    %vm3454 = vmand %vm3422, %vm3438
    %vm3455 = vmand %vm3423, %vm3439
    %vm3456 = vmand %vm3424, %vm3440
    %vm3457 = vmand %vm3425, %vm3441
    %vm3458 = vmand %vm3426, %vm3442
    %vm3459 = vmand %vm3427, %vm3443
    %vm3460 = vmand %vm3428, %vm3444
    %vm3461 = vmand %vm3429, %vm3445
    %vm3462 = vmand %vm3430, %vm3446
    %vm3463 = vmand %vm3431, %vm3447
    %vm3464 = vmand %vm3432, %vm3448
    %vm3465 = vmand %vm3433, %vm3449
    %vm3466 = vmand %vm3434, %vm3450
    %vm3467 = vmand %vm3435, %vm3451
    %vm3468 = vmand %vm3436, %vm3452
    %vm3469 = vmand %vm3389, %vm3453
    %vm3470 = vmand %vm3390, %vm3454
    %vm3471 = vmand %vm3391, %vm3455
    %vm3472 = vmand %vm3392, %vm3456
    %vm3473 = vmand %vm3393, %vm3457
    %vm3474 = vmand %vm3394, %vm3458
    %vm3475 = vmand %vm3395, %vm3459
    %vm3476 = vmand %vm3396, %vm3460
    %vm3477 = vmand %vm3397, %vm3461
    %vm3478 = vmand %vm3398, %vm3462
    %vm3479 = vmand %vm3399, %vm3463
    %vm3480 = vmand %vm3400, %vm3464
    %vm3481 = vmand %vm3401, %vm3465
    %vm3482 = vmand %vm3402, %vm3466
    %vm3483 = vmand %vm3403, %vm3467
    %vm3484 = vmand %vm3404, %vm3468
    %v3485 = vld [vmem:[#allocation2 + $0x7] sm:$0xff]
    %v3486 = vld [vmem:[#allocation2 + $0xf] sm:$0xff]
    %v3487 = vld [vmem:[#allocation2 + $0x17] sm:$0xff]
    %v3488 = vld [vmem:[#allocation2 + $0x1f] sm:$0xff]
    %v3489 = vld [vmem:[#allocation2 + $0x27] sm:$0xff]
    %v3490 = vld [vmem:[#allocation2 + $0x2f] sm:$0xff]
    %v3491 = vld [vmem:[#allocation2 + $0x37] sm:$0xff]
    %v3492 = vld [vmem:[#allocation2 + $0x3f] sm:$0xff]
    %v3493 = vld [vmem:[#allocation2 + $0x47] sm:$0xff]
    %v3494 = vld [vmem:[#allocation2 + $0x4f] sm:$0xff]
    %v3495 = vld [vmem:[#allocation2 + $0x57] sm:$0xff]
    %v3496 = vld [vmem:[#allocation2 + $0x5f] sm:$0xff]
    %v3497 = vld [vmem:[#allocation2 + $0x67] sm:$0xff]
    %v3498 = vld [vmem:[#allocation2 + $0x6f] sm:$0xff]
    %v3499 = vld [vmem:[#allocation2 + $0x77] sm:$0xff]
    %v3500 = vld [vmem:[#allocation2 + $0x7f] sm:$0xff]
    %v3501 = vld [vmem:[%s12] sm:$0x1]
    %v3502 = vsel %vm3469, 1, 0
    %v3503 = vsel %vm3470, 1, 0
    %v3504 = vsel %vm3471, 1, 0
    %v3505 = vsel %vm3472, 1, 0
    %v3506 = vsel %vm3473, 1, 0
    %v3507 = vsel %vm3474, 1, 0
    %v3508 = vsel %vm3475, 1, 0
    %v3509 = vsel %vm3476, 1, 0
    %v3510 = vsel %vm3477, 1, 0
    %v3511 = vsel %vm3478, 1, 0
    %v3512 = vsel %vm3479, 1, 0
    %v3513 = vsel %vm3480, 1, 0
    %v3514 = vsel %vm3481, 1, 0
    %v3515 = vsel %vm3482, 1, 0
    %v3516 = vsel %vm3483, 1, 0
    %v3517 = vsel %vm3484, 1, 0
    %vm3518 = vcmp.eq.s32.totalorder %v3502, 1
    %vm3519 = vcmp.eq.s32.totalorder %v3503, 1
    %vm3520 = vcmp.eq.s32.totalorder %v3504, 1
    %vm3521 = vcmp.eq.s32.totalorder %v3505, 1
    %vm3522 = vcmp.eq.s32.totalorder %v3506, 1
    %vm3523 = vcmp.eq.s32.totalorder %v3507, 1
    %vm3524 = vcmp.eq.s32.totalorder %v3508, 1
    %vm3525 = vcmp.eq.s32.totalorder %v3509, 1
    %vm3526 = vcmp.eq.s32.totalorder %v3510, 1
    %vm3527 = vcmp.eq.s32.totalorder %v3511, 1
    %vm3528 = vcmp.eq.s32.totalorder %v3512, 1
    %vm3529 = vcmp.eq.s32.totalorder %v3513, 1
    %vm3530 = vcmp.eq.s32.totalorder %v3514, 1
    %vm3531 = vcmp.eq.s32.totalorder %v3515, 1
    %vm3532 = vcmp.eq.s32.totalorder %v3516, 1
    %vm3533 = vcmp.eq.s32.totalorder %v3517, 1
    %v3534 = vsel %vm3518, %v3485, 0.0
    %v3535 = vsel %vm3519, %v3486, 0.0
    %v3536 = vsel %vm3520, %v3487, 0.0
    %v3537 = vsel %vm3521, %v3488, 0.0
    %v3538 = vsel %vm3522, %v3489, 0.0
    %v3539 = vsel %vm3523, %v3490, 0.0
    %v3540 = vsel %vm3524, %v3491, 0.0
    %v3541 = vsel %vm3525, %v3492, 0.0
    %v3542 = vsel %vm3526, %v3493, 0.0
    %v3543 = vsel %vm3527, %v3494, 0.0
    %v3544 = vsel %vm3528, %v3495, 0.0
    %v3545 = vsel %vm3529, %v3496, 0.0
    %v3546 = vsel %vm3530, %v3497, 0.0
    %v3547 = vsel %vm3531, %v3498, 0.0
    %v3548 = vsel %vm3532, %v3499, 0.0
    %v3549 = vsel %vm3533, %v3500, 0.0
    %v3550 = vlaneseq
    %v3551 = vshrl.u32 %v3550, 7
    %v3552 = vsub.s32 0, %v3551
    %v3553 = vrot.slane %v3501, %v3552
    %v3554 = vmul.f32 %v3534, %v3553
    %v3555 = vmul.f32 %v3535, %v3553
    %v3556 = vmul.f32 %v3536, %v3553
    %v3557 = vmul.f32 %v3537, %v3553
    %v3558 = vmul.f32 %v3538, %v3553
    %v3559 = vmul.f32 %v3539, %v3553
    %v3560 = vmul.f32 %v3540, %v3553
    %v3561 = vmul.f32 %v3541, %v3553
    %v3562 = vmul.f32 %v3542, %v3553
    %v3563 = vmul.f32 %v3543, %v3553
    %v3564 = vmul.f32 %v3544, %v3553
    %v3565 = vmul.f32 %v3545, %v3553
    %v3566 = vmul.f32 %v3546, %v3553
    %v3567 = vmul.f32 %v3547, %v3553
    %v3568 = vmul.f32 %v3548, %v3553
    %v3569 = vmul.f32 %v3549, %v3553
    %v3570 = vadd.f32 %v3554, 0.0
    %v3571 = vadd.f32 %v3555, 0.0
    %v3572 = vadd.f32 %v3556, 0.0
    %v3573 = vadd.f32 %v3557, 0.0
    %v3574 = vadd.f32 %v3558, 0.0
    %v3575 = vadd.f32 %v3559, 0.0
    %v3576 = vadd.f32 %v3560, 0.0
    %v3577 = vadd.f32 %v3561, 0.0
    %v3578 = vadd.f32 %v3562, 0.0
    %v3579 = vadd.f32 %v3563, 0.0
    %v3580 = vadd.f32 %v3564, 0.0
    %v3581 = vadd.f32 %v3565, 0.0
    %v3582 = vadd.f32 %v3566, 0.0
    %v3583 = vadd.f32 %v3567, 0.0
    %v3584 = vadd.f32 %v3568, 0.0
    %v3585 = vadd.f32 %v3569, 0.0
    %vm3586 = vcmp.ge.s32.totalorder %v3293, 0
    %vm3587 = vcmp.ge.s32.totalorder %v3294, 0
    %vm3588 = vcmp.ge.s32.totalorder %v3295, 0
    %vm3589 = vcmp.ge.s32.totalorder %v3296, 0
    %vm3590 = vcmp.ge.s32.totalorder %v3297, 0
    %vm3591 = vcmp.ge.s32.totalorder %v3298, 0
    %vm3592 = vcmp.ge.s32.totalorder %v3299, 0
    %vm3593 = vcmp.ge.s32.totalorder %v3300, 0
    %vm3594 = vcmp.ge.s32.totalorder %v3301, 0
    %vm3595 = vcmp.ge.s32.totalorder %v3302, 0
    %vm3596 = vcmp.ge.s32.totalorder %v3303, 0
    %vm3597 = vcmp.ge.s32.totalorder %v3304, 0
    %vm3598 = vcmp.ge.s32.totalorder %v3305, 0
    %vm3599 = vcmp.ge.s32.totalorder %v3306, 0
    %vm3600 = vcmp.ge.s32.totalorder %v3307, 0
    %vm3601 = vcmp.ge.s32.totalorder %v3308, 0
    %vm3602 = vcmp.lt.s32.totalorder %v3293, 8
    %vm3603 = vcmp.lt.s32.totalorder %v3294, 8
    %vm3604 = vcmp.lt.s32.totalorder %v3295, 8
    %vm3605 = vcmp.lt.s32.totalorder %v3296, 8
    %vm3606 = vcmp.lt.s32.totalorder %v3297, 8
    %vm3607 = vcmp.lt.s32.totalorder %v3298, 8
    %vm3608 = vcmp.lt.s32.totalorder %v3299, 8
    %vm3609 = vcmp.lt.s32.totalorder %v3300, 8
    %vm3610 = vcmp.lt.s32.totalorder %v3301, 8
    %vm3611 = vcmp.lt.s32.totalorder %v3302, 8
    %vm3612 = vcmp.lt.s32.totalorder %v3303, 8
    %vm3613 = vcmp.lt.s32.totalorder %v3304, 8
    %vm3614 = vcmp.lt.s32.totalorder %v3305, 8
    %vm3615 = vcmp.lt.s32.totalorder %v3306, 8
    %vm3616 = vcmp.lt.s32.totalorder %v3307, 8
    %vm3617 = vcmp.lt.s32.totalorder %v3308, 8
    %vm3618 = vmand %vm3586, %vm3602
    %vm3619 = vmand %vm3587, %vm3603
    %vm3620 = vmand %vm3588, %vm3604
    %vm3621 = vmand %vm3589, %vm3605
    %vm3622 = vmand %vm3590, %vm3606
    %vm3623 = vmand %vm3591, %vm3607
    %vm3624 = vmand %vm3592, %vm3608
    %vm3625 = vmand %vm3593, %vm3609
    %vm3626 = vmand %vm3594, %vm3610
    %vm3627 = vmand %vm3595, %vm3611
    %vm3628 = vmand %vm3596, %vm3612
    %vm3629 = vmand %vm3597, %vm3613
    %vm3630 = vmand %vm3598, %vm3614
    %vm3631 = vmand %vm3599, %vm3615
    %vm3632 = vmand %vm3600, %vm3616
    %vm3633 = vmand %vm3601, %vm3617
    %vm3634 = vmand %vm3389, %vm3618
    %vm3635 = vmand %vm3390, %vm3619
    %vm3636 = vmand %vm3391, %vm3620
    %vm3637 = vmand %vm3392, %vm3621
    %vm3638 = vmand %vm3393, %vm3622
    %vm3639 = vmand %vm3394, %vm3623
    %vm3640 = vmand %vm3395, %vm3624
    %vm3641 = vmand %vm3396, %vm3625
    %vm3642 = vmand %vm3397, %vm3626
    %vm3643 = vmand %vm3398, %vm3627
    %vm3644 = vmand %vm3399, %vm3628
    %vm3645 = vmand %vm3400, %vm3629
    %vm3646 = vmand %vm3401, %vm3630
    %vm3647 = vmand %vm3402, %vm3631
    %vm3648 = vmand %vm3403, %vm3632
    %vm3649 = vmand %vm3404, %vm3633
    %v3650 = vld [vmem:[#allocation2 + $0x8] sm:$0xff]
    %v3651 = vld [vmem:[#allocation2 + $0x10] sm:$0xff]
    %v3652 = vld [vmem:[#allocation2 + $0x18] sm:$0xff]
    %v3653 = vld [vmem:[#allocation2 + $0x20] sm:$0xff]
    %v3654 = vld [vmem:[#allocation2 + $0x28] sm:$0xff]
    %v3655 = vld [vmem:[#allocation2 + $0x30] sm:$0xff]
    %v3656 = vld [vmem:[#allocation2 + $0x38] sm:$0xff]
    %v3657 = vld [vmem:[#allocation2 + $0x40] sm:$0xff]
    %v3658 = vld [vmem:[#allocation2 + $0x48] sm:$0xff]
    %v3659 = vld [vmem:[#allocation2 + $0x50] sm:$0xff]
    %v3660 = vld [vmem:[#allocation2 + $0x58] sm:$0xff]
    %v3661 = vld [vmem:[#allocation2 + $0x60] sm:$0xff]
    %v3662 = vld [vmem:[#allocation2 + $0x68] sm:$0xff]
    %v3663 = vld [vmem:[#allocation2 + $0x70] sm:$0xff]
    %v3664 = vld [vmem:[#allocation2 + $0x78] sm:$0xff]
    %v3665 = vld [vmem:[#allocation2 + $0x80] sm:$0xff]
    %v3666 = vld [vmem:[%s12 + $0x1] sm:$0x1]
    %v3667 = vsel %vm3634, 1, 0
    %v3668 = vsel %vm3635, 1, 0
    %v3669 = vsel %vm3636, 1, 0
    %v3670 = vsel %vm3637, 1, 0
    %v3671 = vsel %vm3638, 1, 0
    %v3672 = vsel %vm3639, 1, 0
    %v3673 = vsel %vm3640, 1, 0
    %v3674 = vsel %vm3641, 1, 0
    %v3675 = vsel %vm3642, 1, 0
    %v3676 = vsel %vm3643, 1, 0
    %v3677 = vsel %vm3644, 1, 0
    %v3678 = vsel %vm3645, 1, 0
    %v3679 = vsel %vm3646, 1, 0
    %v3680 = vsel %vm3647, 1, 0
    %v3681 = vsel %vm3648, 1, 0
    %v3682 = vsel %vm3649, 1, 0
    %vm3683 = vcmp.eq.s32.totalorder %v3667, 1
    %vm3684 = vcmp.eq.s32.totalorder %v3668, 1
    %vm3685 = vcmp.eq.s32.totalorder %v3669, 1
    %vm3686 = vcmp.eq.s32.totalorder %v3670, 1
    %vm3687 = vcmp.eq.s32.totalorder %v3671, 1
    %vm3688 = vcmp.eq.s32.totalorder %v3672, 1
    %vm3689 = vcmp.eq.s32.totalorder %v3673, 1
    %vm3690 = vcmp.eq.s32.totalorder %v3674, 1
    %vm3691 = vcmp.eq.s32.totalorder %v3675, 1
    %vm3692 = vcmp.eq.s32.totalorder %v3676, 1
    %vm3693 = vcmp.eq.s32.totalorder %v3677, 1
    %vm3694 = vcmp.eq.s32.totalorder %v3678, 1
    %vm3695 = vcmp.eq.s32.totalorder %v3679, 1
    %vm3696 = vcmp.eq.s32.totalorder %v3680, 1
    %vm3697 = vcmp.eq.s32.totalorder %v3681, 1
    %vm3698 = vcmp.eq.s32.totalorder %v3682, 1
    %v3699 = vsel %vm3683, %v3650, 0.0
    %v3700 = vsel %vm3684, %v3651, 0.0
    %v3701 = vsel %vm3685, %v3652, 0.0
    %v3702 = vsel %vm3686, %v3653, 0.0
    %v3703 = vsel %vm3687, %v3654, 0.0
    %v3704 = vsel %vm3688, %v3655, 0.0
    %v3705 = vsel %vm3689, %v3656, 0.0
    %v3706 = vsel %vm3690, %v3657, 0.0
    %v3707 = vsel %vm3691, %v3658, 0.0
    %v3708 = vsel %vm3692, %v3659, 0.0
    %v3709 = vsel %vm3693, %v3660, 0.0
    %v3710 = vsel %vm3694, %v3661, 0.0
    %v3711 = vsel %vm3695, %v3662, 0.0
    %v3712 = vsel %vm3696, %v3663, 0.0
    %v3713 = vsel %vm3697, %v3664, 0.0
    %v3714 = vsel %vm3698, %v3665, 0.0
    %v3715 = vlaneseq
    %v3716 = vshrl.u32 %v3715, 7
    %v3717 = vsub.s32 0, %v3716
    %v3718 = vrot.slane %v3666, %v3717
    %v3719 = vmul.f32 %v3699, %v3718
    %v3720 = vmul.f32 %v3700, %v3718
    %v3721 = vmul.f32 %v3701, %v3718
    %v3722 = vmul.f32 %v3702, %v3718
    %v3723 = vmul.f32 %v3703, %v3718
    %v3724 = vmul.f32 %v3704, %v3718
    %v3725 = vmul.f32 %v3705, %v3718
    %v3726 = vmul.f32 %v3706, %v3718
    %v3727 = vmul.f32 %v3707, %v3718
    %v3728 = vmul.f32 %v3708, %v3718
    %v3729 = vmul.f32 %v3709, %v3718
    %v3730 = vmul.f32 %v3710, %v3718
    %v3731 = vmul.f32 %v3711, %v3718
    %v3732 = vmul.f32 %v3712, %v3718
    %v3733 = vmul.f32 %v3713, %v3718
    %v3734 = vmul.f32 %v3714, %v3718
    %v3735 = vadd.f32 %v3570, %v3719
    %v3736 = vadd.f32 %v3571, %v3720
    %v3737 = vadd.f32 %v3572, %v3721
    %v3738 = vadd.f32 %v3573, %v3722
    %v3739 = vadd.f32 %v3574, %v3723
    %v3740 = vadd.f32 %v3575, %v3724
    %v3741 = vadd.f32 %v3576, %v3725
    %v3742 = vadd.f32 %v3577, %v3726
    %v3743 = vadd.f32 %v3578, %v3727
    %v3744 = vadd.f32 %v3579, %v3728
    %v3745 = vadd.f32 %v3580, %v3729
    %v3746 = vadd.f32 %v3581, %v3730
    %v3747 = vadd.f32 %v3582, %v3731
    %v3748 = vadd.f32 %v3583, %v3732
    %v3749 = vadd.f32 %v3584, %v3733
    %v3750 = vadd.f32 %v3585, %v3734
    %v3751 = vadd.s32 %v3293, 1
    %v3752 = vadd.s32 %v3294, 1
    %v3753 = vadd.s32 %v3295, 1
    %v3754 = vadd.s32 %v3296, 1
    %v3755 = vadd.s32 %v3297, 1
    %v3756 = vadd.s32 %v3298, 1
    %v3757 = vadd.s32 %v3299, 1
    %v3758 = vadd.s32 %v3300, 1
    %v3759 = vadd.s32 %v3301, 1
    %v3760 = vadd.s32 %v3302, 1
    %v3761 = vadd.s32 %v3303, 1
    %v3762 = vadd.s32 %v3304, 1
    %v3763 = vadd.s32 %v3305, 1
    %v3764 = vadd.s32 %v3306, 1
    %v3765 = vadd.s32 %v3307, 1
    %v3766 = vadd.s32 %v3308, 1
    %vm3767 = vcmp.ge.s32.totalorder %v3751, 0
    %vm3768 = vcmp.ge.s32.totalorder %v3752, 0
    %vm3769 = vcmp.ge.s32.totalorder %v3753, 0
    %vm3770 = vcmp.ge.s32.totalorder %v3754, 0
    %vm3771 = vcmp.ge.s32.totalorder %v3755, 0
    %vm3772 = vcmp.ge.s32.totalorder %v3756, 0
    %vm3773 = vcmp.ge.s32.totalorder %v3757, 0
    %vm3774 = vcmp.ge.s32.totalorder %v3758, 0
    %vm3775 = vcmp.ge.s32.totalorder %v3759, 0
    %vm3776 = vcmp.ge.s32.totalorder %v3760, 0
    %vm3777 = vcmp.ge.s32.totalorder %v3761, 0
    %vm3778 = vcmp.ge.s32.totalorder %v3762, 0
    %vm3779 = vcmp.ge.s32.totalorder %v3763, 0
    %vm3780 = vcmp.ge.s32.totalorder %v3764, 0
    %vm3781 = vcmp.ge.s32.totalorder %v3765, 0
    %vm3782 = vcmp.ge.s32.totalorder %v3766, 0
    %vm3783 = vcmp.lt.s32.totalorder %v3751, 8
    %vm3784 = vcmp.lt.s32.totalorder %v3752, 8
    %vm3785 = vcmp.lt.s32.totalorder %v3753, 8
    %vm3786 = vcmp.lt.s32.totalorder %v3754, 8
    %vm3787 = vcmp.lt.s32.totalorder %v3755, 8
    %vm3788 = vcmp.lt.s32.totalorder %v3756, 8
    %vm3789 = vcmp.lt.s32.totalorder %v3757, 8
    %vm3790 = vcmp.lt.s32.totalorder %v3758, 8
    %vm3791 = vcmp.lt.s32.totalorder %v3759, 8
    %vm3792 = vcmp.lt.s32.totalorder %v3760, 8
    %vm3793 = vcmp.lt.s32.totalorder %v3761, 8
    %vm3794 = vcmp.lt.s32.totalorder %v3762, 8
    %vm3795 = vcmp.lt.s32.totalorder %v3763, 8
    %vm3796 = vcmp.lt.s32.totalorder %v3764, 8
    %vm3797 = vcmp.lt.s32.totalorder %v3765, 8
    %vm3798 = vcmp.lt.s32.totalorder %v3766, 8
    %vm3799 = vmand %vm3767, %vm3783
    %vm3800 = vmand %vm3768, %vm3784
    %vm3801 = vmand %vm3769, %vm3785
    %vm3802 = vmand %vm3770, %vm3786
    %vm3803 = vmand %vm3771, %vm3787
    %vm3804 = vmand %vm3772, %vm3788
    %vm3805 = vmand %vm3773, %vm3789
    %vm3806 = vmand %vm3774, %vm3790
    %vm3807 = vmand %vm3775, %vm3791
    %vm3808 = vmand %vm3776, %vm3792
    %vm3809 = vmand %vm3777, %vm3793
    %vm3810 = vmand %vm3778, %vm3794
    %vm3811 = vmand %vm3779, %vm3795
    %vm3812 = vmand %vm3780, %vm3796
    %vm3813 = vmand %vm3781, %vm3797
    %vm3814 = vmand %vm3782, %vm3798
    %vm3815 = vmand %vm3389, %vm3799
    %vm3816 = vmand %vm3390, %vm3800
    %vm3817 = vmand %vm3391, %vm3801
    %vm3818 = vmand %vm3392, %vm3802
    %vm3819 = vmand %vm3393, %vm3803
    %vm3820 = vmand %vm3394, %vm3804
    %vm3821 = vmand %vm3395, %vm3805
    %vm3822 = vmand %vm3396, %vm3806
    %vm3823 = vmand %vm3397, %vm3807
    %vm3824 = vmand %vm3398, %vm3808
    %vm3825 = vmand %vm3399, %vm3809
    %vm3826 = vmand %vm3400, %vm3810
    %vm3827 = vmand %vm3401, %vm3811
    %vm3828 = vmand %vm3402, %vm3812
    %vm3829 = vmand %vm3403, %vm3813
    %vm3830 = vmand %vm3404, %vm3814
    %v3831 = vld [vmem:[#allocation2 + $0x9] sm:$0xff]
    %v3832 = vld [vmem:[#allocation2 + $0x11] sm:$0xff]
    %v3833 = vld [vmem:[#allocation2 + $0x19] sm:$0xff]
    %v3834 = vld [vmem:[#allocation2 + $0x21] sm:$0xff]
    %v3835 = vld [vmem:[#allocation2 + $0x29] sm:$0xff]
    %v3836 = vld [vmem:[#allocation2 + $0x31] sm:$0xff]
    %v3837 = vld [vmem:[#allocation2 + $0x39] sm:$0xff]
    %v3838 = vld [vmem:[#allocation2 + $0x41] sm:$0xff]
    %v3839 = vld [vmem:[#allocation2 + $0x49] sm:$0xff]
    %v3840 = vld [vmem:[#allocation2 + $0x51] sm:$0xff]
    %v3841 = vld [vmem:[#allocation2 + $0x59] sm:$0xff]
    %v3842 = vld [vmem:[#allocation2 + $0x61] sm:$0xff]
    %v3843 = vld [vmem:[#allocation2 + $0x69] sm:$0xff]
    %v3844 = vld [vmem:[#allocation2 + $0x71] sm:$0xff]
    %v3845 = vld [vmem:[#allocation2 + $0x79] sm:$0xff]
    %v3846 = vld [vmem:[#allocation2 + $0x81] sm:$0xff]
    %v3847 = vld [vmem:[%s12 + $0x2] sm:$0x1]
    %v3848 = vsel %vm3815, 1, 0
    %v3849 = vsel %vm3816, 1, 0
    %v3850 = vsel %vm3817, 1, 0
    %v3851 = vsel %vm3818, 1, 0
    %v3852 = vsel %vm3819, 1, 0
    %v3853 = vsel %vm3820, 1, 0
    %v3854 = vsel %vm3821, 1, 0
    %v3855 = vsel %vm3822, 1, 0
    %v3856 = vsel %vm3823, 1, 0
    %v3857 = vsel %vm3824, 1, 0
    %v3858 = vsel %vm3825, 1, 0
    %v3859 = vsel %vm3826, 1, 0
    %v3860 = vsel %vm3827, 1, 0
    %v3861 = vsel %vm3828, 1, 0
    %v3862 = vsel %vm3829, 1, 0
    %v3863 = vsel %vm3830, 1, 0
    %vm3864 = vcmp.eq.s32.totalorder %v3848, 1
    %vm3865 = vcmp.eq.s32.totalorder %v3849, 1
    %vm3866 = vcmp.eq.s32.totalorder %v3850, 1
    %vm3867 = vcmp.eq.s32.totalorder %v3851, 1
    %vm3868 = vcmp.eq.s32.totalorder %v3852, 1
    %vm3869 = vcmp.eq.s32.totalorder %v3853, 1
    %vm3870 = vcmp.eq.s32.totalorder %v3854, 1
    %vm3871 = vcmp.eq.s32.totalorder %v3855, 1
    %vm3872 = vcmp.eq.s32.totalorder %v3856, 1
    %vm3873 = vcmp.eq.s32.totalorder %v3857, 1
    %vm3874 = vcmp.eq.s32.totalorder %v3858, 1
    %vm3875 = vcmp.eq.s32.totalorder %v3859, 1
    %vm3876 = vcmp.eq.s32.totalorder %v3860, 1
    %vm3877 = vcmp.eq.s32.totalorder %v3861, 1
    %vm3878 = vcmp.eq.s32.totalorder %v3862, 1
    %vm3879 = vcmp.eq.s32.totalorder %v3863, 1
    %v3880 = vsel %vm3864, %v3831, 0.0
    %v3881 = vsel %vm3865, %v3832, 0.0
    %v3882 = vsel %vm3866, %v3833, 0.0
    %v3883 = vsel %vm3867, %v3834, 0.0
    %v3884 = vsel %vm3868, %v3835, 0.0
    %v3885 = vsel %vm3869, %v3836, 0.0
    %v3886 = vsel %vm3870, %v3837, 0.0
    %v3887 = vsel %vm3871, %v3838, 0.0
    %v3888 = vsel %vm3872, %v3839, 0.0
    %v3889 = vsel %vm3873, %v3840, 0.0
    %v3890 = vsel %vm3874, %v3841, 0.0
    %v3891 = vsel %vm3875, %v3842, 0.0
    %v3892 = vsel %vm3876, %v3843, 0.0
    %v3893 = vsel %vm3877, %v3844, 0.0
    %v3894 = vsel %vm3878, %v3845, 0.0
    %v3895 = vsel %vm3879, %v3846, 0.0
    %v3896 = vlaneseq
    %v3897 = vshrl.u32 %v3896, 7
    %v3898 = vsub.s32 0, %v3897
    %v3899 = vrot.slane %v3847, %v3898
    %v3900 = vmul.f32 %v3880, %v3899
    %v3901 = vmul.f32 %v3881, %v3899
    %v3902 = vmul.f32 %v3882, %v3899
    %v3903 = vmul.f32 %v3883, %v3899
    %v3904 = vmul.f32 %v3884, %v3899
    %v3905 = vmul.f32 %v3885, %v3899
    %v3906 = vmul.f32 %v3886, %v3899
    %v3907 = vmul.f32 %v3887, %v3899
    %v3908 = vmul.f32 %v3888, %v3899
    %v3909 = vmul.f32 %v3889, %v3899
    %v3910 = vmul.f32 %v3890, %v3899
    %v3911 = vmul.f32 %v3891, %v3899
    %v3912 = vmul.f32 %v3892, %v3899
    %v3913 = vmul.f32 %v3893, %v3899
    %v3914 = vmul.f32 %v3894, %v3899
    %v3915 = vmul.f32 %v3895, %v3899
    %v3916 = vadd.f32 %v3735, %v3900
    %v3917 = vadd.f32 %v3736, %v3901
    %v3918 = vadd.f32 %v3737, %v3902
    %v3919 = vadd.f32 %v3738, %v3903
    %v3920 = vadd.f32 %v3739, %v3904
    %v3921 = vadd.f32 %v3740, %v3905
    %v3922 = vadd.f32 %v3741, %v3906
    %v3923 = vadd.f32 %v3742, %v3907
    %v3924 = vadd.f32 %v3743, %v3908
    %v3925 = vadd.f32 %v3744, %v3909
    %v3926 = vadd.f32 %v3745, %v3910
    %v3927 = vadd.f32 %v3746, %v3911
    %v3928 = vadd.f32 %v3747, %v3912
    %v3929 = vadd.f32 %v3748, %v3913
    %v3930 = vadd.f32 %v3749, %v3914
    %v3931 = vadd.f32 %v3750, %v3915
    %vm3932 = vcmp.ge.s32.totalorder %v3325, 0
    %vm3933 = vcmp.ge.s32.totalorder %v3326, 0
    %vm3934 = vcmp.ge.s32.totalorder %v3327, 0
    %vm3935 = vcmp.ge.s32.totalorder %v3328, 0
    %vm3936 = vcmp.ge.s32.totalorder %v3329, 0
    %vm3937 = vcmp.ge.s32.totalorder %v3330, 0
    %vm3938 = vcmp.ge.s32.totalorder %v3331, 0
    %vm3939 = vcmp.ge.s32.totalorder %v3332, 0
    %vm3940 = vcmp.ge.s32.totalorder %v3333, 0
    %vm3941 = vcmp.ge.s32.totalorder %v3334, 0
    %vm3942 = vcmp.ge.s32.totalorder %v3335, 0
    %vm3943 = vcmp.ge.s32.totalorder %v3336, 0
    %vm3944 = vcmp.ge.s32.totalorder %v3337, 0
    %vm3945 = vcmp.ge.s32.totalorder %v3338, 0
    %vm3946 = vcmp.ge.s32.totalorder %v3339, 0
    %vm3947 = vcmp.ge.s32.totalorder %v3340, 0
    %vm3948 = vcmp.lt.s32.totalorder %v3325, 8
    %vm3949 = vcmp.lt.s32.totalorder %v3326, 8
    %vm3950 = vcmp.lt.s32.totalorder %v3327, 8
    %vm3951 = vcmp.lt.s32.totalorder %v3328, 8
    %vm3952 = vcmp.lt.s32.totalorder %v3329, 8
    %vm3953 = vcmp.lt.s32.totalorder %v3330, 8
    %vm3954 = vcmp.lt.s32.totalorder %v3331, 8
    %vm3955 = vcmp.lt.s32.totalorder %v3332, 8
    %vm3956 = vcmp.lt.s32.totalorder %v3333, 8
    %vm3957 = vcmp.lt.s32.totalorder %v3334, 8
    %vm3958 = vcmp.lt.s32.totalorder %v3335, 8
    %vm3959 = vcmp.lt.s32.totalorder %v3336, 8
    %vm3960 = vcmp.lt.s32.totalorder %v3337, 8
    %vm3961 = vcmp.lt.s32.totalorder %v3338, 8
    %vm3962 = vcmp.lt.s32.totalorder %v3339, 8
    %vm3963 = vcmp.lt.s32.totalorder %v3340, 8
    %vm3964 = vmand %vm3932, %vm3948
    %vm3965 = vmand %vm3933, %vm3949
    %vm3966 = vmand %vm3934, %vm3950
    %vm3967 = vmand %vm3935, %vm3951
    %vm3968 = vmand %vm3936, %vm3952
    %vm3969 = vmand %vm3937, %vm3953
    %vm3970 = vmand %vm3938, %vm3954
    %vm3971 = vmand %vm3939, %vm3955
    %vm3972 = vmand %vm3940, %vm3956
    %vm3973 = vmand %vm3941, %vm3957
    %vm3974 = vmand %vm3942, %vm3958
    %vm3975 = vmand %vm3943, %vm3959
    %vm3976 = vmand %vm3944, %vm3960
    %vm3977 = vmand %vm3945, %vm3961
    %vm3978 = vmand %vm3946, %vm3962
    %vm3979 = vmand %vm3947, %vm3963
    %vm3980 = vmand %vm3964, %vm3453
    %vm3981 = vmand %vm3965, %vm3454
    %vm3982 = vmand %vm3966, %vm3455
    %vm3983 = vmand %vm3967, %vm3456
    %vm3984 = vmand %vm3968, %vm3457
    %vm3985 = vmand %vm3969, %vm3458
    %vm3986 = vmand %vm3970, %vm3459
    %vm3987 = vmand %vm3971, %vm3460
    %vm3988 = vmand %vm3972, %vm3461
    %vm3989 = vmand %vm3973, %vm3462
    %vm3990 = vmand %vm3974, %vm3463
    %vm3991 = vmand %vm3975, %vm3464
    %vm3992 = vmand %vm3976, %vm3465
    %vm3993 = vmand %vm3977, %vm3466
    %vm3994 = vmand %vm3978, %vm3467
    %vm3995 = vmand %vm3979, %vm3468
    %v3996 = vld [vmem:[#allocation2 + $0x87] sm:$0xff]
    %s3997 = scalar_lea.vmem %s12, 4
    %v3998 = vld [vmem:[%s3997] sm:$0x1]
    %v3999 = vsel %vm3980, 1, 0
    %v4000 = vsel %vm3981, 1, 0
    %v4001 = vsel %vm3982, 1, 0
    %v4002 = vsel %vm3983, 1, 0
    %v4003 = vsel %vm3984, 1, 0
    %v4004 = vsel %vm3985, 1, 0
    %v4005 = vsel %vm3986, 1, 0
    %v4006 = vsel %vm3987, 1, 0
    %v4007 = vsel %vm3988, 1, 0
    %v4008 = vsel %vm3989, 1, 0
    %v4009 = vsel %vm3990, 1, 0
    %v4010 = vsel %vm3991, 1, 0
    %v4011 = vsel %vm3992, 1, 0
    %v4012 = vsel %vm3993, 1, 0
    %v4013 = vsel %vm3994, 1, 0
    %v4014 = vsel %vm3995, 1, 0
    %vm4015 = vcmp.eq.s32.totalorder %v3999, 1
    %vm4016 = vcmp.eq.s32.totalorder %v4000, 1
    %vm4017 = vcmp.eq.s32.totalorder %v4001, 1
    %vm4018 = vcmp.eq.s32.totalorder %v4002, 1
    %vm4019 = vcmp.eq.s32.totalorder %v4003, 1
    %vm4020 = vcmp.eq.s32.totalorder %v4004, 1
    %vm4021 = vcmp.eq.s32.totalorder %v4005, 1
    %vm4022 = vcmp.eq.s32.totalorder %v4006, 1
    %vm4023 = vcmp.eq.s32.totalorder %v4007, 1
    %vm4024 = vcmp.eq.s32.totalorder %v4008, 1
    %vm4025 = vcmp.eq.s32.totalorder %v4009, 1
    %vm4026 = vcmp.eq.s32.totalorder %v4010, 1
    %vm4027 = vcmp.eq.s32.totalorder %v4011, 1
    %vm4028 = vcmp.eq.s32.totalorder %v4012, 1
    %vm4029 = vcmp.eq.s32.totalorder %v4013, 1
    %vm4030 = vcmp.eq.s32.totalorder %v4014, 1
    %v4031 = vsel %vm4015, %v3486, 0.0
    %v4032 = vsel %vm4016, %v3487, 0.0
    %v4033 = vsel %vm4017, %v3488, 0.0
    %v4034 = vsel %vm4018, %v3489, 0.0
    %v4035 = vsel %vm4019, %v3490, 0.0
    %v4036 = vsel %vm4020, %v3491, 0.0
    %v4037 = vsel %vm4021, %v3492, 0.0
    %v4038 = vsel %vm4022, %v3493, 0.0
    %v4039 = vsel %vm4023, %v3494, 0.0
    %v4040 = vsel %vm4024, %v3495, 0.0
    %v4041 = vsel %vm4025, %v3496, 0.0
    %v4042 = vsel %vm4026, %v3497, 0.0
    %v4043 = vsel %vm4027, %v3498, 0.0
    %v4044 = vsel %vm4028, %v3499, 0.0
    %v4045 = vsel %vm4029, %v3500, 0.0
    %v4046 = vsel %vm4030, %v3996, 0.0
    %v4047 = vlaneseq
    %v4048 = vshrl.u32 %v4047, 7
    %v4049 = vsub.s32 0, %v4048
    %v4050 = vrot.slane %v3998, %v4049
    %v4051 = vmul.f32 %v4031, %v4050
    %v4052 = vmul.f32 %v4032, %v4050
    %v4053 = vmul.f32 %v4033, %v4050
    %v4054 = vmul.f32 %v4034, %v4050
    %v4055 = vmul.f32 %v4035, %v4050
    %v4056 = vmul.f32 %v4036, %v4050
    %v4057 = vmul.f32 %v4037, %v4050
    %v4058 = vmul.f32 %v4038, %v4050
    %v4059 = vmul.f32 %v4039, %v4050
    %v4060 = vmul.f32 %v4040, %v4050
    %v4061 = vmul.f32 %v4041, %v4050
    %v4062 = vmul.f32 %v4042, %v4050
    %v4063 = vmul.f32 %v4043, %v4050
    %v4064 = vmul.f32 %v4044, %v4050
    %v4065 = vmul.f32 %v4045, %v4050
    %v4066 = vmul.f32 %v4046, %v4050
    %v4067 = vadd.f32 %v3916, %v4051
    %v4068 = vadd.f32 %v3917, %v4052
    %v4069 = vadd.f32 %v3918, %v4053
    %v4070 = vadd.f32 %v3919, %v4054
    %v4071 = vadd.f32 %v3920, %v4055
    %v4072 = vadd.f32 %v3921, %v4056
    %v4073 = vadd.f32 %v3922, %v4057
    %v4074 = vadd.f32 %v3923, %v4058
    %v4075 = vadd.f32 %v3924, %v4059
    %v4076 = vadd.f32 %v3925, %v4060
    %v4077 = vadd.f32 %v3926, %v4061
    %v4078 = vadd.f32 %v3927, %v4062
    %v4079 = vadd.f32 %v3928, %v4063
    %v4080 = vadd.f32 %v3929, %v4064
    %v4081 = vadd.f32 %v3930, %v4065
    %v4082 = vadd.f32 %v3931, %v4066
    %vm4083 = vmand %vm3964, %vm3618
    %vm4084 = vmand %vm3965, %vm3619
    %vm4085 = vmand %vm3966, %vm3620
    %vm4086 = vmand %vm3967, %vm3621
    %vm4087 = vmand %vm3968, %vm3622
    %vm4088 = vmand %vm3969, %vm3623
    %vm4089 = vmand %vm3970, %vm3624
    %vm4090 = vmand %vm3971, %vm3625
    %vm4091 = vmand %vm3972, %vm3626
    %vm4092 = vmand %vm3973, %vm3627
    %vm4093 = vmand %vm3974, %vm3628
    %vm4094 = vmand %vm3975, %vm3629
    %vm4095 = vmand %vm3976, %vm3630
    %vm4096 = vmand %vm3977, %vm3631
    %vm4097 = vmand %vm3978, %vm3632
    %vm4098 = vmand %vm3979, %vm3633
    %v4099 = vld [vmem:[#allocation2 + $0x88] sm:$0xff]
    %v4100 = vld [vmem:[%s3997 + $0x1] sm:$0x1]
    %v4101 = vsel %vm4083, 1, 0
    %v4102 = vsel %vm4084, 1, 0
    %v4103 = vsel %vm4085, 1, 0
    %v4104 = vsel %vm4086, 1, 0
    %v4105 = vsel %vm4087, 1, 0
    %v4106 = vsel %vm4088, 1, 0
    %v4107 = vsel %vm4089, 1, 0
    %v4108 = vsel %vm4090, 1, 0
    %v4109 = vsel %vm4091, 1, 0
    %v4110 = vsel %vm4092, 1, 0
    %v4111 = vsel %vm4093, 1, 0
    %v4112 = vsel %vm4094, 1, 0
    %v4113 = vsel %vm4095, 1, 0
    %v4114 = vsel %vm4096, 1, 0
    %v4115 = vsel %vm4097, 1, 0
    %v4116 = vsel %vm4098, 1, 0
    %vm4117 = vcmp.eq.s32.totalorder %v4101, 1
    %vm4118 = vcmp.eq.s32.totalorder %v4102, 1
    %vm4119 = vcmp.eq.s32.totalorder %v4103, 1
    %vm4120 = vcmp.eq.s32.totalorder %v4104, 1
    %vm4121 = vcmp.eq.s32.totalorder %v4105, 1
    %vm4122 = vcmp.eq.s32.totalorder %v4106, 1
    %vm4123 = vcmp.eq.s32.totalorder %v4107, 1
    %vm4124 = vcmp.eq.s32.totalorder %v4108, 1
    %vm4125 = vcmp.eq.s32.totalorder %v4109, 1
    %vm4126 = vcmp.eq.s32.totalorder %v4110, 1
    %vm4127 = vcmp.eq.s32.totalorder %v4111, 1
    %vm4128 = vcmp.eq.s32.totalorder %v4112, 1
    %vm4129 = vcmp.eq.s32.totalorder %v4113, 1
    %vm4130 = vcmp.eq.s32.totalorder %v4114, 1
    %vm4131 = vcmp.eq.s32.totalorder %v4115, 1
    %vm4132 = vcmp.eq.s32.totalorder %v4116, 1
    %v4133 = vsel %vm4117, %v3651, 0.0
    %v4134 = vsel %vm4118, %v3652, 0.0
    %v4135 = vsel %vm4119, %v3653, 0.0
    %v4136 = vsel %vm4120, %v3654, 0.0
    %v4137 = vsel %vm4121, %v3655, 0.0
    %v4138 = vsel %vm4122, %v3656, 0.0
    %v4139 = vsel %vm4123, %v3657, 0.0
    %v4140 = vsel %vm4124, %v3658, 0.0
    %v4141 = vsel %vm4125, %v3659, 0.0
    %v4142 = vsel %vm4126, %v3660, 0.0
    %v4143 = vsel %vm4127, %v3661, 0.0
    %v4144 = vsel %vm4128, %v3662, 0.0
    %v4145 = vsel %vm4129, %v3663, 0.0
    %v4146 = vsel %vm4130, %v3664, 0.0
    %v4147 = vsel %vm4131, %v3665, 0.0
    %v4148 = vsel %vm4132, %v4099, 0.0
    %v4149 = vlaneseq
    %v4150 = vshrl.u32 %v4149, 7
    %v4151 = vsub.s32 0, %v4150
    %v4152 = vrot.slane %v4100, %v4151
    %v4153 = vmul.f32 %v4133, %v4152
    %v4154 = vmul.f32 %v4134, %v4152
    %v4155 = vmul.f32 %v4135, %v4152
    %v4156 = vmul.f32 %v4136, %v4152
    %v4157 = vmul.f32 %v4137, %v4152
    %v4158 = vmul.f32 %v4138, %v4152
    %v4159 = vmul.f32 %v4139, %v4152
    %v4160 = vmul.f32 %v4140, %v4152
    %v4161 = vmul.f32 %v4141, %v4152
    %v4162 = vmul.f32 %v4142, %v4152
    %v4163 = vmul.f32 %v4143, %v4152
    %v4164 = vmul.f32 %v4144, %v4152
    %v4165 = vmul.f32 %v4145, %v4152
    %v4166 = vmul.f32 %v4146, %v4152
    %v4167 = vmul.f32 %v4147, %v4152
    %v4168 = vmul.f32 %v4148, %v4152
    %v4169 = vadd.f32 %v4067, %v4153
    %v4170 = vadd.f32 %v4068, %v4154
    %v4171 = vadd.f32 %v4069, %v4155
    %v4172 = vadd.f32 %v4070, %v4156
    %v4173 = vadd.f32 %v4071, %v4157
    %v4174 = vadd.f32 %v4072, %v4158
    %v4175 = vadd.f32 %v4073, %v4159
    %v4176 = vadd.f32 %v4074, %v4160
    %v4177 = vadd.f32 %v4075, %v4161
    %v4178 = vadd.f32 %v4076, %v4162
    %v4179 = vadd.f32 %v4077, %v4163
    %v4180 = vadd.f32 %v4078, %v4164
    %v4181 = vadd.f32 %v4079, %v4165
    %v4182 = vadd.f32 %v4080, %v4166
    %v4183 = vadd.f32 %v4081, %v4167
    %v4184 = vadd.f32 %v4082, %v4168
    %vm4185 = vmand %vm3964, %vm3799
    %vm4186 = vmand %vm3965, %vm3800
    %vm4187 = vmand %vm3966, %vm3801
    %vm4188 = vmand %vm3967, %vm3802
    %vm4189 = vmand %vm3968, %vm3803
    %vm4190 = vmand %vm3969, %vm3804
    %vm4191 = vmand %vm3970, %vm3805
    %vm4192 = vmand %vm3971, %vm3806
    %vm4193 = vmand %vm3972, %vm3807
    %vm4194 = vmand %vm3973, %vm3808
    %vm4195 = vmand %vm3974, %vm3809
    %vm4196 = vmand %vm3975, %vm3810
    %vm4197 = vmand %vm3976, %vm3811
    %vm4198 = vmand %vm3977, %vm3812
    %vm4199 = vmand %vm3978, %vm3813
    %vm4200 = vmand %vm3979, %vm3814
    %v4201 = vld [vmem:[#allocation2 + $0x89] sm:$0xff]
    %v4202 = vld [vmem:[%s3997 + $0x2] sm:$0x1]
    %v4203 = vsel %vm4185, 1, 0
    %v4204 = vsel %vm4186, 1, 0
    %v4205 = vsel %vm4187, 1, 0
    %v4206 = vsel %vm4188, 1, 0
    %v4207 = vsel %vm4189, 1, 0
    %v4208 = vsel %vm4190, 1, 0
    %v4209 = vsel %vm4191, 1, 0
    %v4210 = vsel %vm4192, 1, 0
    %v4211 = vsel %vm4193, 1, 0
    %v4212 = vsel %vm4194, 1, 0
    %v4213 = vsel %vm4195, 1, 0
    %v4214 = vsel %vm4196, 1, 0
    %v4215 = vsel %vm4197, 1, 0
    %v4216 = vsel %vm4198, 1, 0
    %v4217 = vsel %vm4199, 1, 0
    %v4218 = vsel %vm4200, 1, 0
    %vm4219 = vcmp.eq.s32.totalorder %v4203, 1
    %vm4220 = vcmp.eq.s32.totalorder %v4204, 1
    %vm4221 = vcmp.eq.s32.totalorder %v4205, 1
    %vm4222 = vcmp.eq.s32.totalorder %v4206, 1
    %vm4223 = vcmp.eq.s32.totalorder %v4207, 1
    %vm4224 = vcmp.eq.s32.totalorder %v4208, 1
    %vm4225 = vcmp.eq.s32.totalorder %v4209, 1
    %vm4226 = vcmp.eq.s32.totalorder %v4210, 1
    %vm4227 = vcmp.eq.s32.totalorder %v4211, 1
    %vm4228 = vcmp.eq.s32.totalorder %v4212, 1
    %vm4229 = vcmp.eq.s32.totalorder %v4213, 1
    %vm4230 = vcmp.eq.s32.totalorder %v4214, 1
    %vm4231 = vcmp.eq.s32.totalorder %v4215, 1
    %vm4232 = vcmp.eq.s32.totalorder %v4216, 1
    %vm4233 = vcmp.eq.s32.totalorder %v4217, 1
    %vm4234 = vcmp.eq.s32.totalorder %v4218, 1
    %v4235 = vsel %vm4219, %v3832, 0.0
    %v4236 = vsel %vm4220, %v3833, 0.0
    %v4237 = vsel %vm4221, %v3834, 0.0
    %v4238 = vsel %vm4222, %v3835, 0.0
    %v4239 = vsel %vm4223, %v3836, 0.0
    %v4240 = vsel %vm4224, %v3837, 0.0
    %v4241 = vsel %vm4225, %v3838, 0.0
    %v4242 = vsel %vm4226, %v3839, 0.0
    %v4243 = vsel %vm4227, %v3840, 0.0
    %v4244 = vsel %vm4228, %v3841, 0.0
    %v4245 = vsel %vm4229, %v3842, 0.0
    %v4246 = vsel %vm4230, %v3843, 0.0
    %v4247 = vsel %vm4231, %v3844, 0.0
    %v4248 = vsel %vm4232, %v3845, 0.0
    %v4249 = vsel %vm4233, %v3846, 0.0
    %v4250 = vsel %vm4234, %v4201, 0.0
    %v4251 = vlaneseq
    %v4252 = vshrl.u32 %v4251, 7
    %v4253 = vsub.s32 0, %v4252
    %v4254 = vrot.slane %v4202, %v4253
    %v4255 = vmul.f32 %v4235, %v4254
    %v4256 = vmul.f32 %v4236, %v4254
    %v4257 = vmul.f32 %v4237, %v4254
    %v4258 = vmul.f32 %v4238, %v4254
    %v4259 = vmul.f32 %v4239, %v4254
    %v4260 = vmul.f32 %v4240, %v4254
    %v4261 = vmul.f32 %v4241, %v4254
    %v4262 = vmul.f32 %v4242, %v4254
    %v4263 = vmul.f32 %v4243, %v4254
    %v4264 = vmul.f32 %v4244, %v4254
    %v4265 = vmul.f32 %v4245, %v4254
    %v4266 = vmul.f32 %v4246, %v4254
    %v4267 = vmul.f32 %v4247, %v4254
    %v4268 = vmul.f32 %v4248, %v4254
    %v4269 = vmul.f32 %v4249, %v4254
    %v4270 = vmul.f32 %v4250, %v4254
    %v4271 = vadd.f32 %v4169, %v4255
    %v4272 = vadd.f32 %v4170, %v4256
    %v4273 = vadd.f32 %v4171, %v4257
    %v4274 = vadd.f32 %v4172, %v4258
    %v4275 = vadd.f32 %v4173, %v4259
    %v4276 = vadd.f32 %v4174, %v4260
    %v4277 = vadd.f32 %v4175, %v4261
    %v4278 = vadd.f32 %v4176, %v4262
    %v4279 = vadd.f32 %v4177, %v4263
    %v4280 = vadd.f32 %v4178, %v4264
    %v4281 = vadd.f32 %v4179, %v4265
    %v4282 = vadd.f32 %v4180, %v4266
    %v4283 = vadd.f32 %v4181, %v4267
    %v4284 = vadd.f32 %v4182, %v4268
    %v4285 = vadd.f32 %v4183, %v4269
    %v4286 = vadd.f32 %v4184, %v4270
    %v4287 = vadd.s32 %v3325, 1
    %v4288 = vadd.s32 %v3326, 1
    %v4289 = vadd.s32 %v3327, 1
    %v4290 = vadd.s32 %v3328, 1
    %v4291 = vadd.s32 %v3329, 1
    %v4292 = vadd.s32 %v3330, 1
    %v4293 = vadd.s32 %v3331, 1
    %v4294 = vadd.s32 %v3332, 1
    %v4295 = vadd.s32 %v3333, 1
    %v4296 = vadd.s32 %v3334, 1
    %v4297 = vadd.s32 %v3335, 1
    %v4298 = vadd.s32 %v3336, 1
    %v4299 = vadd.s32 %v3337, 1
    %v4300 = vadd.s32 %v3338, 1
    %v4301 = vadd.s32 %v3339, 1
    %v4302 = vadd.s32 %v3340, 1
    %vm4303 = vcmp.ge.s32.totalorder %v4287, 0
    %vm4304 = vcmp.ge.s32.totalorder %v4288, 0
    %vm4305 = vcmp.ge.s32.totalorder %v4289, 0
    %vm4306 = vcmp.ge.s32.totalorder %v4290, 0
    %vm4307 = vcmp.ge.s32.totalorder %v4291, 0
    %vm4308 = vcmp.ge.s32.totalorder %v4292, 0
    %vm4309 = vcmp.ge.s32.totalorder %v4293, 0
    %vm4310 = vcmp.ge.s32.totalorder %v4294, 0
    %vm4311 = vcmp.ge.s32.totalorder %v4295, 0
    %vm4312 = vcmp.ge.s32.totalorder %v4296, 0
    %vm4313 = vcmp.ge.s32.totalorder %v4297, 0
    %vm4314 = vcmp.ge.s32.totalorder %v4298, 0
    %vm4315 = vcmp.ge.s32.totalorder %v4299, 0
    %vm4316 = vcmp.ge.s32.totalorder %v4300, 0
    %vm4317 = vcmp.ge.s32.totalorder %v4301, 0
    %vm4318 = vcmp.ge.s32.totalorder %v4302, 0
    %vm4319 = vcmp.lt.s32.totalorder %v4287, 8
    %vm4320 = vcmp.lt.s32.totalorder %v4288, 8
    %vm4321 = vcmp.lt.s32.totalorder %v4289, 8
    %vm4322 = vcmp.lt.s32.totalorder %v4290, 8
    %vm4323 = vcmp.lt.s32.totalorder %v4291, 8
    %vm4324 = vcmp.lt.s32.totalorder %v4292, 8
    %vm4325 = vcmp.lt.s32.totalorder %v4293, 8
    %vm4326 = vcmp.lt.s32.totalorder %v4294, 8
    %vm4327 = vcmp.lt.s32.totalorder %v4295, 8
    %vm4328 = vcmp.lt.s32.totalorder %v4296, 8
    %vm4329 = vcmp.lt.s32.totalorder %v4297, 8
    %vm4330 = vcmp.lt.s32.totalorder %v4298, 8
    %vm4331 = vcmp.lt.s32.totalorder %v4299, 8
    %vm4332 = vcmp.lt.s32.totalorder %v4300, 8
    %vm4333 = vcmp.lt.s32.totalorder %v4301, 8
    %vm4334 = vcmp.lt.s32.totalorder %v4302, 8
    %vm4335 = vmand %vm4303, %vm4319
    %vm4336 = vmand %vm4304, %vm4320
    %vm4337 = vmand %vm4305, %vm4321
    %vm4338 = vmand %vm4306, %vm4322
    %vm4339 = vmand %vm4307, %vm4323
    %vm4340 = vmand %vm4308, %vm4324
    %vm4341 = vmand %vm4309, %vm4325
    %vm4342 = vmand %vm4310, %vm4326
    %vm4343 = vmand %vm4311, %vm4327
    %vm4344 = vmand %vm4312, %vm4328
    %vm4345 = vmand %vm4313, %vm4329
    %vm4346 = vmand %vm4314, %vm4330
    %vm4347 = vmand %vm4315, %vm4331
    %vm4348 = vmand %vm4316, %vm4332
    %vm4349 = vmand %vm4317, %vm4333
    %vm4350 = vmand %vm4318, %vm4334
    %vm4351 = vmand %vm4335, %vm3453
    %vm4352 = vmand %vm4336, %vm3454
    %vm4353 = vmand %vm4337, %vm3455
    %vm4354 = vmand %vm4338, %vm3456
    %vm4355 = vmand %vm4339, %vm3457
    %vm4356 = vmand %vm4340, %vm3458
    %vm4357 = vmand %vm4341, %vm3459
    %vm4358 = vmand %vm4342, %vm3460
    %vm4359 = vmand %vm4343, %vm3461
    %vm4360 = vmand %vm4344, %vm3462
    %vm4361 = vmand %vm4345, %vm3463
    %vm4362 = vmand %vm4346, %vm3464
    %vm4363 = vmand %vm4347, %vm3465
    %vm4364 = vmand %vm4348, %vm3466
    %vm4365 = vmand %vm4349, %vm3467
    %vm4366 = vmand %vm4350, %vm3468
    %v4367 = vld [vmem:[#allocation2 + $0x8f] sm:$0xff]
    %s4368 = scalar_lea.vmem %s12, 8
    %v4369 = vld [vmem:[%s4368] sm:$0x1]
    %v4370 = vsel %vm4351, 1, 0
    %v4371 = vsel %vm4352, 1, 0
    %v4372 = vsel %vm4353, 1, 0
    %v4373 = vsel %vm4354, 1, 0
    %v4374 = vsel %vm4355, 1, 0
    %v4375 = vsel %vm4356, 1, 0
    %v4376 = vsel %vm4357, 1, 0
    %v4377 = vsel %vm4358, 1, 0
    %v4378 = vsel %vm4359, 1, 0
    %v4379 = vsel %vm4360, 1, 0
    %v4380 = vsel %vm4361, 1, 0
    %v4381 = vsel %vm4362, 1, 0
    %v4382 = vsel %vm4363, 1, 0
    %v4383 = vsel %vm4364, 1, 0
    %v4384 = vsel %vm4365, 1, 0
    %v4385 = vsel %vm4366, 1, 0
    %vm4386 = vcmp.eq.s32.totalorder %v4370, 1
    %vm4387 = vcmp.eq.s32.totalorder %v4371, 1
    %vm4388 = vcmp.eq.s32.totalorder %v4372, 1
    %vm4389 = vcmp.eq.s32.totalorder %v4373, 1
    %vm4390 = vcmp.eq.s32.totalorder %v4374, 1
    %vm4391 = vcmp.eq.s32.totalorder %v4375, 1
    %vm4392 = vcmp.eq.s32.totalorder %v4376, 1
    %vm4393 = vcmp.eq.s32.totalorder %v4377, 1
    %vm4394 = vcmp.eq.s32.totalorder %v4378, 1
    %vm4395 = vcmp.eq.s32.totalorder %v4379, 1
    %vm4396 = vcmp.eq.s32.totalorder %v4380, 1
    %vm4397 = vcmp.eq.s32.totalorder %v4381, 1
    %vm4398 = vcmp.eq.s32.totalorder %v4382, 1
    %vm4399 = vcmp.eq.s32.totalorder %v4383, 1
    %vm4400 = vcmp.eq.s32.totalorder %v4384, 1
    %vm4401 = vcmp.eq.s32.totalorder %v4385, 1
    %v4402 = vsel %vm4386, %v3487, 0.0
    %v4403 = vsel %vm4387, %v3488, 0.0
    %v4404 = vsel %vm4388, %v3489, 0.0
    %v4405 = vsel %vm4389, %v3490, 0.0
    %v4406 = vsel %vm4390, %v3491, 0.0
    %v4407 = vsel %vm4391, %v3492, 0.0
    %v4408 = vsel %vm4392, %v3493, 0.0
    %v4409 = vsel %vm4393, %v3494, 0.0
    %v4410 = vsel %vm4394, %v3495, 0.0
    %v4411 = vsel %vm4395, %v3496, 0.0
    %v4412 = vsel %vm4396, %v3497, 0.0
    %v4413 = vsel %vm4397, %v3498, 0.0
    %v4414 = vsel %vm4398, %v3499, 0.0
    %v4415 = vsel %vm4399, %v3500, 0.0
    %v4416 = vsel %vm4400, %v3996, 0.0
    %v4417 = vsel %vm4401, %v4367, 0.0
    %v4418 = vlaneseq
    %v4419 = vshrl.u32 %v4418, 7
    %v4420 = vsub.s32 0, %v4419
    %v4421 = vrot.slane %v4369, %v4420
    %v4422 = vmul.f32 %v4402, %v4421
    %v4423 = vmul.f32 %v4403, %v4421
    %v4424 = vmul.f32 %v4404, %v4421
    %v4425 = vmul.f32 %v4405, %v4421
    %v4426 = vmul.f32 %v4406, %v4421
    %v4427 = vmul.f32 %v4407, %v4421
    %v4428 = vmul.f32 %v4408, %v4421
    %v4429 = vmul.f32 %v4409, %v4421
    %v4430 = vmul.f32 %v4410, %v4421
    %v4431 = vmul.f32 %v4411, %v4421
    %v4432 = vmul.f32 %v4412, %v4421
    %v4433 = vmul.f32 %v4413, %v4421
    %v4434 = vmul.f32 %v4414, %v4421
    %v4435 = vmul.f32 %v4415, %v4421
    %v4436 = vmul.f32 %v4416, %v4421
    %v4437 = vmul.f32 %v4417, %v4421
    %v4438 = vadd.f32 %v4271, %v4422
    %v4439 = vadd.f32 %v4272, %v4423
    %v4440 = vadd.f32 %v4273, %v4424
    %v4441 = vadd.f32 %v4274, %v4425
    %v4442 = vadd.f32 %v4275, %v4426
    %v4443 = vadd.f32 %v4276, %v4427
    %v4444 = vadd.f32 %v4277, %v4428
    %v4445 = vadd.f32 %v4278, %v4429
    %v4446 = vadd.f32 %v4279, %v4430
    %v4447 = vadd.f32 %v4280, %v4431
    %v4448 = vadd.f32 %v4281, %v4432
    %v4449 = vadd.f32 %v4282, %v4433
    %v4450 = vadd.f32 %v4283, %v4434
    %v4451 = vadd.f32 %v4284, %v4435
    %v4452 = vadd.f32 %v4285, %v4436
    %v4453 = vadd.f32 %v4286, %v4437
    %vm4454 = vmand %vm4335, %vm3618
    %vm4455 = vmand %vm4336, %vm3619
    %vm4456 = vmand %vm4337, %vm3620
    %vm4457 = vmand %vm4338, %vm3621
    %vm4458 = vmand %vm4339, %vm3622
    %vm4459 = vmand %vm4340, %vm3623
    %vm4460 = vmand %vm4341, %vm3624
    %vm4461 = vmand %vm4342, %vm3625
    %vm4462 = vmand %vm4343, %vm3626
    %vm4463 = vmand %vm4344, %vm3627
    %vm4464 = vmand %vm4345, %vm3628
    %vm4465 = vmand %vm4346, %vm3629
    %vm4466 = vmand %vm4347, %vm3630
    %vm4467 = vmand %vm4348, %vm3631
    %vm4468 = vmand %vm4349, %vm3632
    %vm4469 = vmand %vm4350, %vm3633
    %v4470 = vld [vmem:[#allocation2 + $0x90] sm:$0xff]
    %v4471 = vld [vmem:[%s4368 + $0x1] sm:$0x1]
    %v4472 = vsel %vm4454, 1, 0
    %v4473 = vsel %vm4455, 1, 0
    %v4474 = vsel %vm4456, 1, 0
    %v4475 = vsel %vm4457, 1, 0
    %v4476 = vsel %vm4458, 1, 0
    %v4477 = vsel %vm4459, 1, 0
    %v4478 = vsel %vm4460, 1, 0
    %v4479 = vsel %vm4461, 1, 0
    %v4480 = vsel %vm4462, 1, 0
    %v4481 = vsel %vm4463, 1, 0
    %v4482 = vsel %vm4464, 1, 0
    %v4483 = vsel %vm4465, 1, 0
    %v4484 = vsel %vm4466, 1, 0
    %v4485 = vsel %vm4467, 1, 0
    %v4486 = vsel %vm4468, 1, 0
    %v4487 = vsel %vm4469, 1, 0
    %vm4488 = vcmp.eq.s32.totalorder %v4472, 1
    %vm4489 = vcmp.eq.s32.totalorder %v4473, 1
    %vm4490 = vcmp.eq.s32.totalorder %v4474, 1
    %vm4491 = vcmp.eq.s32.totalorder %v4475, 1
    %vm4492 = vcmp.eq.s32.totalorder %v4476, 1
    %vm4493 = vcmp.eq.s32.totalorder %v4477, 1
    %vm4494 = vcmp.eq.s32.totalorder %v4478, 1
    %vm4495 = vcmp.eq.s32.totalorder %v4479, 1
    %vm4496 = vcmp.eq.s32.totalorder %v4480, 1
    %vm4497 = vcmp.eq.s32.totalorder %v4481, 1
    %vm4498 = vcmp.eq.s32.totalorder %v4482, 1
    %vm4499 = vcmp.eq.s32.totalorder %v4483, 1
    %vm4500 = vcmp.eq.s32.totalorder %v4484, 1
    %vm4501 = vcmp.eq.s32.totalorder %v4485, 1
    %vm4502 = vcmp.eq.s32.totalorder %v4486, 1
    %vm4503 = vcmp.eq.s32.totalorder %v4487, 1
    %v4504 = vsel %vm4488, %v3652, 0.0
    %v4505 = vsel %vm4489, %v3653, 0.0
    %v4506 = vsel %vm4490, %v3654, 0.0
    %v4507 = vsel %vm4491, %v3655, 0.0
    %v4508 = vsel %vm4492, %v3656, 0.0
    %v4509 = vsel %vm4493, %v3657, 0.0
    %v4510 = vsel %vm4494, %v3658, 0.0
    %v4511 = vsel %vm4495, %v3659, 0.0
    %v4512 = vsel %vm4496, %v3660, 0.0
    %v4513 = vsel %vm4497, %v3661, 0.0
    %v4514 = vsel %vm4498, %v3662, 0.0
    %v4515 = vsel %vm4499, %v3663, 0.0
    %v4516 = vsel %vm4500, %v3664, 0.0
    %v4517 = vsel %vm4501, %v3665, 0.0
    %v4518 = vsel %vm4502, %v4099, 0.0
    %v4519 = vsel %vm4503, %v4470, 0.0
    %v4520 = vlaneseq
    %v4521 = vshrl.u32 %v4520, 7
    %v4522 = vsub.s32 0, %v4521
    %v4523 = vrot.slane %v4471, %v4522
    %v4524 = vmul.f32 %v4504, %v4523
    %v4525 = vmul.f32 %v4505, %v4523
    %v4526 = vmul.f32 %v4506, %v4523
    %v4527 = vmul.f32 %v4507, %v4523
    %v4528 = vmul.f32 %v4508, %v4523
    %v4529 = vmul.f32 %v4509, %v4523
    %v4530 = vmul.f32 %v4510, %v4523
    %v4531 = vmul.f32 %v4511, %v4523
    %v4532 = vmul.f32 %v4512, %v4523
    %v4533 = vmul.f32 %v4513, %v4523
    %v4534 = vmul.f32 %v4514, %v4523
    %v4535 = vmul.f32 %v4515, %v4523
    %v4536 = vmul.f32 %v4516, %v4523
    %v4537 = vmul.f32 %v4517, %v4523
    %v4538 = vmul.f32 %v4518, %v4523
    %v4539 = vmul.f32 %v4519, %v4523
    %v4540 = vadd.f32 %v4438, %v4524
    %v4541 = vadd.f32 %v4439, %v4525
    %v4542 = vadd.f32 %v4440, %v4526
    %v4543 = vadd.f32 %v4441, %v4527
    %v4544 = vadd.f32 %v4442, %v4528
    %v4545 = vadd.f32 %v4443, %v4529
    %v4546 = vadd.f32 %v4444, %v4530
    %v4547 = vadd.f32 %v4445, %v4531
    %v4548 = vadd.f32 %v4446, %v4532
    %v4549 = vadd.f32 %v4447, %v4533
    %v4550 = vadd.f32 %v4448, %v4534
    %v4551 = vadd.f32 %v4449, %v4535
    %v4552 = vadd.f32 %v4450, %v4536
    %v4553 = vadd.f32 %v4451, %v4537
    %v4554 = vadd.f32 %v4452, %v4538
    %v4555 = vadd.f32 %v4453, %v4539
    %vm4556 = vmand %vm4335, %vm3799
    %vm4557 = vmand %vm4336, %vm3800
    %vm4558 = vmand %vm4337, %vm3801
    %vm4559 = vmand %vm4338, %vm3802
    %vm4560 = vmand %vm4339, %vm3803
    %vm4561 = vmand %vm4340, %vm3804
    %vm4562 = vmand %vm4341, %vm3805
    %vm4563 = vmand %vm4342, %vm3806
    %vm4564 = vmand %vm4343, %vm3807
    %vm4565 = vmand %vm4344, %vm3808
    %vm4566 = vmand %vm4345, %vm3809
    %vm4567 = vmand %vm4346, %vm3810
    %vm4568 = vmand %vm4347, %vm3811
    %vm4569 = vmand %vm4348, %vm3812
    %vm4570 = vmand %vm4349, %vm3813
    %vm4571 = vmand %vm4350, %vm3814
    %v4572 = vld [vmem:[#allocation2 + $0x91] sm:$0xff]
    %v4573 = vld [vmem:[%s4368 + $0x2] sm:$0x1]
    %v4574 = vsel %vm4556, 1, 0
    %v4575 = vsel %vm4557, 1, 0
    %v4576 = vsel %vm4558, 1, 0
    %v4577 = vsel %vm4559, 1, 0
    %v4578 = vsel %vm4560, 1, 0
    %v4579 = vsel %vm4561, 1, 0
    %v4580 = vsel %vm4562, 1, 0
    %v4581 = vsel %vm4563, 1, 0
    %v4582 = vsel %vm4564, 1, 0
    %v4583 = vsel %vm4565, 1, 0
    %v4584 = vsel %vm4566, 1, 0
    %v4585 = vsel %vm4567, 1, 0
    %v4586 = vsel %vm4568, 1, 0
    %v4587 = vsel %vm4569, 1, 0
    %v4588 = vsel %vm4570, 1, 0
    %v4589 = vsel %vm4571, 1, 0
    %vm4590 = vcmp.eq.s32.totalorder %v4574, 1
    %vm4591 = vcmp.eq.s32.totalorder %v4575, 1
    %vm4592 = vcmp.eq.s32.totalorder %v4576, 1
    %vm4593 = vcmp.eq.s32.totalorder %v4577, 1
    %vm4594 = vcmp.eq.s32.totalorder %v4578, 1
    %vm4595 = vcmp.eq.s32.totalorder %v4579, 1
    %vm4596 = vcmp.eq.s32.totalorder %v4580, 1
    %vm4597 = vcmp.eq.s32.totalorder %v4581, 1
    %vm4598 = vcmp.eq.s32.totalorder %v4582, 1
    %vm4599 = vcmp.eq.s32.totalorder %v4583, 1
    %vm4600 = vcmp.eq.s32.totalorder %v4584, 1
    %vm4601 = vcmp.eq.s32.totalorder %v4585, 1
    %vm4602 = vcmp.eq.s32.totalorder %v4586, 1
    %vm4603 = vcmp.eq.s32.totalorder %v4587, 1
    %vm4604 = vcmp.eq.s32.totalorder %v4588, 1
    %vm4605 = vcmp.eq.s32.totalorder %v4589, 1
    %v4606 = vsel %vm4590, %v3833, 0.0
    %v4607 = vsel %vm4591, %v3834, 0.0
    %v4608 = vsel %vm4592, %v3835, 0.0
    %v4609 = vsel %vm4593, %v3836, 0.0
    %v4610 = vsel %vm4594, %v3837, 0.0
    %v4611 = vsel %vm4595, %v3838, 0.0
    %v4612 = vsel %vm4596, %v3839, 0.0
    %v4613 = vsel %vm4597, %v3840, 0.0
    %v4614 = vsel %vm4598, %v3841, 0.0
    %v4615 = vsel %vm4599, %v3842, 0.0
    %v4616 = vsel %vm4600, %v3843, 0.0
    %v4617 = vsel %vm4601, %v3844, 0.0
    %v4618 = vsel %vm4602, %v3845, 0.0
    %v4619 = vsel %vm4603, %v3846, 0.0
    %v4620 = vsel %vm4604, %v4201, 0.0
    %v4621 = vsel %vm4605, %v4572, 0.0
    %v4622 = vlaneseq
    %v4623 = vshrl.u32 %v4622, 7
    %v4624 = vsub.s32 0, %v4623
    %v4625 = vrot.slane %v4573, %v4624
    %v4626 = vmul.f32 %v4606, %v4625
    %v4627 = vmul.f32 %v4607, %v4625
    %v4628 = vmul.f32 %v4608, %v4625
    %v4629 = vmul.f32 %v4609, %v4625
    %v4630 = vmul.f32 %v4610, %v4625
    %v4631 = vmul.f32 %v4611, %v4625
    %v4632 = vmul.f32 %v4612, %v4625
    %v4633 = vmul.f32 %v4613, %v4625
    %v4634 = vmul.f32 %v4614, %v4625
    %v4635 = vmul.f32 %v4615, %v4625
    %v4636 = vmul.f32 %v4616, %v4625
    %v4637 = vmul.f32 %v4617, %v4625
    %v4638 = vmul.f32 %v4618, %v4625
    %v4639 = vmul.f32 %v4619, %v4625
    %v4640 = vmul.f32 %v4620, %v4625
    %v4641 = vmul.f32 %v4621, %v4625
    %v4642 = vadd.f32 %v4540, %v4626
    %v4643 = vadd.f32 %v4541, %v4627
    %v4644 = vadd.f32 %v4542, %v4628
    %v4645 = vadd.f32 %v4543, %v4629
    %v4646 = vadd.f32 %v4544, %v4630
    %v4647 = vadd.f32 %v4545, %v4631
    %v4648 = vadd.f32 %v4546, %v4632
    %v4649 = vadd.f32 %v4547, %v4633
    %v4650 = vadd.f32 %v4548, %v4634
    %v4651 = vadd.f32 %v4549, %v4635
    %v4652 = vadd.f32 %v4550, %v4636
    %v4653 = vadd.f32 %v4551, %v4637
    %v4654 = vadd.f32 %v4552, %v4638
    %v4655 = vadd.f32 %v4553, %v4639
    %v4656 = vadd.f32 %v4554, %v4640
    %v4657 = vadd.f32 %v4555, %v4641
    %v4658 = vld [vmem:[%s13] sm:$0x1]
    %v4660 = vlaneseq
    %v4661 = vshrl.u32 %v4660, 7
    %v4662 = vsub.s32 0, %v4661
    %v4663 = vrot.slane %v4658, %v4662
    %v4665 = vadd.f32 %v4642, %v4663
    %v4666 = vadd.f32 %v4643, %v4663
    %v4667 = vadd.f32 %v4644, %v4663
    %v4668 = vadd.f32 %v4645, %v4663
    %v4669 = vadd.f32 %v4646, %v4663
    %v4670 = vadd.f32 %v4647, %v4663
    %v4671 = vadd.f32 %v4648, %v4663
    %v4672 = vadd.f32 %v4649, %v4663
    %v4673 = vadd.f32 %v4650, %v4663
    %v4674 = vadd.f32 %v4651, %v4663
    %v4675 = vadd.f32 %v4652, %v4663
    %v4676 = vadd.f32 %v4653, %v4663
    %v4677 = vadd.f32 %v4654, %v4663
    %v4678 = vadd.f32 %v4655, %v4663
    %v4679 = vadd.f32 %v4656, %v4663
    %v4680 = vadd.f32 %v4657, %v4663
    %v4681 = vmul.f32 %v4665, 0.5
    %v4682 = vmul.f32 %v4666, 0.5
    %v4683 = vmul.f32 %v4667, 0.5
    %v4684 = vmul.f32 %v4668, 0.5
    %v4685 = vmul.f32 %v4669, 0.5
    %v4686 = vmul.f32 %v4670, 0.5
    %v4687 = vmul.f32 %v4671, 0.5
    %v4688 = vmul.f32 %v4672, 0.5
    %v4689 = vmul.f32 %v4673, 0.5
    %v4690 = vmul.f32 %v4674, 0.5
    %v4691 = vmul.f32 %v4675, 0.5
    %v4692 = vmul.f32 %v4676, 0.5
    %v4693 = vmul.f32 %v4677, 0.5
    %v4694 = vmul.f32 %v4678, 0.5
    %v4695 = vmul.f32 %v4679, 0.5
    %v4696 = vmul.f32 %v4680, 0.5
    %v4697 = vmul.f32 %v4665, 0.70710677
    %v4698 = vmul.f32 %v4666, 0.70710677
    %v4699 = vmul.f32 %v4667, 0.70710677
    %v4700 = vmul.f32 %v4668, 0.70710677
    %v4701 = vmul.f32 %v4669, 0.70710677
    %v4702 = vmul.f32 %v4670, 0.70710677
    %v4703 = vmul.f32 %v4671, 0.70710677
    %v4704 = vmul.f32 %v4672, 0.70710677
    %v4705 = vmul.f32 %v4673, 0.70710677
    %v4706 = vmul.f32 %v4674, 0.70710677
    %v4707 = vmul.f32 %v4675, 0.70710677
    %v4708 = vmul.f32 %v4676, 0.70710677
    %v4709 = vmul.f32 %v4677, 0.70710677
    %v4710 = vmul.f32 %v4678, 0.70710677
    %v4711 = vmul.f32 %v4679, 0.70710677
    %v4712 = vmul.f32 %v4680, 0.70710677
    %v4713 = verf.f32.pop %v4697
    %v4714 = verf.f32.pop %v4698
    %v4715 = verf.f32.pop %v4699
    %v4716 = verf.f32.pop %v4700
    %v4717 = verf.f32.pop %v4701
    %v4718 = verf.f32.pop %v4702
    %v4719 = verf.f32.pop %v4703
    %v4720 = verf.f32.pop %v4704
    %v4721 = verf.f32.pop %v4705
    %v4722 = verf.f32.pop %v4706
    %v4723 = verf.f32.pop %v4707
    %v4724 = verf.f32.pop %v4708
    %v4725 = verf.f32.pop %v4709
    %v4726 = verf.f32.pop %v4710
    %v4727 = verf.f32.pop %v4711
    %v4728 = verf.f32.pop %v4712
    %v4729 = vadd.f32 %v4713, 1.0
    %v4730 = vadd.f32 %v4714, 1.0
    %v4731 = vadd.f32 %v4715, 1.0
    %v4732 = vadd.f32 %v4716, 1.0
    %v4733 = vadd.f32 %v4717, 1.0
    %v4734 = vadd.f32 %v4718, 1.0
    %v4735 = vadd.f32 %v4719, 1.0
    %v4736 = vadd.f32 %v4720, 1.0
    %v4737 = vadd.f32 %v4721, 1.0
    %v4738 = vadd.f32 %v4722, 1.0
    %v4739 = vadd.f32 %v4723, 1.0
    %v4740 = vadd.f32 %v4724, 1.0
    %v4741 = vadd.f32 %v4725, 1.0
    %v4742 = vadd.f32 %v4726, 1.0
    %v4743 = vadd.f32 %v4727, 1.0
    %v4744 = vadd.f32 %v4728, 1.0
    %v4745 = vmul.f32 %v4681, %v4729
    %v4746 = vmul.f32 %v4682, %v4730
    %v4747 = vmul.f32 %v4683, %v4731
    %v4748 = vmul.f32 %v4684, %v4732
    %v4749 = vmul.f32 %v4685, %v4733
    %v4750 = vmul.f32 %v4686, %v4734
    %v4751 = vmul.f32 %v4687, %v4735
    %v4752 = vmul.f32 %v4688, %v4736
    %v4753 = vmul.f32 %v4689, %v4737
    %v4754 = vmul.f32 %v4690, %v4738
    %v4755 = vmul.f32 %v4691, %v4739
    %v4756 = vmul.f32 %v4692, %v4740
    %v4757 = vmul.f32 %v4693, %v4741
    %v4758 = vmul.f32 %v4694, %v4742
    %v4759 = vmul.f32 %v4695, %v4743
    %v4760 = vmul.f32 %v4696, %v4744
    %v4761 = vpack.c.bf16 %v4746, %v4745
    %v4762 = vpack.c.bf16 %v4748, %v4747
    %v4763 = vpack.c.bf16 %v4750, %v4749
    %v4764 = vpack.c.bf16 %v4752, %v4751
    %v4765 = vpack.c.bf16 %v4754, %v4753
    %v4766 = vpack.c.bf16 %v4756, %v4755
    %v4767 = vpack.c.bf16 %v4758, %v4757
    %v4768 = vpack.c.bf16 %v4760, %v4759
    %v4769 = vld [vmem:[%s14] sm:$0xf]
    %v4770 = vld [vmem:[%s14 + $0x4] sm:$0xf]
    %v4771 = vld [vmem:[%s14 + $0x8] sm:$0xf]
    %v4772 = vld [vmem:[%s14 + $0xc] sm:$0xf]
    %v4773 = vld [vmem:[%s14 + $0x10] sm:$0xf]
    %v4774 = vld [vmem:[%s14 + $0x14] sm:$0xf]
    %v4775 = vld [vmem:[%s14 + $0x18] sm:$0xf]
    %v4776 = vld [vmem:[%s14 + $0x1c] sm:$0xf]
    %v4777 = vld [vmem:[%s14 + $0x20] sm:$0xf]
    %v4778 = vld [vmem:[%s14 + $0x24] sm:$0xf]
    %v4779 = vld [vmem:[%s14 + $0x28] sm:$0xf]
    %v4780 = vld [vmem:[%s14 + $0x2c] sm:$0xf]
    %v4781 = vld [vmem:[%s14 + $0x30] sm:$0xf]
    %v4782 = vld [vmem:[%s14 + $0x34] sm:$0xf]
    %v4783 = vld [vmem:[%s14 + $0x38] sm:$0xf]
    %v4784 = vld [vmem:[%s14 + $0x3c] sm:$0xf]
    %v4785 = vld [vmem:[%s15] sm:$0x1]
    %v4787 = vlaneseq
    %v4788 = vshrl.u32 %v4787, 7
    %v4789 = vsub.s32 0, %v4788
    %v4790 = vrot.slane %v4785, %v4789
    %v4808 = vunpack.c.l.b16 %v4769
    %v4809 = vunpack.c.l.b16 %v4770
    %v4810 = vunpack.c.l.b16 %v4771
    %v4811 = vunpack.c.l.b16 %v4772
    %v4812 = vunpack.c.l.b16 %v4773
    %v4813 = vunpack.c.l.b16 %v4774
    %v4814 = vunpack.c.l.b16 %v4775
    %v4815 = vunpack.c.l.b16 %v4776
    %v4816 = vunpack.c.l.b16 %v4777
    %v4817 = vunpack.c.l.b16 %v4778
    %v4818 = vunpack.c.l.b16 %v4779
    %v4819 = vunpack.c.l.b16 %v4780
    %v4820 = vunpack.c.l.b16 %v4781
    %v4821 = vunpack.c.l.b16 %v4782
    %v4822 = vunpack.c.l.b16 %v4783
    %v4823 = vunpack.c.l.b16 %v4784
    %v4824 = vpack.c.b16 %v4809, %v4808
    %v4825 = vpack.c.b16 %v4811, %v4810
    %v4826 = vpack.c.b16 %v4813, %v4812
    %v4827 = vpack.c.b16 %v4815, %v4814
    %v4828 = vpack.c.b16 %v4817, %v4816
    %v4829 = vpack.c.b16 %v4819, %v4818
    %v4830 = vpack.c.b16 %v4821, %v4820
    %v4831 = vpack.c.b16 %v4823, %v4822
    %4840 = vmatprep.subr.bf16.mxu0 0
    %4841 = vmatpush1.bf16.msra.mxu0 %v4824
    %4842 = vmatprep.subr.bf16.mxu0 0
    %4843 = vmatpush1.bf16.msra.mxu0 %v4825
    %4844 = vmatprep.subr.bf16.mxu0 0
    %4845 = vmatpush1.bf16.msra.mxu0 %v4826
    %4846 = vmatprep.subr.bf16.mxu0 0
    %4847 = vmatpush1.bf16.msra.mxu0 %v4827
    %4848 = vmatprep.subr.bf16.mxu0 0
    %4849 = vmatpush1.bf16.msra.mxu0 %v4828
    %4850 = vmatprep.subr.bf16.mxu0 0
    %4851 = vmatpush1.bf16.msra.mxu0 %v4829
    %4852 = vmatprep.subr.bf16.mxu0 0
    %4853 = vmatpush1.bf16.msra.mxu0 %v4830
    %4854 = vmatprep.subr.bf16.mxu0 0
    %4855 = vmatpush1.bf16.msra.mxu0 %v4831
    %4856 = vmatprep.subr.bf16.mxu0 0
    %4857 = vmatpush1.bf16.msra.mxu0 0
    %4858 = vmatprep.subr.bf16.mxu0 0
    %4859 = vmatpush1.bf16.msra.mxu0 0
    %4860 = vmatprep.subr.bf16.mxu0 0
    %4861 = vmatpush1.bf16.msra.mxu0 0
    %4862 = vmatprep.subr.bf16.mxu0 0
    %4863 = vmatpush1.bf16.msra.mxu0 0
    %4864 = vmatprep.subr.bf16.mxu0 0
    %4865 = vmatpush1.bf16.msra.mxu0 0
    %4866 = vmatprep.subr.bf16.mxu0 0
    %4867 = vmatpush1.bf16.msra.mxu0 0
    %4868 = vmatprep.subr.bf16.mxu0 0
    %4869 = vmatpush1.bf16.msra.mxu0 0
    %4870 = vmatprep.subr.bf16.mxu0 0
    %4871 = vmatpush1.bf16.msra.mxu0 0
    %4872 = vmatprep.mubr.bf16.mxu0 0
    %4873 = vmatmul.mubr.bf16.gmra.mrb[0].mxu0 %v4761
    %v4874 = vpop.f32.mrb[0].mxu0
    %v4875 = vadd.f32 %v4790, %v4874
    %v4876 = vpop.f32.mrb[0].mxu0
    %v4877 = vpop.f32.mrb[0].mxu0
    %v4878 = vadd.f32 %v4790, %v4877
    %v4879 = vpop.f32.mrb[0].mxu0
    %4880 = vmatprep.mubr.bf16.mxu0 0
    %4881 = vmatmul.mubr.bf16.gmra.mrb[0].mxu0 %v4762
    %v4882 = vpop.f32.mrb[0].mxu0
    %v4883 = vadd.f32 %v4790, %v4882
    %v4884 = vpop.f32.mrb[0].mxu0
    %v4885 = vpop.f32.mrb[0].mxu0
    %v4886 = vadd.f32 %v4790, %v4885
    %v4887 = vpop.f32.mrb[0].mxu0
    %4888 = vmatprep.mubr.bf16.mxu0 0
    %4889 = vmatmul.mubr.bf16.gmra.mrb[0].mxu0 %v4763
    %v4890 = vpop.f32.mrb[0].mxu0
    %v4891 = vadd.f32 %v4790, %v4890
    %v4892 = vpop.f32.mrb[0].mxu0
    %v4893 = vpop.f32.mrb[0].mxu0
    %v4894 = vadd.f32 %v4790, %v4893
    %v4895 = vpop.f32.mrb[0].mxu0
    %4896 = vmatprep.mubr.bf16.mxu0 0
    %4897 = vmatmul.mubr.bf16.gmra.mrb[0].mxu0 %v4764
    %v4898 = vpop.f32.mrb[0].mxu0
    %v4899 = vadd.f32 %v4790, %v4898
    %v4900 = vpop.f32.mrb[0].mxu0
    %v4901 = vpop.f32.mrb[0].mxu0
    %v4902 = vadd.f32 %v4790, %v4901
    %v4903 = vpop.f32.mrb[0].mxu0
    %4904 = vmatprep.mubr.bf16.mxu0 0
    %4905 = vmatmul.mubr.bf16.gmra.mrb[0].mxu0 %v4765
    %v4906 = vpop.f32.mrb[0].mxu0
    %v4907 = vadd.f32 %v4790, %v4906
    %v4908 = vpop.f32.mrb[0].mxu0
    %v4909 = vpop.f32.mrb[0].mxu0
    %v4910 = vadd.f32 %v4790, %v4909
    %v4911 = vpop.f32.mrb[0].mxu0
    %4912 = vmatprep.mubr.bf16.mxu0 0
    %4913 = vmatmul.mubr.bf16.gmra.mrb[0].mxu0 %v4766
    %v4914 = vpop.f32.mrb[0].mxu0
    %v4915 = vadd.f32 %v4790, %v4914
    %v4916 = vpop.f32.mrb[0].mxu0
    %v4917 = vpop.f32.mrb[0].mxu0
    %v4918 = vadd.f32 %v4790, %v4917
    %v4919 = vpop.f32.mrb[0].mxu0
    %4920 = vmatprep.mubr.bf16.mxu0 0
    %4921 = vmatmul.mubr.bf16.gmra.mrb[0].mxu0 %v4767
    %v4922 = vpop.f32.mrb[0].mxu0
    %v4923 = vadd.f32 %v4790, %v4922
    %v4924 = vpop.f32.mrb[0].mxu0
    %v4925 = vpop.f32.mrb[0].mxu0
    %v4926 = vadd.f32 %v4790, %v4925
    %v4927 = vpop.f32.mrb[0].mxu0
    %4928 = vmatprep.mubr.bf16.mxu0 0
    %4929 = vmatmul.mubr.bf16.gmra.mrb[0].mxu0 %v4768
    %v4930 = vpop.f32.mrb[0].mxu0
    %v4931 = vadd.f32 %v4790, %v4930
    %v4932 = vpop.f32.mrb[0].mxu0
    %v4933 = vpop.f32.mrb[0].mxu0
    %v4934 = vadd.f32 %v4790, %v4933
    %v4935 = vpop.f32.mrb[0].mxu0
    %4936 = vdwg.mxu0
    %v4937 = vadd.f32 %v4875, %v2754
    %v4938 = vadd.f32 %v4878, %v2755
    %v4939 = vadd.f32 %v4883, %v2756
    %v4940 = vadd.f32 %v4886, %v2757
    %v4941 = vadd.f32 %v4891, %v2758
    %v4942 = vadd.f32 %v4894, %v2759
    %v4943 = vadd.f32 %v4899, %v2760
    %v4944 = vadd.f32 %v4902, %v2761
    %v4945 = vadd.f32 %v4907, %v2762
    %v4946 = vadd.f32 %v4910, %v2763
    %v4947 = vadd.f32 %v4915, %v2764
    %v4948 = vadd.f32 %v4918, %v2765
    %v4949 = vadd.f32 %v4923, %v2766
    %v4950 = vadd.f32 %v4926, %v2767
    %v4951 = vadd.f32 %v4931, %v2768
    %v4952 = vadd.f32 %v4934, %v2769
    %4953 = vst.msk [vmem:[%s16] sm:$0xff] %vm86, %v4937
    %4954 = vst.msk [vmem:[%s16 + $0x8] sm:$0xff] %vm86, %v4938
    %4955 = vst.msk [vmem:[%s16 + $0x10] sm:$0xff] %vm86, %v4939
    %4956 = vst.msk [vmem:[%s16 + $0x18] sm:$0xff] %vm86, %v4940
    %4957 = vst.msk [vmem:[%s16 + $0x20] sm:$0xff] %vm86, %v4941
    %4958 = vst.msk [vmem:[%s16 + $0x28] sm:$0xff] %vm86, %v4942
    %4959 = vst.msk [vmem:[%s16 + $0x30] sm:$0xff] %vm86, %v4943
    %4960 = vst.msk [vmem:[%s16 + $0x38] sm:$0xff] %vm86, %v4944
    %4961 = vst.msk [vmem:[%s16 + $0x40] sm:$0xff] %vm86, %v4945
    %4962 = vst.msk [vmem:[%s16 + $0x48] sm:$0xff] %vm86, %v4946
    %4963 = vst.msk [vmem:[%s16 + $0x50] sm:$0xff] %vm86, %v4947
    %4964 = vst.msk [vmem:[%s16 + $0x58] sm:$0xff] %vm86, %v4948
    %4965 = vst.msk [vmem:[%s16 + $0x60] sm:$0xff] %vm86, %v4949
    %4966 = vst.msk [vmem:[%s16 + $0x68] sm:$0xff] %vm86, %v4950
    %4967 = vst.msk [vmem:[%s16 + $0x70] sm:$0xff] %vm86, %v4951
    %4968 = vst.msk [vmem:[%s16 + $0x78] sm:$0xff] %vm86, %v4952
    // Predicated region
    $region70: #{lewin_block_forward.1} parent=1 // pred_check
      _
    $region71: #{lewin_block_forward.1} parent=1 // pred_check_branch
      %4970 = sbr.rel (0) target = $region73
    $region72: #{lewin_block_forward.1} parent=1 // pred_region
      _
    $region73: #{lewin_block_forward.1} parent=1 // pred_fallthru
      _
    // Predicated region
    $region74: #{lewin_block_forward.1} parent=1 // pred_check
      _
    $region75: #{lewin_block_forward.1} parent=1 // pred_check_branch
      %4972 = sbr.rel (0) target = $region77
    $region76: #{lewin_block_forward.1} parent=1 // pred_region
      _
    $region77: #{lewin_block_forward.1} parent=1 // pred_fallthru
      _
    %4973 = vsyncpa [#allocation4], 1

</llo_original>
